<compile_context>
chip_gen: v6e
topology: v6e:2x2x1
jax: 0.10.0
libtpu: 0.0.40
codegen_flags: <defaults>
</compile_context>

<pallas_src>
import functools
import math

import jax
import jax.numpy as jnp
import numpy as np
from jax import lax
from jax.experimental import pallas as pl
from jax.experimental.pallas import tpu as pltpu


def _lcm(a, b):
    return a * b // math.gcd(a, b)


def _edge_kernel(thr_ref, top_ref, x_ref, bot_ref, o_ref, xw_scr, *,
                 H, W, Wp, tile_h, halo_blk, dilate, chunk):
    """Process one row tile of `tile_h` output rows.

    thr_ref : (1,)                f32 SMEM  threshold
    top_ref : (3, halo_blk, Wp)   f32 VMEM  rows just above the tile (clamped)
    x_ref   : (3, tile_h,   Wp)   f32 VMEM  bulk rows of the tile
    bot_ref : (3, halo_blk, Wp)   f32 VMEM  rows just below the tile (clamped)
    o_ref   : (tile_h, Wp)        f32 VMEM  dilated binary edge map
    xw_scr  : (3, tile_h + 2*halo, Wp) f32  assembled row window
              scratch row j  <->  global input row  r0 - halo + j
    """
    pd = dilate // 2            # dilation radius
    halo = pd + 1               # rows of context above/below (sobel 1 + dilation pd)
    i = pl.program_id(0)
    r0 = i * tile_h             # first output row of this tile
    b0 = halo                   # scratch row where the bulk tile starts
    thr = thr_ref[0]

    # ---- assemble a contiguous row window covering rows [r0-halo, r0+tile_h+halo)
    xw_scr[:, 0:halo, :] = top_ref[:, halo_blk - halo:halo_blk, :]
    xw_scr[:, b0:b0 + tile_h, :] = x_ref[...]
    xw_scr[:, b0 + tile_h:b0 + tile_h + halo, :] = bot_ref[:, 0:halo, :]

    # ---- ReflectionPad2d along H: row -1 -> row 1, row Hpad -> row Hpad-2
    @pl.when(i == 0)
    def _():
        xw_scr[:, b0 - 1:b0, :] = xw_scr[:, b0 + 1:b0 + 2, :]

    @pl.when(i == pl.num_programs(0) - 1)
    def _():
        xw_scr[:, b0 + tile_h:b0 + tile_h + 1, :] = \
            xw_scr[:, b0 + tile_h - 2:b0 + tile_h - 1, :]

    col = lax.broadcasted_iota(jnp.int32, (1, Wp), 1)        # lane / column index

    erows = chunk + 2 * pd      # edge rows needed per chunk
    irows = erows + 2           # input rows needed per chunk

    # ---- row chunks of `chunk` output rows (bounds live vreg values) ----
    for q in range(0, tile_h, chunk):
        # separable depthwise Sobel, |.|, max(h, v), accumulated over channels
        acc = None
        for c in range(3):
            # input rows [r0 + q - pd - 1, r0 + q + chunk + pd + 1)
            xc = xw_scr[c, q:q + irows, :]                               # [irows, Wp]
            # column neighbours; W-reflection handled right here
            xl = jnp.concatenate([xc[:, 1:2], xc[:, :Wp - 1]], axis=1)   # col j-1
            xr = jnp.concatenate([xc[:, 1:], xc[:, Wp - 1:Wp]], axis=1)  # col j+1
            xr = jnp.where(col == W - 1, xc[:, W - 2:W - 1], xr)         # col W -> W-2
            d = xr - xl                                                  # horiz. diff
            s = xl + 2.0 * xc + xr                                       # horiz. smooth
            gh = d[0:erows] + 2.0 * d[1:erows + 1] + d[2:erows + 2]
            gv = s[2:erows + 2] - s[0:erows]
            m = jnp.maximum(jnp.abs(gh), jnp.abs(gv))
            acc = m if acc is None else acc + m
        edge = acc * (1.0 / 3.0)                                         # mean over RGB

        # threshold; zero rows/cols outside the true image (max_pool zero-pads)
        gr = lax.broadcasted_iota(jnp.int32, (erows, 1), 0) + (r0 + q - pd)
        valid = (gr >= 0) & (gr < H) & (col < W)
        eb = jnp.where((edge > thr) & valid, 1.0, 0.0)                   # [erows, Wp]

        # separable dilation: vertical (sublane shifts), then horizontal (lanes)
        dil = eb[0:chunk]
        for dv in range(1, 2 * pd + 1):
            dil = jnp.maximum(dil, eb[dv:dv + chunk])
        res = dil
        for dc in range(1, pd + 1):
            zc = jnp.zeros((chunk, dc), jnp.float32)
            right = jnp.concatenate([dil[:, dc:], zc], axis=1)           # col j+dc
            left = jnp.concatenate([zc, dil[:, :Wp - dc]], axis=1)       # col j-dc
            res = jnp.maximum(res, jnp.maximum(left, right))

        o_ref[q:q + chunk, :] = res


def edge_detector(rgb, param_edge_thresh, param_edge_dilate, *,
                  max_tile_h=128, chunk_rows=8):
    """rgb: [1, 3, H, W] float32 (NCHW). Returns [1, 1, H, W] float32."""
    assert rgb.ndim == 4 and rgb.shape[0] == 1 and rgb.shape[1] == 3
    dilate = int(param_edge_dilate)
    assert dilate >= 1 and dilate % 2 == 1
    H, W = int(rgb.shape[2]), int(rgb.shape[3])
    assert H >= 2 and W >= 2

    pd = dilate // 2
    halo = pd + 1
    halo_blk = ((halo + 7) // 8) * 8          # 8-row aligned halo block

    x = rgb[0].astype(jnp.float32)            # [3, H, W]

    # lane-align W with zero padding (reflection at the W boundary is handled
    # in-kernel, and padded columns are masked there).
    Wp = ((W + 127) // 128) * 128
    if Wp != W:
        x = jnp.pad(x, ((0, 0), (0, 0), (0, Wp - W)))

    # choose a row tile: multiple of lcm(halo_blk, chunk_rows); minimise padding
    unit = _lcm(halo_blk, chunk_rows)
    upper = max(unit, min(max_tile_h, ((H + unit - 1) // unit) * unit))
    candidates = list(range(unit, upper + 1, unit))
    tile_h = min(candidates, key=lambda t: ((-H) % t, -t))
    Hp = H + ((-H) % tile_h)
    if Hp != H:
        # one reflected row (so the Sobel at row H-1 is exact) + zero rows;
        # padded edge rows are masked inside the kernel.
        pieces = [x, x[:, H - 2:H - 1, :]]
        extra = Hp - H - 1
        if extra > 0:
            pieces.append(jnp.zeros((3, extra, Wp), jnp.float32))
        x = jnp.concatenate(pieces, axis=1)

    thresh = jnp.asarray([param_edge_thresh], dtype=jnp.float32)

    n_tiles = Hp // tile_h
    hb = tile_h // halo_blk
    n_hblk = Hp // halo_blk

    kern = functools.partial(_edge_kernel, H=H, W=W, Wp=Wp, tile_h=tile_h,
                             halo_blk=halo_blk, dilate=dilate, chunk=chunk_rows)

    in_specs = [
        pl.BlockSpec(memory_space=pltpu.MemorySpace.SMEM),                 # threshold
        pl.BlockSpec((3, halo_blk, Wp),
                     lambda i: (0, jnp.maximum(i * hb - 1, 0), 0)),        # top halo
        pl.BlockSpec((3, tile_h, Wp), lambda i: (0, i, 0)),                # bulk tile
        pl.BlockSpec((3, halo_blk, Wp),
                     lambda i: (0, jnp.minimum((i + 1) * hb, n_hblk - 1), 0)),  # bottom halo
    ]
    out_spec = pl.BlockSpec((tile_h, Wp), lambda i: (i, 0))

    elt = 4
    one_in = 3 * (tile_h + 2 * halo_blk) * Wp * elt
    one_out = tile_h * Wp * elt
    scr = 3 * (tile_h + 2 * halo) * Wp * elt
    vmem_limit = 2 * 2 * (one_in + one_out) + 2 * scr + (4 << 20)

    out = pl.pallas_call(
        kern,
        out_shape=jax.ShapeDtypeStruct((Hp, Wp), jnp.float32),
        grid=(n_tiles,),
        in_specs=in_specs,
        out_specs=out_spec,
        scratch_shapes=[pltpu.VMEM((3, tile_h + 2 * halo, Wp), jnp.float32)],
        compiler_params=pltpu.CompilerParams(
            dimension_semantics=("parallel",),
            vmem_limit_bytes=int(vmem_limit)),
    )(thresh, x, x, x)

    if Hp != H or Wp != W:
        out = out[:H, :W]
    return out.reshape(1, 1, H, W)


def _reference(rgb, thresh, dilate):
    """Pure-JAX reference mirroring the PyTorch forward (full-array, untiled)."""
    x = rgb[0].astype(jnp.float32)
    _, H, W = x.shape
    xp = jnp.pad(x, ((0, 0), (1, 1), (1, 1)), mode="reflect")
    xl, xm, xr = xp[:, :, :-2], xp[:, :, 1:-1], xp[:, :, 2:]
    d = xr - xl
    s = xl + 2.0 * xm + xr
    gh = d[:, :-2] + 2.0 * d[:, 1:-1] + d[:, 2:]
    gv = s[:, 2:] - s[:, :-2]
    m = jnp.maximum(jnp.abs(gh), jnp.abs(gv))
    edge = (m[0] + m[1] + m[2]) * (1.0 / 3.0)
    edge = (edge > thresh).astype(jnp.float32)
    pd_ = dilate // 2
    pooled = jax.lax.reduce_window(
        edge, -jnp.inf, jax.lax.max,
        window_dimensions=(dilate, dilate), window_strides=(1, 1),
        padding=[(pd_, pd_), (pd_, pd_)])
    return pooled.reshape(1, 1, H, W)


if __name__ == "__main__":
    key = jax.random.PRNGKey(0)
    k1, k2 = jax.random.split(key)

    # Config 1: W not lane aligned (exercises W padding + masking), dilate=3,
    # several row tiles (exercises halo fetch, clamping and row reflection).
    rgb1 = jax.random.normal(k1, (1, 3, 96, 144), dtype=jnp.float32) * 3.0
    out1 = jax.block_until_ready(edge_detector(rgb1, 2, 3, max_tile_h=32))
    ref1 = _reference(rgb1, 2.0, 3)
    np.testing.assert_allclose(np.asarray(out1), np.asarray(ref1),
                               rtol=0.0, atol=1e-6)
    assert out1.shape == (1, 1, 96, 144)

    # Config 2: W exactly lane aligned (wrap handling path), larger dilation.
    rgb2 = jax.random.normal(k2, (1, 3, 64, 128), dtype=jnp.float32) * 3.0
    out2 = jax.block_until_ready(edge_detector(rgb2, 1, 5, max_tile_h=32))
    ref2 = _reference(rgb2, 1.0, 5)
    np.testing.assert_allclose(np.asarray(out2), np.asarray(ref2),
                               rtol=0.0, atol=1e-6)
    assert out2.shape == (1, 1, 64, 128)

    print("KERNEL_OK")
</pallas_src>

<mosaic_0001>
module attributes {stable_mosaic.version = 11 : i64} {
  func.func @_edge_kernel(%arg0: i32, %arg1: memref<1xf32, #tpu.memory_space<smem>>, %arg2: memref<3x8x256xf32, #tpu.memory_space<vmem>>, %arg3: memref<3x32x256xf32, #tpu.memory_space<vmem>>, %arg4: memref<3x8x256xf32, #tpu.memory_space<vmem>>, %arg5: memref<32x256xf32, #tpu.memory_space<vmem>>, %arg6: memref<3x36x256xf32, #tpu.memory_space<vmem>>) attributes {dimension_semantics = [#tpu.dimension_semantics<parallel>], iteration_bounds = array<i64: 3>, scalar_prefetch = 0 : i64, scratch_operands = 1 : i64, tpu.core_type = #tpu.core_type<tc>, window_params = [{transform_indices = @transform_0, window_bounds = array<i64: 1>}, {transform_indices = @transform_1, window_bounds = array<i64: 3, 8, 256>}, {transform_indices = @transform_2, window_bounds = array<i64: 3, 32, 256>}, {transform_indices = @transform_3, window_bounds = array<i64: 3, 8, 256>}, {transform_indices = @transform_4, window_bounds = array<i64: 32, 256>}]} {
    %c32_i32 = arith.constant 32 : i32
    %0 = arith.muli %arg0, %c32_i32 : i32
    %c0 = arith.constant 0 : index
    %1 = memref.load %arg1[%c0] : memref<1xf32, #tpu.memory_space<smem>>
    %c0_0 = arith.constant 0 : index
    %c6 = arith.constant 6 : index
    %c0_1 = arith.constant 0 : index
    %2 = vector.load %arg2[%c0_0, %c6, %c0_1] : memref<3x8x256xf32, #tpu.memory_space<vmem>>, vector<3x2x256xf32>
    %c0_2 = arith.constant 0 : index
    %c0_3 = arith.constant 0 : index
    %c0_4 = arith.constant 0 : index
    %3 = vector.load %arg6[%c0_2, %c0_3, %c0_4] : memref<3x36x256xf32, #tpu.memory_space<vmem>>, vector<3x2x256xf32>
    tpu.vector_store %arg6[%c0_2, %c0_3, %c0_4], %2 {strides = array<i32>} : memref<3x36x256xf32, #tpu.memory_space<vmem>>, vector<3x2x256xf32>,
    %c0_5 = arith.constant 0 : index
    %c0_6 = arith.constant 0 : index
    %c0_7 = arith.constant 0 : index
    %4 = vector.load %arg3[%c0_5, %c0_6, %c0_7] : memref<3x32x256xf32, #tpu.memory_space<vmem>>, vector<3x32x256xf32>
    %c0_8 = arith.constant 0 : index
    %c2 = arith.constant 2 : index
    %c0_9 = arith.constant 0 : index
    %5 = vector.load %arg6[%c0_8, %c2, %c0_9] : memref<3x36x256xf32, #tpu.memory_space<vmem>>, vector<3x32x256xf32>
    tpu.vector_store %arg6[%c0_8, %c2, %c0_9], %4 {strides = array<i32>} : memref<3x36x256xf32, #tpu.memory_space<vmem>>, vector<3x32x256xf32>,
    %c0_10 = arith.constant 0 : index
    %c0_11 = arith.constant 0 : index
    %c0_12 = arith.constant 0 : index
    %6 = vector.load %arg4[%c0_10, %c0_11, %c0_12] : memref<3x8x256xf32, #tpu.memory_space<vmem>>, vector<3x2x256xf32>
    %c0_13 = arith.constant 0 : index
    %c34 = arith.constant 34 : index
    %c0_14 = arith.constant 0 : index
    %7 = vector.load %arg6[%c0_13, %c34, %c0_14] : memref<3x36x256xf32, #tpu.memory_space<vmem>>, vector<3x2x256xf32>
    tpu.vector_store %arg6[%c0_13, %c34, %c0_14], %6 {strides = array<i32>} : memref<3x36x256xf32, #tpu.memory_space<vmem>>, vector<3x2x256xf32>,
    %c0_i32 = arith.constant 0 : i32
    %8 = arith.cmpi eq, %arg0, %c0_i32 : i32
    %9 = arith.extui %8 : i1 to i32
    %c0_i32_15 = arith.constant 0 : i32
    %10 = arith.cmpi ne, %9, %c0_i32_15 : i32
    scf.if %10 {
      %c0_121 = arith.constant 0 : index
      %c3 = arith.constant 3 : index
      %c0_122 = arith.constant 0 : index
      %575 = vector.load %arg6[%c0_121, %c3, %c0_122] : memref<3x36x256xf32, #tpu.memory_space<vmem>>, vector<3x1x256xf32>
      %c0_123 = arith.constant 0 : index
      %c1_124 = arith.constant 1 : index
      %c0_125 = arith.constant 0 : index
      %576 = vector.load %arg6[%c0_123, %c1_124, %c0_125] : memref<3x36x256xf32, #tpu.memory_space<vmem>>, vector<3x1x256xf32>
      tpu.vector_store %arg6[%c0_123, %c1_124, %c0_125], %575 {strides = array<i32>} : memref<3x36x256xf32, #tpu.memory_space<vmem>>, vector<3x1x256xf32>,
    } else {
    }
    %c2_i32 = arith.constant 2 : i32
    %11 = arith.cmpi eq, %arg0, %c2_i32 : i32
    %12 = arith.extui %11 : i1 to i32
    %c0_i32_16 = arith.constant 0 : i32
    %13 = arith.cmpi ne, %12, %c0_i32_16 : i32
    scf.if %13 {
      %c0_121 = arith.constant 0 : index
      %c32 = arith.constant 32 : index
      %c0_122 = arith.constant 0 : index
      %575 = vector.load %arg6[%c0_121, %c32, %c0_122] : memref<3x36x256xf32, #tpu.memory_space<vmem>>, vector<3x1x256xf32>
      %c0_123 = arith.constant 0 : index
      %c34_124 = arith.constant 34 : index
      %c0_125 = arith.constant 0 : index
      %576 = vector.load %arg6[%c0_123, %c34_124, %c0_125] : memref<3x36x256xf32, #tpu.memory_space<vmem>>, vector<3x1x256xf32>
      tpu.vector_store %arg6[%c0_123, %c34_124, %c0_125], %575 {strides = array<i32>} : memref<3x36x256xf32, #tpu.memory_space<vmem>>, vector<3x1x256xf32>,
    } else {
    }
    %14 = tpu.iota {dimensions = array<i32: 1>} : vector<1x256xi32>
    %c0_17 = arith.constant 0 : index
    %c0_18 = arith.constant 0 : index
    %c0_19 = arith.constant 0 : index
    %15 = vector.load %arg6[%c0_17, %c0_18, %c0_19] : memref<3x36x256xf32, #tpu.memory_space<vmem>>, vector<1x12x256xf32>
    %16 = vector.shape_cast %15 : vector<1x12x256xf32> to vector<12x256xf32>
    %17 = vector.extract_strided_slice %16 {offsets = [0, 1], sizes = [12, 1], strides = [1, 1]} : vector<12x256xf32> to vector<12x1xf32>
    %18 = vector.extract_strided_slice %16 {offsets = [0, 0], sizes = [12, 255], strides = [1, 1]} : vector<12x256xf32> to vector<12x255xf32>
    %19 = tpu.concatenate %17, %18 in 1 : vector<12x1xf32>, vector<12x255xf32> -> vector<12x256xf32>
    %20 = vector.extract_strided_slice %16 {offsets = [0, 1], sizes = [12, 255], strides = [1, 1]} : vector<12x256xf32> to vector<12x255xf32>
    %21 = vector.extract_strided_slice %16 {offsets = [0, 255], sizes = [12, 1], strides = [1, 1]} : vector<12x256xf32> to vector<12x1xf32>
    %22 = tpu.concatenate %20, %21 in 1 : vector<12x255xf32>, vector<12x1xf32> -> vector<12x256xf32>
    %c143_i32 = arith.constant 143 : i32
    %23 = vector.broadcast %c143_i32 : i32 to vector<1x256xi32>
    %24 = arith.cmpi eq, %14, %23 : vector<1x256xi32>
    %25 = vector.extract_strided_slice %16 {offsets = [0, 142], sizes = [12, 1], strides = [1, 1]} : vector<12x256xf32> to vector<12x1xf32>
    %26 = vector.shape_cast %24 : vector<1x256xi1> to vector<1x256xi1>
    %27 = vector.broadcast %26 : vector<1x256xi1> to vector<12x256xi1>
    %28 = vector.shape_cast %25 : vector<12x1xf32> to vector<12x1xf32>
    %29 = vector.broadcast %28 : vector<12x1xf32> to vector<12x256xf32>
    %30 = arith.select %27, %29, %22 : vector<12x256xi1>, vector<12x256xf32>
    %31 = arith.subf %30, %19 : vector<12x256xf32>
    %cst = arith.constant 2.000000e+00 : f32
    %32 = vector.broadcast %cst : f32 to vector<12x256xf32>
    %33 = arith.mulf %32, %16 : vector<12x256xf32>
    %34 = arith.addf %19, %33 : vector<12x256xf32>
    %35 = arith.addf %34, %30 : vector<12x256xf32>
    %36 = vector.extract_strided_slice %31 {offsets = [0, 0], sizes = [10, 256], strides = [1, 1]} : vector<12x256xf32> to vector<10x256xf32>
    %37 = vector.extract_strided_slice %31 {offsets = [1, 0], sizes = [10, 256], strides = [1, 1]} : vector<12x256xf32> to vector<10x256xf32>
    %cst_20 = arith.constant 2.000000e+00 : f32
    %38 = vector.broadcast %cst_20 : f32 to vector<10x256xf32>
    %39 = arith.mulf %38, %37 : vector<10x256xf32>
    %40 = arith.addf %36, %39 : vector<10x256xf32>
    %41 = vector.extract_strided_slice %31 {offsets = [2, 0], sizes = [10, 256], strides = [1, 1]} : vector<12x256xf32> to vector<10x256xf32>
    %42 = arith.addf %40, %41 : vector<10x256xf32>
    %43 = vector.extract_strided_slice %35 {offsets = [2, 0], sizes = [10, 256], strides = [1, 1]} : vector<12x256xf32> to vector<10x256xf32>
    %44 = vector.extract_strided_slice %35 {offsets = [0, 0], sizes = [10, 256], strides = [1, 1]} : vector<12x256xf32> to vector<10x256xf32>
    %45 = arith.subf %43, %44 : vector<10x256xf32>
    %46 = math.absf %42 : vector<10x256xf32>
    %47 = math.absf %45 : vector<10x256xf32>
    %48 = arith.maximumf %46, %47 : vector<10x256xf32>
    %c1 = arith.constant 1 : index
    %c0_21 = arith.constant 0 : index
    %c0_22 = arith.constant 0 : index
    %49 = vector.load %arg6[%c1, %c0_21, %c0_22] : memref<3x36x256xf32, #tpu.memory_space<vmem>>, vector<1x12x256xf32>
    %50 = vector.shape_cast %49 : vector<1x12x256xf32> to vector<12x256xf32>
    %51 = vector.extract_strided_slice %50 {offsets = [0, 1], sizes = [12, 1], strides = [1, 1]} : vector<12x256xf32> to vector<12x1xf32>
    %52 = vector.extract_strided_slice %50 {offsets = [0, 0], sizes = [12, 255], strides = [1, 1]} : vector<12x256xf32> to vector<12x255xf32>
    %53 = tpu.concatenate %51, %52 in 1 : vector<12x1xf32>, vector<12x255xf32> -> vector<12x256xf32>
    %54 = vector.extract_strided_slice %50 {offsets = [0, 1], sizes = [12, 255], strides = [1, 1]} : vector<12x256xf32> to vector<12x255xf32>
    %55 = vector.extract_strided_slice %50 {offsets = [0, 255], sizes = [12, 1], strides = [1, 1]} : vector<12x256xf32> to vector<12x1xf32>
    %56 = tpu.concatenate %54, %55 in 1 : vector<12x255xf32>, vector<12x1xf32> -> vector<12x256xf32>
    %c143_i32_23 = arith.constant 143 : i32
    %57 = vector.broadcast %c143_i32_23 : i32 to vector<1x256xi32>
    %58 = arith.cmpi eq, %14, %57 : vector<1x256xi32>
    %59 = vector.extract_strided_slice %50 {offsets = [0, 142], sizes = [12, 1], strides = [1, 1]} : vector<12x256xf32> to vector<12x1xf32>
    %60 = vector.shape_cast %58 : vector<1x256xi1> to vector<1x256xi1>
    %61 = vector.broadcast %60 : vector<1x256xi1> to vector<12x256xi1>
    %62 = vector.shape_cast %59 : vector<12x1xf32> to vector<12x1xf32>
    %63 = vector.broadcast %62 : vector<12x1xf32> to vector<12x256xf32>
    %64 = arith.select %61, %63, %56 : vector<12x256xi1>, vector<12x256xf32>
    %65 = arith.subf %64, %53 : vector<12x256xf32>
    %cst_24 = arith.constant 2.000000e+00 : f32
    %66 = vector.broadcast %cst_24 : f32 to vector<12x256xf32>
    %67 = arith.mulf %66, %50 : vector<12x256xf32>
    %68 = arith.addf %53, %67 : vector<12x256xf32>
    %69 = arith.addf %68, %64 : vector<12x256xf32>
    %70 = vector.extract_strided_slice %65 {offsets = [0, 0], sizes = [10, 256], strides = [1, 1]} : vector<12x256xf32> to vector<10x256xf32>
    %71 = vector.extract_strided_slice %65 {offsets = [1, 0], sizes = [10, 256], strides = [1, 1]} : vector<12x256xf32> to vector<10x256xf32>
    %cst_25 = arith.constant 2.000000e+00 : f32
    %72 = vector.broadcast %cst_25 : f32 to vector<10x256xf32>
    %73 = arith.mulf %72, %71 : vector<10x256xf32>
    %74 = arith.addf %70, %73 : vector<10x256xf32>
    %75 = vector.extract_strided_slice %65 {offsets = [2, 0], sizes = [10, 256], strides = [1, 1]} : vector<12x256xf32> to vector<10x256xf32>
    %76 = arith.addf %74, %75 : vector<10x256xf32>
    %77 = vector.extract_strided_slice %69 {offsets = [2, 0], sizes = [10, 256], strides = [1, 1]} : vector<12x256xf32> to vector<10x256xf32>
    %78 = vector.extract_strided_slice %69 {offsets = [0, 0], sizes = [10, 256], strides = [1, 1]} : vector<12x256xf32> to vector<10x256xf32>
    %79 = arith.subf %77, %78 : vector<10x256xf32>
    %80 = math.absf %76 : vector<10x256xf32>
    %81 = math.absf %79 : vector<10x256xf32>
    %82 = arith.maximumf %80, %81 : vector<10x256xf32>
    %83 = arith.addf %48, %82 : vector<10x256xf32>
    %c2_26 = arith.constant 2 : index
    %c0_27 = arith.constant 0 : index
    %c0_28 = arith.constant 0 : index
    %84 = vector.load %arg6[%c2_26, %c0_27, %c0_28] : memref<3x36x256xf32, #tpu.memory_space<vmem>>, vector<1x12x256xf32>
    %85 = vector.shape_cast %84 : vector<1x12x256xf32> to vector<12x256xf32>
    %86 = vector.extract_strided_slice %85 {offsets = [0, 1], sizes = [12, 1], strides = [1, 1]} : vector<12x256xf32> to vector<12x1xf32>
    %87 = vector.extract_strided_slice %85 {offsets = [0, 0], sizes = [12, 255], strides = [1, 1]} : vector<12x256xf32> to vector<12x255xf32>
    %88 = tpu.concatenate %86, %87 in 1 : vector<12x1xf32>, vector<12x255xf32> -> vector<12x256xf32>
    %89 = vector.extract_strided_slice %85 {offsets = [0, 1], sizes = [12, 255], strides = [1, 1]} : vector<12x256xf32> to vector<12x255xf32>
    %90 = vector.extract_strided_slice %85 {offsets = [0, 255], sizes = [12, 1], strides = [1, 1]} : vector<12x256xf32> to vector<12x1xf32>
    %91 = tpu.concatenate %89, %90 in 1 : vector<12x255xf32>, vector<12x1xf32> -> vector<12x256xf32>
    %c143_i32_29 = arith.constant 143 : i32
    %92 = vector.broadcast %c143_i32_29 : i32 to vector<1x256xi32>
    %93 = arith.cmpi eq, %14, %92 : vector<1x256xi32>
    %94 = vector.extract_strided_slice %85 {offsets = [0, 142], sizes = [12, 1], strides = [1, 1]} : vector<12x256xf32> to vector<12x1xf32>
    %95 = vector.shape_cast %93 : vector<1x256xi1> to vector<1x256xi1>
    %96 = vector.broadcast %95 : vector<1x256xi1> to vector<12x256xi1>
    %97 = vector.shape_cast %94 : vector<12x1xf32> to vector<12x1xf32>
    %98 = vector.broadcast %97 : vector<12x1xf32> to vector<12x256xf32>
    %99 = arith.select %96, %98, %91 : vector<12x256xi1>, vector<12x256xf32>
    %100 = arith.subf %99, %88 : vector<12x256xf32>
    %cst_30 = arith.constant 2.000000e+00 : f32
    %101 = vector.broadcast %cst_30 : f32 to vector<12x256xf32>
    %102 = arith.mulf %101, %85 : vector<12x256xf32>
    %103 = arith.addf %88, %102 : vector<12x256xf32>
    %104 = arith.addf %103, %99 : vector<12x256xf32>
    %105 = vector.extract_strided_slice %100 {offsets = [0, 0], sizes = [10, 256], strides = [1, 1]} : vector<12x256xf32> to vector<10x256xf32>
    %106 = vector.extract_strided_slice %100 {offsets = [1, 0], sizes = [10, 256], strides = [1, 1]} : vector<12x256xf32> to vector<10x256xf32>
    %cst_31 = arith.constant 2.000000e+00 : f32
    %107 = vector.broadcast %cst_31 : f32 to vector<10x256xf32>
    %108 = arith.mulf %107, %106 : vector<10x256xf32>
    %109 = arith.addf %105, %108 : vector<10x256xf32>
    %110 = vector.extract_strided_slice %100 {offsets = [2, 0], sizes = [10, 256], strides = [1, 1]} : vector<12x256xf32> to vector<10x256xf32>
    %111 = arith.addf %109, %110 : vector<10x256xf32>
    %112 = vector.extract_strided_slice %104 {offsets = [2, 0], sizes = [10, 256], strides = [1, 1]} : vector<12x256xf32> to vector<10x256xf32>
    %113 = vector.extract_strided_slice %104 {offsets = [0, 0], sizes = [10, 256], strides = [1, 1]} : vector<12x256xf32> to vector<10x256xf32>
    %114 = arith.subf %112, %113 : vector<10x256xf32>
    %115 = math.absf %111 : vector<10x256xf32>
    %116 = math.absf %114 : vector<10x256xf32>
    %117 = arith.maximumf %115, %116 : vector<10x256xf32>
    %118 = arith.addf %83, %117 : vector<10x256xf32>
    %cst_32 = arith.constant 0.333333343 : f32
    %119 = vector.broadcast %cst_32 : f32 to vector<10x256xf32>
    %120 = arith.mulf %118, %119 : vector<10x256xf32>
    %121 = tpu.iota {dimensions = array<i32: 0>} : vector<10x1xi32>
    %c0_i32_33 = arith.constant 0 : i32
    %122 = arith.addi %0, %c0_i32_33 : i32
    %c1_i32 = arith.constant 1 : i32
    %123 = arith.subi %122, %c1_i32 : i32
    %124 = vector.broadcast %123 : i32 to vector<10x1xi32>
    %125 = arith.addi %121, %124 : vector<10x1xi32>
    %c0_i32_34 = arith.constant 0 : i32
    %126 = vector.broadcast %c0_i32_34 : i32 to vector<10x1xi32>
    %127 = arith.cmpi sge, %125, %126 : vector<10x1xi32>
    %c96_i32 = arith.constant 96 : i32
    %128 = vector.broadcast %c96_i32 : i32 to vector<10x1xi32>
    %129 = arith.cmpi slt, %125, %128 : vector<10x1xi32>
    %130 = arith.andi %127, %129 : vector<10x1xi1>
    %c144_i32 = arith.constant 144 : i32
    %131 = vector.broadcast %c144_i32 : i32 to vector<1x256xi32>
    %132 = arith.cmpi slt, %14, %131 : vector<1x256xi32>
    %133 = vector.broadcast %130 : vector<10x1xi1> to vector<10x256xi1>
    %134 = vector.broadcast %132 : vector<1x256xi1> to vector<10x256xi1>
    %135 = arith.andi %133, %134 : vector<10x256xi1>
    %136 = vector.broadcast %1 : f32 to vector<10x256xf32>
    %137 = arith.cmpf ogt, %120, %136 : vector<10x256xf32>
    %138 = arith.andi %137, %135 : vector<10x256xi1>
    %cst_35 = arith.constant 1.000000e+00 : f32
    %cst_36 = arith.constant 0.000000e+00 : f32
    %139 = vector.broadcast %cst_35 : f32 to vector<10x256xf32>
    %140 = vector.broadcast %cst_36 : f32 to vector<10x256xf32>
    %141 = arith.select %138, %139, %140 : vector<10x256xi1>, vector<10x256xf32>
    %142 = vector.extract_strided_slice %141 {offsets = [0, 0], sizes = [8, 256], strides = [1, 1]} : vector<10x256xf32> to vector<8x256xf32>
    %143 = vector.extract_strided_slice %141 {offsets = [1, 0], sizes = [8, 256], strides = [1, 1]} : vector<10x256xf32> to vector<8x256xf32>
    %144 = arith.maximumf %142, %143 : vector<8x256xf32>
    %145 = vector.extract_strided_slice %141 {offsets = [2, 0], sizes = [8, 256], strides = [1, 1]} : vector<10x256xf32> to vector<8x256xf32>
    %146 = arith.maximumf %144, %145 : vector<8x256xf32>
    %cst_37 = arith.constant 0.000000e+00 : f32
    %147 = vector.broadcast %cst_37 : f32 to vector<8x1xf32>
    %148 = vector.extract_strided_slice %146 {offsets = [0, 1], sizes = [8, 255], strides = [1, 1]} : vector<8x256xf32> to vector<8x255xf32>
    %149 = tpu.concatenate %148, %147 in 1 : vector<8x255xf32>, vector<8x1xf32> -> vector<8x256xf32>
    %150 = vector.extract_strided_slice %146 {offsets = [0, 0], sizes = [8, 255], strides = [1, 1]} : vector<8x256xf32> to vector<8x255xf32>
    %151 = tpu.concatenate %147, %150 in 1 : vector<8x1xf32>, vector<8x255xf32> -> vector<8x256xf32>
    %152 = arith.maximumf %151, %149 : vector<8x256xf32>
    %153 = arith.maximumf %146, %152 : vector<8x256xf32>
    %c0_38 = arith.constant 0 : index
    %c0_39 = arith.constant 0 : index
    %154 = vector.load %arg5[%c0_38, %c0_39] : memref<32x256xf32, #tpu.memory_space<vmem>>, vector<8x256xf32>
    tpu.vector_store %arg5[%c0_38, %c0_39], %153 {strides = array<i32>} : memref<32x256xf32, #tpu.memory_space<vmem>>, vector<8x256xf32>,
    %c0_40 = arith.constant 0 : index
    %c8 = arith.constant 8 : index
    %c0_41 = arith.constant 0 : index
    %155 = vector.load %arg6[%c0_40, %c8, %c0_41] : memref<3x36x256xf32, #tpu.memory_space<vmem>>, vector<1x12x256xf32>
    %156 = vector.shape_cast %155 : vector<1x12x256xf32> to vector<12x256xf32>
    %157 = vector.extract_strided_slice %156 {offsets = [0, 1], sizes = [12, 1], strides = [1, 1]} : vector<12x256xf32> to vector<12x1xf32>
    %158 = vector.extract_strided_slice %156 {offsets = [0, 0], sizes = [12, 255], strides = [1, 1]} : vector<12x256xf32> to vector<12x255xf32>
    %159 = tpu.concatenate %157, %158 in 1 : vector<12x1xf32>, vector<12x255xf32> -> vector<12x256xf32>
    %160 = vector.extract_strided_slice %156 {offsets = [0, 1], sizes = [12, 255], strides = [1, 1]} : vector<12x256xf32> to vector<12x255xf32>
    %161 = vector.extract_strided_slice %156 {offsets = [0, 255], sizes = [12, 1], strides = [1, 1]} : vector<12x256xf32> to vector<12x1xf32>
    %162 = tpu.concatenate %160, %161 in 1 : vector<12x255xf32>, vector<12x1xf32> -> vector<12x256xf32>
    %c143_i32_42 = arith.constant 143 : i32
    %163 = vector.broadcast %c143_i32_42 : i32 to vector<1x256xi32>
    %164 = arith.cmpi eq, %14, %163 : vector<1x256xi32>
    %165 = vector.extract_strided_slice %156 {offsets = [0, 142], sizes = [12, 1], strides = [1, 1]} : vector<12x256xf32> to vector<12x1xf32>
    %166 = vector.shape_cast %164 : vector<1x256xi1> to vector<1x256xi1>
    %167 = vector.broadcast %166 : vector<1x256xi1> to vector<12x256xi1>
    %168 = vector.shape_cast %165 : vector<12x1xf32> to vector<12x1xf32>
    %169 = vector.broadcast %168 : vector<12x1xf32> to vector<12x256xf32>
    %170 = arith.select %167, %169, %162 : vector<12x256xi1>, vector<12x256xf32>
    %171 = arith.subf %170, %159 : vector<12x256xf32>
    %cst_43 = arith.constant 2.000000e+00 : f32
    %172 = vector.broadcast %cst_43 : f32 to vector<12x256xf32>
    %173 = arith.mulf %172, %156 : vector<12x256xf32>
    %174 = arith.addf %159, %173 : vector<12x256xf32>
    %175 = arith.addf %174, %170 : vector<12x256xf32>
    %176 = vector.extract_strided_slice %171 {offsets = [0, 0], sizes = [10, 256], strides = [1, 1]} : vector<12x256xf32> to vector<10x256xf32>
    %177 = vector.extract_strided_slice %171 {offsets = [1, 0], sizes = [10, 256], strides = [1, 1]} : vector<12x256xf32> to vector<10x256xf32>
    %cst_44 = arith.constant 2.000000e+00 : f32
    %178 = vector.broadcast %cst_44 : f32 to vector<10x256xf32>
    %179 = arith.mulf %178, %177 : vector<10x256xf32>
    %180 = arith.addf %176, %179 : vector<10x256xf32>
    %181 = vector.extract_strided_slice %171 {offsets = [2, 0], sizes = [10, 256], strides = [1, 1]} : vector<12x256xf32> to vector<10x256xf32>
    %182 = arith.addf %180, %181 : vector<10x256xf32>
    %183 = vector.extract_strided_slice %175 {offsets = [2, 0], sizes = [10, 256], strides = [1, 1]} : vector<12x256xf32> to vector<10x256xf32>
    %184 = vector.extract_strided_slice %175 {offsets = [0, 0], sizes = [10, 256], strides = [1, 1]} : vector<12x256xf32> to vector<10x256xf32>
    %185 = arith.subf %183, %184 : vector<10x256xf32>
    %186 = math.absf %182 : vector<10x256xf32>
    %187 = math.absf %185 : vector<10x256xf32>
    %188 = arith.maximumf %186, %187 : vector<10x256xf32>
    %c1_45 = arith.constant 1 : index
    %c8_46 = arith.constant 8 : index
    %c0_47 = arith.constant 0 : index
    %189 = vector.load %arg6[%c1_45, %c8_46, %c0_47] : memref<3x36x256xf32, #tpu.memory_space<vmem>>, vector<1x12x256xf32>
    %190 = vector.shape_cast %189 : vector<1x12x256xf32> to vector<12x256xf32>
    %191 = vector.extract_strided_slice %190 {offsets = [0, 1], sizes = [12, 1], strides = [1, 1]} : vector<12x256xf32> to vector<12x1xf32>
    %192 = vector.extract_strided_slice %190 {offsets = [0, 0], sizes = [12, 255], strides = [1, 1]} : vector<12x256xf32> to vector<12x255xf32>
    %193 = tpu.concatenate %191, %192 in 1 : vector<12x1xf32>, vector<12x255xf32> -> vector<12x256xf32>
    %194 = vector.extract_strided_slice %190 {offsets = [0, 1], sizes = [12, 255], strides = [1, 1]} : vector<12x256xf32> to vector<12x255xf32>
    %195 = vector.extract_strided_slice %190 {offsets = [0, 255], sizes = [12, 1], strides = [1, 1]} : vector<12x256xf32> to vector<12x1xf32>
    %196 = tpu.concatenate %194, %195 in 1 : vector<12x255xf32>, vector<12x1xf32> -> vector<12x256xf32>
    %c143_i32_48 = arith.constant 143 : i32
    %197 = vector.broadcast %c143_i32_48 : i32 to vector<1x256xi32>
    %198 = arith.cmpi eq, %14, %197 : vector<1x256xi32>
    %199 = vector.extract_strided_slice %190 {offsets = [0, 142], sizes = [12, 1], strides = [1, 1]} : vector<12x256xf32> to vector<12x1xf32>
    %200 = vector.shape_cast %198 : vector<1x256xi1> to vector<1x256xi1>
    %201 = vector.broadcast %200 : vector<1x256xi1> to vector<12x256xi1>
    %202 = vector.shape_cast %199 : vector<12x1xf32> to vector<12x1xf32>
    %203 = vector.broadcast %202 : vector<12x1xf32> to vector<12x256xf32>
    %204 = arith.select %201, %203, %196 : vector<12x256xi1>, vector<12x256xf32>
    %205 = arith.subf %204, %193 : vector<12x256xf32>
    %cst_49 = arith.constant 2.000000e+00 : f32
    %206 = vector.broadcast %cst_49 : f32 to vector<12x256xf32>
    %207 = arith.mulf %206, %190 : vector<12x256xf32>
    %208 = arith.addf %193, %207 : vector<12x256xf32>
    %209 = arith.addf %208, %204 : vector<12x256xf32>
    %210 = vector.extract_strided_slice %205 {offsets = [0, 0], sizes = [10, 256], strides = [1, 1]} : vector<12x256xf32> to vector<10x256xf32>
    %211 = vector.extract_strided_slice %205 {offsets = [1, 0], sizes = [10, 256], strides = [1, 1]} : vector<12x256xf32> to vector<10x256xf32>
    %cst_50 = arith.constant 2.000000e+00 : f32
    %212 = vector.broadcast %cst_50 : f32 to vector<10x256xf32>
    %213 = arith.mulf %212, %211 : vector<10x256xf32>
    %214 = arith.addf %210, %213 : vector<10x256xf32>
    %215 = vector.extract_strided_slice %205 {offsets = [2, 0], sizes = [10, 256], strides = [1, 1]} : vector<12x256xf32> to vector<10x256xf32>
    %216 = arith.addf %214, %215 : vector<10x256xf32>
    %217 = vector.extract_strided_slice %209 {offsets = [2, 0], sizes = [10, 256], strides = [1, 1]} : vector<12x256xf32> to vector<10x256xf32>
    %218 = vector.extract_strided_slice %209 {offsets = [0, 0], sizes = [10, 256], strides = [1, 1]} : vector<12x256xf32> to vector<10x256xf32>
    %219 = arith.subf %217, %218 : vector<10x256xf32>
    %220 = math.absf %216 : vector<10x256xf32>
    %221 = math.absf %219 : vector<10x256xf32>
    %222 = arith.maximumf %220, %221 : vector<10x256xf32>
    %223 = arith.addf %188, %222 : vector<10x256xf32>
    %c2_51 = arith.constant 2 : index
    %c8_52 = arith.constant 8 : index
    %c0_53 = arith.constant 0 : index
    %224 = vector.load %arg6[%c2_51, %c8_52, %c0_53] : memref<3x36x256xf32, #tpu.memory_space<vmem>>, vector<1x12x256xf32>
    %225 = vector.shape_cast %224 : vector<1x12x256xf32> to vector<12x256xf32>
    %226 = vector.extract_strided_slice %225 {offsets = [0, 1], sizes = [12, 1], strides = [1, 1]} : vector<12x256xf32> to vector<12x1xf32>
    %227 = vector.extract_strided_slice %225 {offsets = [0, 0], sizes = [12, 255], strides = [1, 1]} : vector<12x256xf32> to vector<12x255xf32>
    %228 = tpu.concatenate %226, %227 in 1 : vector<12x1xf32>, vector<12x255xf32> -> vector<12x256xf32>
    %229 = vector.extract_strided_slice %225 {offsets = [0, 1], sizes = [12, 255], strides = [1, 1]} : vector<12x256xf32> to vector<12x255xf32>
    %230 = vector.extract_strided_slice %225 {offsets = [0, 255], sizes = [12, 1], strides = [1, 1]} : vector<12x256xf32> to vector<12x1xf32>
    %231 = tpu.concatenate %229, %230 in 1 : vector<12x255xf32>, vector<12x1xf32> -> vector<12x256xf32>
    %c143_i32_54 = arith.constant 143 : i32
    %232 = vector.broadcast %c143_i32_54 : i32 to vector<1x256xi32>
    %233 = arith.cmpi eq, %14, %232 : vector<1x256xi32>
    %234 = vector.extract_strided_slice %225 {offsets = [0, 142], sizes = [12, 1], strides = [1, 1]} : vector<12x256xf32> to vector<12x1xf32>
    %235 = vector.shape_cast %233 : vector<1x256xi1> to vector<1x256xi1>
    %236 = vector.broadcast %235 : vector<1x256xi1> to vector<12x256xi1>
    %237 = vector.shape_cast %234 : vector<12x1xf32> to vector<12x1xf32>
    %238 = vector.broadcast %237 : vector<12x1xf32> to vector<12x256xf32>
    %239 = arith.select %236, %238, %231 : vector<12x256xi1>, vector<12x256xf32>
    %240 = arith.subf %239, %228 : vector<12x256xf32>
    %cst_55 = arith.constant 2.000000e+00 : f32
    %241 = vector.broadcast %cst_55 : f32 to vector<12x256xf32>
    %242 = arith.mulf %241, %225 : vector<12x256xf32>
    %243 = arith.addf %228, %242 : vector<12x256xf32>
    %244 = arith.addf %243, %239 : vector<12x256xf32>
    %245 = vector.extract_strided_slice %240 {offsets = [0, 0], sizes = [10, 256], strides = [1, 1]} : vector<12x256xf32> to vector<10x256xf32>
    %246 = vector.extract_strided_slice %240 {offsets = [1, 0], sizes = [10, 256], strides = [1, 1]} : vector<12x256xf32> to vector<10x256xf32>
    %cst_56 = arith.constant 2.000000e+00 : f32
    %247 = vector.broadcast %cst_56 : f32 to vector<10x256xf32>
    %248 = arith.mulf %247, %246 : vector<10x256xf32>
    %249 = arith.addf %245, %248 : vector<10x256xf32>
    %250 = vector.extract_strided_slice %240 {offsets = [2, 0], sizes = [10, 256], strides = [1, 1]} : vector<12x256xf32> to vector<10x256xf32>
    %251 = arith.addf %249, %250 : vector<10x256xf32>
    %252 = vector.extract_strided_slice %244 {offsets = [2, 0], sizes = [10, 256], strides = [1, 1]} : vector<12x256xf32> to vector<10x256xf32>
    %253 = vector.extract_strided_slice %244 {offsets = [0, 0], sizes = [10, 256], strides = [1, 1]} : vector<12x256xf32> to vector<10x256xf32>
    %254 = arith.subf %252, %253 : vector<10x256xf32>
    %255 = math.absf %251 : vector<10x256xf32>
    %256 = math.absf %254 : vector<10x256xf32>
    %257 = arith.maximumf %255, %256 : vector<10x256xf32>
    %258 = arith.addf %223, %257 : vector<10x256xf32>
    %cst_57 = arith.constant 0.333333343 : f32
    %259 = vector.broadcast %cst_57 : f32 to vector<10x256xf32>
    %260 = arith.mulf %258, %259 : vector<10x256xf32>
    %261 = tpu.iota {dimensions = array<i32: 0>} : vector<10x1xi32>
    %c8_i32 = arith.constant 8 : i32
    %262 = arith.addi %0, %c8_i32 : i32
    %c1_i32_58 = arith.constant 1 : i32
    %263 = arith.subi %262, %c1_i32_58 : i32
    %264 = vector.broadcast %263 : i32 to vector<10x1xi32>
    %265 = arith.addi %261, %264 : vector<10x1xi32>
    %c0_i32_59 = arith.constant 0 : i32
    %266 = vector.broadcast %c0_i32_59 : i32 to vector<10x1xi32>
    %267 = arith.cmpi sge, %265, %266 : vector<10x1xi32>
    %c96_i32_60 = arith.constant 96 : i32
    %268 = vector.broadcast %c96_i32_60 : i32 to vector<10x1xi32>
    %269 = arith.cmpi slt, %265, %268 : vector<10x1xi32>
    %270 = arith.andi %267, %269 : vector<10x1xi1>
    %c144_i32_61 = arith.constant 144 : i32
    %271 = vector.broadcast %c144_i32_61 : i32 to vector<1x256xi32>
    %272 = arith.cmpi slt, %14, %271 : vector<1x256xi32>
    %273 = vector.broadcast %270 : vector<10x1xi1> to vector<10x256xi1>
    %274 = vector.broadcast %272 : vector<1x256xi1> to vector<10x256xi1>
    %275 = arith.andi %273, %274 : vector<10x256xi1>
    %276 = vector.broadcast %1 : f32 to vector<10x256xf32>
    %277 = arith.cmpf ogt, %260, %276 : vector<10x256xf32>
    %278 = arith.andi %277, %275 : vector<10x256xi1>
    %cst_62 = arith.constant 1.000000e+00 : f32
    %cst_63 = arith.constant 0.000000e+00 : f32
    %279 = vector.broadcast %cst_62 : f32 to vector<10x256xf32>
    %280 = vector.broadcast %cst_63 : f32 to vector<10x256xf32>
    %281 = arith.select %278, %279, %280 : vector<10x256xi1>, vector<10x256xf32>
    %282 = vector.extract_strided_slice %281 {offsets = [0, 0], sizes = [8, 256], strides = [1, 1]} : vector<10x256xf32> to vector<8x256xf32>
    %283 = vector.extract_strided_slice %281 {offsets = [1, 0], sizes = [8, 256], strides = [1, 1]} : vector<10x256xf32> to vector<8x256xf32>
    %284 = arith.maximumf %282, %283 : vector<8x256xf32>
    %285 = vector.extract_strided_slice %281 {offsets = [2, 0], sizes = [8, 256], strides = [1, 1]} : vector<10x256xf32> to vector<8x256xf32>
    %286 = arith.maximumf %284, %285 : vector<8x256xf32>
    %cst_64 = arith.constant 0.000000e+00 : f32
    %287 = vector.broadcast %cst_64 : f32 to vector<8x1xf32>
    %288 = vector.extract_strided_slice %286 {offsets = [0, 1], sizes = [8, 255], strides = [1, 1]} : vector<8x256xf32> to vector<8x255xf32>
    %289 = tpu.concatenate %288, %287 in 1 : vector<8x255xf32>, vector<8x1xf32> -> vector<8x256xf32>
    %290 = vector.extract_strided_slice %286 {offsets = [0, 0], sizes = [8, 255], strides = [1, 1]} : vector<8x256xf32> to vector<8x255xf32>
    %291 = tpu.concatenate %287, %290 in 1 : vector<8x1xf32>, vector<8x255xf32> -> vector<8x256xf32>
    %292 = arith.maximumf %291, %289 : vector<8x256xf32>
    %293 = arith.maximumf %286, %292 : vector<8x256xf32>
    %c8_65 = arith.constant 8 : index
    %c0_66 = arith.constant 0 : index
    %294 = vector.load %arg5[%c8_65, %c0_66] : memref<32x256xf32, #tpu.memory_space<vmem>>, vector<8x256xf32>
    tpu.vector_store %arg5[%c8_65, %c0_66], %293 {strides = array<i32>} : memref<32x256xf32, #tpu.memory_space<vmem>>, vector<8x256xf32>,
    %c0_67 = arith.constant 0 : index
    %c16 = arith.constant 16 : index
    %c0_68 = arith.constant 0 : index
    %295 = vector.load %arg6[%c0_67, %c16, %c0_68] : memref<3x36x256xf32, #tpu.memory_space<vmem>>, vector<1x12x256xf32>
    %296 = vector.shape_cast %295 : vector<1x12x256xf32> to vector<12x256xf32>
    %297 = vector.extract_strided_slice %296 {offsets = [0, 1], sizes = [12, 1], strides = [1, 1]} : vector<12x256xf32> to vector<12x1xf32>
    %298 = vector.extract_strided_slice %296 {offsets = [0, 0], sizes = [12, 255], strides = [1, 1]} : vector<12x256xf32> to vector<12x255xf32>
    %299 = tpu.concatenate %297, %298 in 1 : vector<12x1xf32>, vector<12x255xf32> -> vector<12x256xf32>
    %300 = vector.extract_strided_slice %296 {offsets = [0, 1], sizes = [12, 255], strides = [1, 1]} : vector<12x256xf32> to vector<12x255xf32>
    %301 = vector.extract_strided_slice %296 {offsets = [0, 255], sizes = [12, 1], strides = [1, 1]} : vector<12x256xf32> to vector<12x1xf32>
    %302 = tpu.concatenate %300, %301 in 1 : vector<12x255xf32>, vector<12x1xf32> -> vector<12x256xf32>
    %c143_i32_69 = arith.constant 143 : i32
    %303 = vector.broadcast %c143_i32_69 : i32 to vector<1x256xi32>
    %304 = arith.cmpi eq, %14, %303 : vector<1x256xi32>
    %305 = vector.extract_strided_slice %296 {offsets = [0, 142], sizes = [12, 1], strides = [1, 1]} : vector<12x256xf32> to vector<12x1xf32>
    %306 = vector.shape_cast %304 : vector<1x256xi1> to vector<1x256xi1>
    %307 = vector.broadcast %306 : vector<1x256xi1> to vector<12x256xi1>
    %308 = vector.shape_cast %305 : vector<12x1xf32> to vector<12x1xf32>
    %309 = vector.broadcast %308 : vector<12x1xf32> to vector<12x256xf32>
    %310 = arith.select %307, %309, %302 : vector<12x256xi1>, vector<12x256xf32>
    %311 = arith.subf %310, %299 : vector<12x256xf32>
    %cst_70 = arith.constant 2.000000e+00 : f32
    %312 = vector.broadcast %cst_70 : f32 to vector<12x256xf32>
    %313 = arith.mulf %312, %296 : vector<12x256xf32>
    %314 = arith.addf %299, %313 : vector<12x256xf32>
    %315 = arith.addf %314, %310 : vector<12x256xf32>
    %316 = vector.extract_strided_slice %311 {offsets = [0, 0], sizes = [10, 256], strides = [1, 1]} : vector<12x256xf32> to vector<10x256xf32>
    %317 = vector.extract_strided_slice %311 {offsets = [1, 0], sizes = [10, 256], strides = [1, 1]} : vector<12x256xf32> to vector<10x256xf32>
    %cst_71 = arith.constant 2.000000e+00 : f32
    %318 = vector.broadcast %cst_71 : f32 to vector<10x256xf32>
    %319 = arith.mulf %318, %317 : vector<10x256xf32>
    %320 = arith.addf %316, %319 : vector<10x256xf32>
    %321 = vector.extract_strided_slice %311 {offsets = [2, 0], sizes = [10, 256], strides = [1, 1]} : vector<12x256xf32> to vector<10x256xf32>
    %322 = arith.addf %320, %321 : vector<10x256xf32>
    %323 = vector.extract_strided_slice %315 {offsets = [2, 0], sizes = [10, 256], strides = [1, 1]} : vector<12x256xf32> to vector<10x256xf32>
    %324 = vector.extract_strided_slice %315 {offsets = [0, 0], sizes = [10, 256], strides = [1, 1]} : vector<12x256xf32> to vector<10x256xf32>
    %325 = arith.subf %323, %324 : vector<10x256xf32>
    %326 = math.absf %322 : vector<10x256xf32>
    %327 = math.absf %325 : vector<10x256xf32>
    %328 = arith.maximumf %326, %327 : vector<10x256xf32>
    %c1_72 = arith.constant 1 : index
    %c16_73 = arith.constant 16 : index
    %c0_74 = arith.constant 0 : index
    %329 = vector.load %arg6[%c1_72, %c16_73, %c0_74] : memref<3x36x256xf32, #tpu.memory_space<vmem>>, vector<1x12x256xf32>
    %330 = vector.shape_cast %329 : vector<1x12x256xf32> to vector<12x256xf32>
    %331 = vector.extract_strided_slice %330 {offsets = [0, 1], sizes = [12, 1], strides = [1, 1]} : vector<12x256xf32> to vector<12x1xf32>
    %332 = vector.extract_strided_slice %330 {offsets = [0, 0], sizes = [12, 255], strides = [1, 1]} : vector<12x256xf32> to vector<12x255xf32>
    %333 = tpu.concatenate %331, %332 in 1 : vector<12x1xf32>, vector<12x255xf32> -> vector<12x256xf32>
    %334 = vector.extract_strided_slice %330 {offsets = [0, 1], sizes = [12, 255], strides = [1, 1]} : vector<12x256xf32> to vector<12x255xf32>
    %335 = vector.extract_strided_slice %330 {offsets = [0, 255], sizes = [12, 1], strides = [1, 1]} : vector<12x256xf32> to vector<12x1xf32>
    %336 = tpu.concatenate %334, %335 in 1 : vector<12x255xf32>, vector<12x1xf32> -> vector<12x256xf32>
    %c143_i32_75 = arith.constant 143 : i32
    %337 = vector.broadcast %c143_i32_75 : i32 to vector<1x256xi32>
    %338 = arith.cmpi eq, %14, %337 : vector<1x256xi32>
    %339 = vector.extract_strided_slice %330 {offsets = [0, 142], sizes = [12, 1], strides = [1, 1]} : vector<12x256xf32> to vector<12x1xf32>
    %340 = vector.shape_cast %338 : vector<1x256xi1> to vector<1x256xi1>
    %341 = vector.broadcast %340 : vector<1x256xi1> to vector<12x256xi1>
    %342 = vector.shape_cast %339 : vector<12x1xf32> to vector<12x1xf32>
    %343 = vector.broadcast %342 : vector<12x1xf32> to vector<12x256xf32>
    %344 = arith.select %341, %343, %336 : vector<12x256xi1>, vector<12x256xf32>
    %345 = arith.subf %344, %333 : vector<12x256xf32>
    %cst_76 = arith.constant 2.000000e+00 : f32
    %346 = vector.broadcast %cst_76 : f32 to vector<12x256xf32>
    %347 = arith.mulf %346, %330 : vector<12x256xf32>
    %348 = arith.addf %333, %347 : vector<12x256xf32>
    %349 = arith.addf %348, %344 : vector<12x256xf32>
    %350 = vector.extract_strided_slice %345 {offsets = [0, 0], sizes = [10, 256], strides = [1, 1]} : vector<12x256xf32> to vector<10x256xf32>
    %351 = vector.extract_strided_slice %345 {offsets = [1, 0], sizes = [10, 256], strides = [1, 1]} : vector<12x256xf32> to vector<10x256xf32>
    %cst_77 = arith.constant 2.000000e+00 : f32
    %352 = vector.broadcast %cst_77 : f32 to vector<10x256xf32>
    %353 = arith.mulf %352, %351 : vector<10x256xf32>
    %354 = arith.addf %350, %353 : vector<10x256xf32>
    %355 = vector.extract_strided_slice %345 {offsets = [2, 0], sizes = [10, 256], strides = [1, 1]} : vector<12x256xf32> to vector<10x256xf32>
    %356 = arith.addf %354, %355 : vector<10x256xf32>
    %357 = vector.extract_strided_slice %349 {offsets = [2, 0], sizes = [10, 256], strides = [1, 1]} : vector<12x256xf32> to vector<10x256xf32>
    %358 = vector.extract_strided_slice %349 {offsets = [0, 0], sizes = [10, 256], strides = [1, 1]} : vector<12x256xf32> to vector<10x256xf32>
    %359 = arith.subf %357, %358 : vector<10x256xf32>
    %360 = math.absf %356 : vector<10x256xf32>
    %361 = math.absf %359 : vector<10x256xf32>
    %362 = arith.maximumf %360, %361 : vector<10x256xf32>
    %363 = arith.addf %328, %362 : vector<10x256xf32>
    %c2_78 = arith.constant 2 : index
    %c16_79 = arith.constant 16 : index
    %c0_80 = arith.constant 0 : index
    %364 = vector.load %arg6[%c2_78, %c16_79, %c0_80] : memref<3x36x256xf32, #tpu.memory_space<vmem>>, vector<1x12x256xf32>
    %365 = vector.shape_cast %364 : vector<1x12x256xf32> to vector<12x256xf32>
    %366 = vector.extract_strided_slice %365 {offsets = [0, 1], sizes = [12, 1], strides = [1, 1]} : vector<12x256xf32> to vector<12x1xf32>
    %367 = vector.extract_strided_slice %365 {offsets = [0, 0], sizes = [12, 255], strides = [1, 1]} : vector<12x256xf32> to vector<12x255xf32>
    %368 = tpu.concatenate %366, %367 in 1 : vector<12x1xf32>, vector<12x255xf32> -> vector<12x256xf32>
    %369 = vector.extract_strided_slice %365 {offsets = [0, 1], sizes = [12, 255], strides = [1, 1]} : vector<12x256xf32> to vector<12x255xf32>
    %370 = vector.extract_strided_slice %365 {offsets = [0, 255], sizes = [12, 1], strides = [1, 1]} : vector<12x256xf32> to vector<12x1xf32>
    %371 = tpu.concatenate %369, %370 in 1 : vector<12x255xf32>, vector<12x1xf32> -> vector<12x256xf32>
    %c143_i32_81 = arith.constant 143 : i32
    %372 = vector.broadcast %c143_i32_81 : i32 to vector<1x256xi32>
    %373 = arith.cmpi eq, %14, %372 : vector<1x256xi32>
    %374 = vector.extract_strided_slice %365 {offsets = [0, 142], sizes = [12, 1], strides = [1, 1]} : vector<12x256xf32> to vector<12x1xf32>
    %375 = vector.shape_cast %373 : vector<1x256xi1> to vector<1x256xi1>
    %376 = vector.broadcast %375 : vector<1x256xi1> to vector<12x256xi1>
    %377 = vector.shape_cast %374 : vector<12x1xf32> to vector<12x1xf32>
    %378 = vector.broadcast %377 : vector<12x1xf32> to vector<12x256xf32>
    %379 = arith.select %376, %378, %371 : vector<12x256xi1>, vector<12x256xf32>
    %380 = arith.subf %379, %368 : vector<12x256xf32>
    %cst_82 = arith.constant 2.000000e+00 : f32
    %381 = vector.broadcast %cst_82 : f32 to vector<12x256xf32>
    %382 = arith.mulf %381, %365 : vector<12x256xf32>
    %383 = arith.addf %368, %382 : vector<12x256xf32>
    %384 = arith.addf %383, %379 : vector<12x256xf32>
    %385 = vector.extract_strided_slice %380 {offsets = [0, 0], sizes = [10, 256], strides = [1, 1]} : vector<12x256xf32> to vector<10x256xf32>
    %386 = vector.extract_strided_slice %380 {offsets = [1, 0], sizes = [10, 256], strides = [1, 1]} : vector<12x256xf32> to vector<10x256xf32>
    %cst_83 = arith.constant 2.000000e+00 : f32
    %387 = vector.broadcast %cst_83 : f32 to vector<10x256xf32>
    %388 = arith.mulf %387, %386 : vector<10x256xf32>
    %389 = arith.addf %385, %388 : vector<10x256xf32>
    %390 = vector.extract_strided_slice %380 {offsets = [2, 0], sizes = [10, 256], strides = [1, 1]} : vector<12x256xf32> to vector<10x256xf32>
    %391 = arith.addf %389, %390 : vector<10x256xf32>
    %392 = vector.extract_strided_slice %384 {offsets = [2, 0], sizes = [10, 256], strides = [1, 1]} : vector<12x256xf32> to vector<10x256xf32>
    %393 = vector.extract_strided_slice %384 {offsets = [0, 0], sizes = [10, 256], strides = [1, 1]} : vector<12x256xf32> to vector<10x256xf32>
    %394 = arith.subf %392, %393 : vector<10x256xf32>
    %395 = math.absf %391 : vector<10x256xf32>
    %396 = math.absf %394 : vector<10x256xf32>
    %397 = arith.maximumf %395, %396 : vector<10x256xf32>
    %398 = arith.addf %363, %397 : vector<10x256xf32>
    %cst_84 = arith.constant 0.333333343 : f32
    %399 = vector.broadcast %cst_84 : f32 to vector<10x256xf32>
    %400 = arith.mulf %398, %399 : vector<10x256xf32>
    %401 = tpu.iota {dimensions = array<i32: 0>} : vector<10x1xi32>
    %c16_i32 = arith.constant 16 : i32
    %402 = arith.addi %0, %c16_i32 : i32
    %c1_i32_85 = arith.constant 1 : i32
    %403 = arith.subi %402, %c1_i32_85 : i32
    %404 = vector.broadcast %403 : i32 to vector<10x1xi32>
    %405 = arith.addi %401, %404 : vector<10x1xi32>
    %c0_i32_86 = arith.constant 0 : i32
    %406 = vector.broadcast %c0_i32_86 : i32 to vector<10x1xi32>
    %407 = arith.cmpi sge, %405, %406 : vector<10x1xi32>
    %c96_i32_87 = arith.constant 96 : i32
    %408 = vector.broadcast %c96_i32_87 : i32 to vector<10x1xi32>
    %409 = arith.cmpi slt, %405, %408 : vector<10x1xi32>
    %410 = arith.andi %407, %409 : vector<10x1xi1>
    %c144_i32_88 = arith.constant 144 : i32
    %411 = vector.broadcast %c144_i32_88 : i32 to vector<1x256xi32>
    %412 = arith.cmpi slt, %14, %411 : vector<1x256xi32>
    %413 = vector.broadcast %410 : vector<10x1xi1> to vector<10x256xi1>
    %414 = vector.broadcast %412 : vector<1x256xi1> to vector<10x256xi1>
    %415 = arith.andi %413, %414 : vector<10x256xi1>
    %416 = vector.broadcast %1 : f32 to vector<10x256xf32>
    %417 = arith.cmpf ogt, %400, %416 : vector<10x256xf32>
    %418 = arith.andi %417, %415 : vector<10x256xi1>
    %cst_89 = arith.constant 1.000000e+00 : f32
    %cst_90 = arith.constant 0.000000e+00 : f32
    %419 = vector.broadcast %cst_89 : f32 to vector<10x256xf32>
    %420 = vector.broadcast %cst_90 : f32 to vector<10x256xf32>
    %421 = arith.select %418, %419, %420 : vector<10x256xi1>, vector<10x256xf32>
    %422 = vector.extract_strided_slice %421 {offsets = [0, 0], sizes = [8, 256], strides = [1, 1]} : vector<10x256xf32> to vector<8x256xf32>
    %423 = vector.extract_strided_slice %421 {offsets = [1, 0], sizes = [8, 256], strides = [1, 1]} : vector<10x256xf32> to vector<8x256xf32>
    %424 = arith.maximumf %422, %423 : vector<8x256xf32>
    %425 = vector.extract_strided_slice %421 {offsets = [2, 0], sizes = [8, 256], strides = [1, 1]} : vector<10x256xf32> to vector<8x256xf32>
    %426 = arith.maximumf %424, %425 : vector<8x256xf32>
    %cst_91 = arith.constant 0.000000e+00 : f32
    %427 = vector.broadcast %cst_91 : f32 to vector<8x1xf32>
    %428 = vector.extract_strided_slice %426 {offsets = [0, 1], sizes = [8, 255], strides = [1, 1]} : vector<8x256xf32> to vector<8x255xf32>
    %429 = tpu.concatenate %428, %427 in 1 : vector<8x255xf32>, vector<8x1xf32> -> vector<8x256xf32>
    %430 = vector.extract_strided_slice %426 {offsets = [0, 0], sizes = [8, 255], strides = [1, 1]} : vector<8x256xf32> to vector<8x255xf32>
    %431 = tpu.concatenate %427, %430 in 1 : vector<8x1xf32>, vector<8x255xf32> -> vector<8x256xf32>
    %432 = arith.maximumf %431, %429 : vector<8x256xf32>
    %433 = arith.maximumf %426, %432 : vector<8x256xf32>
    %c16_92 = arith.constant 16 : index
    %c0_93 = arith.constant 0 : index
    %434 = vector.load %arg5[%c16_92, %c0_93] : memref<32x256xf32, #tpu.memory_space<vmem>>, vector<8x256xf32>
    tpu.vector_store %arg5[%c16_92, %c0_93], %433 {strides = array<i32>} : memref<32x256xf32, #tpu.memory_space<vmem>>, vector<8x256xf32>,
    %c0_94 = arith.constant 0 : index
    %c24 = arith.constant 24 : index
    %c0_95 = arith.constant 0 : index
    %435 = vector.load %arg6[%c0_94, %c24, %c0_95] : memref<3x36x256xf32, #tpu.memory_space<vmem>>, vector<1x12x256xf32>
    %436 = vector.shape_cast %435 : vector<1x12x256xf32> to vector<12x256xf32>
    %437 = vector.extract_strided_slice %436 {offsets = [0, 1], sizes = [12, 1], strides = [1, 1]} : vector<12x256xf32> to vector<12x1xf32>
    %438 = vector.extract_strided_slice %436 {offsets = [0, 0], sizes = [12, 255], strides = [1, 1]} : vector<12x256xf32> to vector<12x255xf32>
    %439 = tpu.concatenate %437, %438 in 1 : vector<12x1xf32>, vector<12x255xf32> -> vector<12x256xf32>
    %440 = vector.extract_strided_slice %436 {offsets = [0, 1], sizes = [12, 255], strides = [1, 1]} : vector<12x256xf32> to vector<12x255xf32>
    %441 = vector.extract_strided_slice %436 {offsets = [0, 255], sizes = [12, 1], strides = [1, 1]} : vector<12x256xf32> to vector<12x1xf32>
    %442 = tpu.concatenate %440, %441 in 1 : vector<12x255xf32>, vector<12x1xf32> -> vector<12x256xf32>
    %c143_i32_96 = arith.constant 143 : i32
    %443 = vector.broadcast %c143_i32_96 : i32 to vector<1x256xi32>
    %444 = arith.cmpi eq, %14, %443 : vector<1x256xi32>
    %445 = vector.extract_strided_slice %436 {offsets = [0, 142], sizes = [12, 1], strides = [1, 1]} : vector<12x256xf32> to vector<12x1xf32>
    %446 = vector.shape_cast %444 : vector<1x256xi1> to vector<1x256xi1>
    %447 = vector.broadcast %446 : vector<1x256xi1> to vector<12x256xi1>
    %448 = vector.shape_cast %445 : vector<12x1xf32> to vector<12x1xf32>
    %449 = vector.broadcast %448 : vector<12x1xf32> to vector<12x256xf32>
    %450 = arith.select %447, %449, %442 : vector<12x256xi1>, vector<12x256xf32>
    %451 = arith.subf %450, %439 : vector<12x256xf32>
    %cst_97 = arith.constant 2.000000e+00 : f32
    %452 = vector.broadcast %cst_97 : f32 to vector<12x256xf32>
    %453 = arith.mulf %452, %436 : vector<12x256xf32>
    %454 = arith.addf %439, %453 : vector<12x256xf32>
    %455 = arith.addf %454, %450 : vector<12x256xf32>
    %456 = vector.extract_strided_slice %451 {offsets = [0, 0], sizes = [10, 256], strides = [1, 1]} : vector<12x256xf32> to vector<10x256xf32>
    %457 = vector.extract_strided_slice %451 {offsets = [1, 0], sizes = [10, 256], strides = [1, 1]} : vector<12x256xf32> to vector<10x256xf32>
    %cst_98 = arith.constant 2.000000e+00 : f32
    %458 = vector.broadcast %cst_98 : f32 to vector<10x256xf32>
    %459 = arith.mulf %458, %457 : vector<10x256xf32>
    %460 = arith.addf %456, %459 : vector<10x256xf32>
    %461 = vector.extract_strided_slice %451 {offsets = [2, 0], sizes = [10, 256], strides = [1, 1]} : vector<12x256xf32> to vector<10x256xf32>
    %462 = arith.addf %460, %461 : vector<10x256xf32>
    %463 = vector.extract_strided_slice %455 {offsets = [2, 0], sizes = [10, 256], strides = [1, 1]} : vector<12x256xf32> to vector<10x256xf32>
    %464 = vector.extract_strided_slice %455 {offsets = [0, 0], sizes = [10, 256], strides = [1, 1]} : vector<12x256xf32> to vector<10x256xf32>
    %465 = arith.subf %463, %464 : vector<10x256xf32>
    %466 = math.absf %462 : vector<10x256xf32>
    %467 = math.absf %465 : vector<10x256xf32>
    %468 = arith.maximumf %466, %467 : vector<10x256xf32>
    %c1_99 = arith.constant 1 : index
    %c24_100 = arith.constant 24 : index
    %c0_101 = arith.constant 0 : index
    %469 = vector.load %arg6[%c1_99, %c24_100, %c0_101] : memref<3x36x256xf32, #tpu.memory_space<vmem>>, vector<1x12x256xf32>
    %470 = vector.shape_cast %469 : vector<1x12x256xf32> to vector<12x256xf32>
    %471 = vector.extract_strided_slice %470 {offsets = [0, 1], sizes = [12, 1], strides = [1, 1]} : vector<12x256xf32> to vector<12x1xf32>
    %472 = vector.extract_strided_slice %470 {offsets = [0, 0], sizes = [12, 255], strides = [1, 1]} : vector<12x256xf32> to vector<12x255xf32>
    %473 = tpu.concatenate %471, %472 in 1 : vector<12x1xf32>, vector<12x255xf32> -> vector<12x256xf32>
    %474 = vector.extract_strided_slice %470 {offsets = [0, 1], sizes = [12, 255], strides = [1, 1]} : vector<12x256xf32> to vector<12x255xf32>
    %475 = vector.extract_strided_slice %470 {offsets = [0, 255], sizes = [12, 1], strides = [1, 1]} : vector<12x256xf32> to vector<12x1xf32>
    %476 = tpu.concatenate %474, %475 in 1 : vector<12x255xf32>, vector<12x1xf32> -> vector<12x256xf32>
    %c143_i32_102 = arith.constant 143 : i32
    %477 = vector.broadcast %c143_i32_102 : i32 to vector<1x256xi32>
    %478 = arith.cmpi eq, %14, %477 : vector<1x256xi32>
    %479 = vector.extract_strided_slice %470 {offsets = [0, 142], sizes = [12, 1], strides = [1, 1]} : vector<12x256xf32> to vector<12x1xf32>
    %480 = vector.shape_cast %478 : vector<1x256xi1> to vector<1x256xi1>
    %481 = vector.broadcast %480 : vector<1x256xi1> to vector<12x256xi1>
    %482 = vector.shape_cast %479 : vector<12x1xf32> to vector<12x1xf32>
    %483 = vector.broadcast %482 : vector<12x1xf32> to vector<12x256xf32>
    %484 = arith.select %481, %483, %476 : vector<12x256xi1>, vector<12x256xf32>
    %485 = arith.subf %484, %473 : vector<12x256xf32>
    %cst_103 = arith.constant 2.000000e+00 : f32
    %486 = vector.broadcast %cst_103 : f32 to vector<12x256xf32>
    %487 = arith.mulf %486, %470 : vector<12x256xf32>
    %488 = arith.addf %473, %487 : vector<12x256xf32>
    %489 = arith.addf %488, %484 : vector<12x256xf32>
    %490 = vector.extract_strided_slice %485 {offsets = [0, 0], sizes = [10, 256], strides = [1, 1]} : vector<12x256xf32> to vector<10x256xf32>
    %491 = vector.extract_strided_slice %485 {offsets = [1, 0], sizes = [10, 256], strides = [1, 1]} : vector<12x256xf32> to vector<10x256xf32>
    %cst_104 = arith.constant 2.000000e+00 : f32
    %492 = vector.broadcast %cst_104 : f32 to vector<10x256xf32>
    %493 = arith.mulf %492, %491 : vector<10x256xf32>
    %494 = arith.addf %490, %493 : vector<10x256xf32>
    %495 = vector.extract_strided_slice %485 {offsets = [2, 0], sizes = [10, 256], strides = [1, 1]} : vector<12x256xf32> to vector<10x256xf32>
    %496 = arith.addf %494, %495 : vector<10x256xf32>
    %497 = vector.extract_strided_slice %489 {offsets = [2, 0], sizes = [10, 256], strides = [1, 1]} : vector<12x256xf32> to vector<10x256xf32>
    %498 = vector.extract_strided_slice %489 {offsets = [0, 0], sizes = [10, 256], strides = [1, 1]} : vector<12x256xf32> to vector<10x256xf32>
    %499 = arith.subf %497, %498 : vector<10x256xf32>
    %500 = math.absf %496 : vector<10x256xf32>
    %501 = math.absf %499 : vector<10x256xf32>
    %502 = arith.maximumf %500, %501 : vector<10x256xf32>
    %503 = arith.addf %468, %502 : vector<10x256xf32>
    %c2_105 = arith.constant 2 : index
    %c24_106 = arith.constant 24 : index
    %c0_107 = arith.constant 0 : index
    %504 = vector.load %arg6[%c2_105, %c24_106, %c0_107] : memref<3x36x256xf32, #tpu.memory_space<vmem>>, vector<1x12x256xf32>
    %505 = vector.shape_cast %504 : vector<1x12x256xf32> to vector<12x256xf32>
    %506 = vector.extract_strided_slice %505 {offsets = [0, 1], sizes = [12, 1], strides = [1, 1]} : vector<12x256xf32> to vector<12x1xf32>
    %507 = vector.extract_strided_slice %505 {offsets = [0, 0], sizes = [12, 255], strides = [1, 1]} : vector<12x256xf32> to vector<12x255xf32>
    %508 = tpu.concatenate %506, %507 in 1 : vector<12x1xf32>, vector<12x255xf32> -> vector<12x256xf32>
    %509 = vector.extract_strided_slice %505 {offsets = [0, 1], sizes = [12, 255], strides = [1, 1]} : vector<12x256xf32> to vector<12x255xf32>
    %510 = vector.extract_strided_slice %505 {offsets = [0, 255], sizes = [12, 1], strides = [1, 1]} : vector<12x256xf32> to vector<12x1xf32>
    %511 = tpu.concatenate %509, %510 in 1 : vector<12x255xf32>, vector<12x1xf32> -> vector<12x256xf32>
    %c143_i32_108 = arith.constant 143 : i32
    %512 = vector.broadcast %c143_i32_108 : i32 to vector<1x256xi32>
    %513 = arith.cmpi eq, %14, %512 : vector<1x256xi32>
    %514 = vector.extract_strided_slice %505 {offsets = [0, 142], sizes = [12, 1], strides = [1, 1]} : vector<12x256xf32> to vector<12x1xf32>
    %515 = vector.shape_cast %513 : vector<1x256xi1> to vector<1x256xi1>
    %516 = vector.broadcast %515 : vector<1x256xi1> to vector<12x256xi1>
    %517 = vector.shape_cast %514 : vector<12x1xf32> to vector<12x1xf32>
    %518 = vector.broadcast %517 : vector<12x1xf32> to vector<12x256xf32>
    %519 = arith.select %516, %518, %511 : vector<12x256xi1>, vector<12x256xf32>
    %520 = arith.subf %519, %508 : vector<12x256xf32>
    %cst_109 = arith.constant 2.000000e+00 : f32
    %521 = vector.broadcast %cst_109 : f32 to vector<12x256xf32>
    %522 = arith.mulf %521, %505 : vector<12x256xf32>
    %523 = arith.addf %508, %522 : vector<12x256xf32>
    %524 = arith.addf %523, %519 : vector<12x256xf32>
    %525 = vector.extract_strided_slice %520 {offsets = [0, 0], sizes = [10, 256], strides = [1, 1]} : vector<12x256xf32> to vector<10x256xf32>
    %526 = vector.extract_strided_slice %520 {offsets = [1, 0], sizes = [10, 256], strides = [1, 1]} : vector<12x256xf32> to vector<10x256xf32>
    %cst_110 = arith.constant 2.000000e+00 : f32
    %527 = vector.broadcast %cst_110 : f32 to vector<10x256xf32>
    %528 = arith.mulf %527, %526 : vector<10x256xf32>
    %529 = arith.addf %525, %528 : vector<10x256xf32>
    %530 = vector.extract_strided_slice %520 {offsets = [2, 0], sizes = [10, 256], strides = [1, 1]} : vector<12x256xf32> to vector<10x256xf32>
    %531 = arith.addf %529, %530 : vector<10x256xf32>
    %532 = vector.extract_strided_slice %524 {offsets = [2, 0], sizes = [10, 256], strides = [1, 1]} : vector<12x256xf32> to vector<10x256xf32>
    %533 = vector.extract_strided_slice %524 {offsets = [0, 0], sizes = [10, 256], strides = [1, 1]} : vector<12x256xf32> to vector<10x256xf32>
    %534 = arith.subf %532, %533 : vector<10x256xf32>
    %535 = math.absf %531 : vector<10x256xf32>
    %536 = math.absf %534 : vector<10x256xf32>
    %537 = arith.maximumf %535, %536 : vector<10x256xf32>
    %538 = arith.addf %503, %537 : vector<10x256xf32>
    %cst_111 = arith.constant 0.333333343 : f32
    %539 = vector.broadcast %cst_111 : f32 to vector<10x256xf32>
    %540 = arith.mulf %538, %539 : vector<10x256xf32>
    %541 = tpu.iota {dimensions = array<i32: 0>} : vector<10x1xi32>
    %c24_i32 = arith.constant 24 : i32
    %542 = arith.addi %0, %c24_i32 : i32
    %c1_i32_112 = arith.constant 1 : i32
    %543 = arith.subi %542, %c1_i32_112 : i32
    %544 = vector.broadcast %543 : i32 to vector<10x1xi32>
    %545 = arith.addi %541, %544 : vector<10x1xi32>
    %c0_i32_113 = arith.constant 0 : i32
    %546 = vector.broadcast %c0_i32_113 : i32 to vector<10x1xi32>
    %547 = arith.cmpi sge, %545, %546 : vector<10x1xi32>
    %c96_i32_114 = arith.constant 96 : i32
    %548 = vector.broadcast %c96_i32_114 : i32 to vector<10x1xi32>
    %549 = arith.cmpi slt, %545, %548 : vector<10x1xi32>
    %550 = arith.andi %547, %549 : vector<10x1xi1>
    %c144_i32_115 = arith.constant 144 : i32
    %551 = vector.broadcast %c144_i32_115 : i32 to vector<1x256xi32>
    %552 = arith.cmpi slt, %14, %551 : vector<1x256xi32>
    %553 = vector.broadcast %550 : vector<10x1xi1> to vector<10x256xi1>
    %554 = vector.broadcast %552 : vector<1x256xi1> to vector<10x256xi1>
    %555 = arith.andi %553, %554 : vector<10x256xi1>
    %556 = vector.broadcast %1 : f32 to vector<10x256xf32>
    %557 = arith.cmpf ogt, %540, %556 : vector<10x256xf32>
    %558 = arith.andi %557, %555 : vector<10x256xi1>
    %cst_116 = arith.constant 1.000000e+00 : f32
    %cst_117 = arith.constant 0.000000e+00 : f32
    %559 = vector.broadcast %cst_116 : f32 to vector<10x256xf32>
    %560 = vector.broadcast %cst_117 : f32 to vector<10x256xf32>
    %561 = arith.select %558, %559, %560 : vector<10x256xi1>, vector<10x256xf32>
    %562 = vector.extract_strided_slice %561 {offsets = [0, 0], sizes = [8, 256], strides = [1, 1]} : vector<10x256xf32> to vector<8x256xf32>
    %563 = vector.extract_strided_slice %561 {offsets = [1, 0], sizes = [8, 256], strides = [1, 1]} : vector<10x256xf32> to vector<8x256xf32>
    %564 = arith.maximumf %562, %563 : vector<8x256xf32>
    %565 = vector.extract_strided_slice %561 {offsets = [2, 0], sizes = [8, 256], strides = [1, 1]} : vector<10x256xf32> to vector<8x256xf32>
    %566 = arith.maximumf %564, %565 : vector<8x256xf32>
    %cst_118 = arith.constant 0.000000e+00 : f32
    %567 = vector.broadcast %cst_118 : f32 to vector<8x1xf32>
    %568 = vector.extract_strided_slice %566 {offsets = [0, 1], sizes = [8, 255], strides = [1, 1]} : vector<8x256xf32> to vector<8x255xf32>
    %569 = tpu.concatenate %568, %567 in 1 : vector<8x255xf32>, vector<8x1xf32> -> vector<8x256xf32>
    %570 = vector.extract_strided_slice %566 {offsets = [0, 0], sizes = [8, 255], strides = [1, 1]} : vector<8x256xf32> to vector<8x255xf32>
    %571 = tpu.concatenate %567, %570 in 1 : vector<8x1xf32>, vector<8x255xf32> -> vector<8x256xf32>
    %572 = arith.maximumf %571, %569 : vector<8x256xf32>
    %573 = arith.maximumf %566, %572 : vector<8x256xf32>
    %c24_119 = arith.constant 24 : index
    %c0_120 = arith.constant 0 : index
    %574 = vector.load %arg5[%c24_119, %c0_120] : memref<32x256xf32, #tpu.memory_space<vmem>>, vector<8x256xf32>
    tpu.vector_store %arg5[%c24_119, %c0_120], %573 {strides = array<i32>} : memref<32x256xf32, #tpu.memory_space<vmem>>, vector<8x256xf32>,
    return
  }
  func.func @transform_0(%arg0: i32) -> i32 {
    %c0_i32 = arith.constant 0 : i32
    %c0_i32_0 = arith.constant 0 : i32
    return %c0_i32 : i32
  }
  func.func @transform_1(%arg0: i32) -> (i32, i32, i32) {
    %c4_i32 = arith.constant 4 : i32
    %0 = arith.muli %arg0, %c4_i32 : i32
    %c1_i32 = arith.constant 1 : i32
    %1 = arith.subi %0, %c1_i32 : i32
    %c0_i32 = arith.constant 0 : i32
    %2 = arith.maxsi %1, %c0_i32 : i32
    %c0_i32_0 = arith.constant 0 : i32
    %c0_i32_1 = arith.constant 0 : i32
    %c0_i32_2 = arith.constant 0 : i32
    return %c0_i32_0, %2, %c0_i32_1 : i32, i32, i32
  }
  func.func @transform_2(%arg0: i32) -> (i32, i32, i32) {
    %c0_i32 = arith.constant 0 : i32
    %c0_i32_0 = arith.constant 0 : i32
    %c0_i32_1 = arith.constant 0 : i32
    return %c0_i32, %arg0, %c0_i32_0 : i32, i32, i32
  }
  func.func @transform_3(%arg0: i32) -> (i32, i32, i32) {
    %c1_i32 = arith.constant 1 : i32
    %0 = arith.addi %arg0, %c1_i32 : i32
    %c4_i32 = arith.constant 4 : i32
    %1 = arith.muli %0, %c4_i32 : i32
    %c11_i32 = arith.constant 11 : i32
    %2 = arith.minsi %1, %c11_i32 : i32
    %c0_i32 = arith.constant 0 : i32
    %c0_i32_0 = arith.constant 0 : i32
    %c0_i32_1 = arith.constant 0 : i32
    return %c0_i32, %2, %c0_i32_0 : i32, i32, i32
  }
  func.func @transform_4(%arg0: i32) -> (i32, i32) {
    %c0_i32 = arith.constant 0 : i32
    %c0_i32_0 = arith.constant 0 : i32
    return %arg0, %c0_i32 : i32, i32
  }
}

</mosaic_0001>

<llo_original>
// kernel: tpu_custom_call.1
$region0: #{tpu_custom_call.1}
  #allocation0 [shape = 'u32[]', space=smem, size = 0x4, offset = 0x4, fixed_abs, tag = 'smem constant byte address 0x4 - core index']
  #allocation1 [shape = 'u32[144,128]{1,0:T(1,128)}', space=vmem, size = 0x12000, scoped, tag = 'internal scratch']
  #allocation2 [shape = 'f32[3,36,256]{2,1,0:T(8,128)}', space=vmem, size = 0x1e000, scoped, tag = 'scratch operand']
  #allocation3 [shape = 'f32[1]{0:T(128)S(6)}', space=smem, size = 0x200, scoped, tag = 'scoped memory for tpu_custom_call.1']
  #allocation11 [shape = 's32[]', space=sflag, size = 0x4, offset = 0, fixed_abs, tag = 'sflag constant byte address 0x0 - dummy sync flag']
  %s0 = inlined_call_operand.<no memory space> [shape: f32[1], index: 0, kind: input, shape index: {}]
  %s1 = inlined_call_operand.hbm [shape: f32[3,96,256], index: 1, kind: input, shape index: {}]
  %s2 = inlined_call_operand.hbm [shape: f32[3,96,256], index: 2, kind: input, shape index: {}]
  %s3 = inlined_call_operand.hbm [shape: f32[3,96,256], index: 3, kind: input, shape index: {}]
  %s4 = inlined_call_operand.hbm [shape: f32[96,256], index: 4, kind: output, shape index: {}]
  %s5 = sld [smem:[#allocation0]]
  $region69: #{tpu_custom_call.1} parent=0
    _
  %s7 = ssub.s32 1, %s5
  %s8 = scalar_select 0, %s7, %s5
  %9 = sst [smem:[#allocation3]] %s0
  $region1: #{tpu_custom_call.1} parent=0
    #allocation4 [shape = 'u8[49152]{0}', space=vmem, size = 0xc000, scoped, tag = 'input window, operand 1']
    #allocation5 [shape = 's32[2]{0}', space=sflag, size = 0x8, scoped, tag = 'scoped memory for tpu_custom_call.1']
    #allocation6 [shape = 's32[2]{0}', space=sflag, size = 0x8, scoped, tag = 'scoped memory for tpu_custom_call.1']
    #allocation7 [shape = 'u8[196608]{0}', space=vmem, size = 0x30000, scoped, tag = 'input window, operand 2']
    #allocation8 [shape = 's32[2]{0}', space=sflag, size = 0x8, scoped, tag = 'scoped memory for tpu_custom_call.1']
    #allocation9 [shape = 'u8[49152]{0}', space=vmem, size = 0xc000, scoped, tag = 'input window, operand 3']
    #allocation10 [shape = 'u8[65536]{0}', space=vmem, size = 0x10000, scoped, tag = 'output window, operand 0']
    %10 = vsyncpa [#allocation5], 0
    %s11 = scalar_lea.sflag [#allocation5], 1
    %12 = vsyncpa %s11, 0
    %13 = vsyncpa [#allocation8], 0
    %s14 = scalar_lea.sflag [#allocation8], 1
    %15 = vsyncpa %s14, 0
    %16 = vsyncpa [#allocation6], 0
    %s17 = scalar_lea.sflag [#allocation6], 1
    %18 = vsyncpa %s17, 0
    loop: start=0, step=1, limit=5
    $region2: #{tpu_custom_call.1} parent=1 // loop_pre_header
      _
    $region3: #{tpu_custom_call.1} parent=1 // loop_header
      %s20 = sphi 0, %s24
      %p21 = scmp.ge.s32.totalorder %s20, 5
      %s28 = sphi 0, %s28
      %s30 = sphi 0, %s28
      %s31 = sphi 0, %s30
      %s45 = sphi 0, %s31
      %s59 = sphi 0, %s61
      %s62 = sphi 0, %s59
      %s63 = sphi 0, %s62
      %s79 = sphi 0, %s63
      %s85 = sphi 0, %s87
      %s88 = sphi 0, %s85
      %s89 = sphi 0, %s88
      %s105 = sphi 0, %s89
      %s119 = sphi 0, %s121
      %s122 = sphi 0, %s119
      %s123 = sphi 0, %s122
      %s139 = sphi 0, %s123
      %s145 = sphi 0, %s147
      %s148 = sphi 0, %s145
      %s149 = sphi 0, %s148
      %s165 = sphi 0, %s149
    $region4: #{tpu_custom_call.1} parent=1 // loop_header_branch
      %23 = sbr.rel (%p21) target = $region8
    $region5: #{tpu_custom_call.1} parent=1 // loop_body
      %s25 = ssub.s32 %s20, 1
      %s26 = ssub.s32 %s20, 2
      %s27 = sadd.s32 %s20, 1
      %s29 = sadd.s32 %s28, 1
      %p32 = scmp.eq.s32.totalorder %s20, 2
      %p33 = scmp.ne.s32.totalorder %s28, %s30
      %p34 = scmp.eq.s32.totalorder %s20, 0
      %p35 = por %p33, %p34
      %p36 = scmp.ne.s32.totalorder %s28, %s30
      %p37 = scmp.eq.s32.totalorder %s25, 2
      %p38 = por %p36, %p37
      %p39 = scmp.ne.s32.totalorder %s30, %s31
      %p40 = scmp.eq.s32.totalorder %s25, 0
      %p41 = por %p39, %p40
      %p42 = scmp.ne.s32.totalorder %s30, %s31
      %p43 = scmp.eq.s32.totalorder %s26, 2
      %p44 = por %p42, %p43
      %p46 = scmp.ne.s32.totalorder %s31, %s45
      %p47 = scmp.eq.s32.totalorder %s26, 0
      %p48 = por %p46, %p47
      %s49 = smul.u32 %s20, 4
      %s50 = ssub.s32 %s49, 1
      %p51 = scmp.gt.s32.totalorder %s50, 0
      %s52 = scalar_select %p51, %s50, 0
      %s53 = smul.u32 %s27, 4
      %s54 = ssub.s32 %s53, 1
      %p55 = scmp.gt.s32.totalorder %s54, 0
      %s56 = scalar_select %p55, %s54, 0
      %s57 = ssub.s32 %s52, %s56
      %p58 = scmp.eq.s32.totalorder %s57, 0
      %s60 = sadd.s32 %s59, 1
      %s61 = scalar_select %p58, %s59, %s60
      %p64 = pneg %p58
      %p65 = scmp.eq.s32.totalorder %s20, 2
      %p66 = por %p64, %p65
      %p67 = scmp.ne.s32.totalorder %s59, %s62
      %p68 = scmp.eq.s32.totalorder %s20, 0
      %p69 = por %p67, %p68
      %p70 = scmp.ne.s32.totalorder %s59, %s62
      %p71 = scmp.eq.s32.totalorder %s25, 2
      %p72 = por %p70, %p71
      %p73 = scmp.ne.s32.totalorder %s62, %s63
      %p74 = scmp.eq.s32.totalorder %s25, 0
      %p75 = por %p73, %p74
      %p76 = scmp.ne.s32.totalorder %s62, %s63
      %p77 = scmp.eq.s32.totalorder %s26, 2
      %p78 = por %p76, %p77
      %p80 = scmp.ne.s32.totalorder %s63, %s79
      %p81 = scmp.eq.s32.totalorder %s26, 0
      %p82 = por %p80, %p81
      %s83 = ssub.s32 %s20, %s27
      %p84 = scmp.eq.s32.totalorder %s83, 0
      %s86 = sadd.s32 %s85, 1
      %s87 = scalar_select %p84, %s85, %s86
      %p90 = pneg %p84
      %p91 = scmp.eq.s32.totalorder %s20, 2
      %p92 = por %p90, %p91
      %p93 = scmp.ne.s32.totalorder %s85, %s88
      %p94 = scmp.eq.s32.totalorder %s20, 0
      %p95 = por %p93, %p94
      %p96 = scmp.ne.s32.totalorder %s85, %s88
      %p97 = scmp.eq.s32.totalorder %s25, 2
      %p98 = por %p96, %p97
      %p99 = scmp.ne.s32.totalorder %s88, %s89
      %p100 = scmp.eq.s32.totalorder %s25, 0
      %p101 = por %p99, %p100
      %p102 = scmp.ne.s32.totalorder %s88, %s89
      %p103 = scmp.eq.s32.totalorder %s26, 2
      %p104 = por %p102, %p103
      %p106 = scmp.ne.s32.totalorder %s89, %s105
      %p107 = scmp.eq.s32.totalorder %s26, 0
      %p108 = por %p106, %p107
      %s109 = sadd.s32 %s20, 1
      %s110 = smul.u32 %s109, 4
      %p111 = scmp.lt.s32.totalorder %s110, 11
      %s112 = scalar_select %p111, %s110, 11
      %s113 = sadd.s32 %s27, 1
      %s114 = smul.u32 %s113, 4
      %p115 = scmp.lt.s32.totalorder %s114, 11
      %s116 = scalar_select %p115, %s114, 11
      %s117 = ssub.s32 %s112, %s116
      %p118 = scmp.eq.s32.totalorder %s117, 0
      %s120 = sadd.s32 %s119, 1
      %s121 = scalar_select %p118, %s119, %s120
      %p124 = pneg %p118
      %p125 = scmp.eq.s32.totalorder %s20, 2
      %p126 = por %p124, %p125
      %p127 = scmp.ne.s32.totalorder %s119, %s122
      %p128 = scmp.eq.s32.totalorder %s20, 0
      %p129 = por %p127, %p128
      %p130 = scmp.ne.s32.totalorder %s119, %s122
      %p131 = scmp.eq.s32.totalorder %s25, 2
      %p132 = por %p130, %p131
      %p133 = scmp.ne.s32.totalorder %s122, %s123
      %p134 = scmp.eq.s32.totalorder %s25, 0
      %p135 = por %p133, %p134
      %p136 = scmp.ne.s32.totalorder %s122, %s123
      %p137 = scmp.eq.s32.totalorder %s26, 2
      %p138 = por %p136, %p137
      %p140 = scmp.ne.s32.totalorder %s123, %s139
      %p141 = scmp.eq.s32.totalorder %s26, 0
      %p142 = por %p140, %p141
      %s143 = ssub.s32 %s20, %s27
      %p144 = scmp.eq.s32.totalorder %s143, 0
      %s146 = sadd.s32 %s145, 1
      %s147 = scalar_select %p144, %s145, %s146
      %p150 = pneg %p144
      %p151 = scmp.eq.s32.totalorder %s20, 2
      %p152 = por %p150, %p151
      %p153 = scmp.ne.s32.totalorder %s145, %s148
      %p154 = scmp.eq.s32.totalorder %s20, 0
      %p155 = por %p153, %p154
      %p156 = scmp.ne.s32.totalorder %s145, %s148
      %p157 = scmp.eq.s32.totalorder %s25, 2
      %p158 = por %p156, %p157
      %p159 = scmp.ne.s32.totalorder %s148, %s149
      %p160 = scmp.eq.s32.totalorder %s25, 0
      %p161 = por %p159, %p160
      %p162 = scmp.ne.s32.totalorder %s148, %s149
      %p163 = scmp.eq.s32.totalorder %s26, 2
      %p164 = por %p162, %p163
      %p166 = scmp.ne.s32.totalorder %s149, %s165
      %p167 = scmp.eq.s32.totalorder %s26, 0
      %p168 = por %p166, %p167
      %p169 = scmp.le.s32.totalorder 1, %s20
      %p170 = scmp.lt.s32.totalorder %s20, 4
      %p171 = pnand %p169, %p170
      %p172 = pneg %p171
      // Predicated region
      $region9: #{tpu_custom_call.1} parent=5 // pred_check
        _
      $region10: #{tpu_custom_call.1} parent=5 // pred_check_branch
        %174 = sbr.rel (%p171) target = $region12
      $region11: #{tpu_custom_call.1} parent=5 // pred_region
        %s175 = ssub.s32 %s20, 1
        // Predicated region
        $region13: #{tpu_custom_call.1} parent=11 // pred_check
          %p176 = pneg %p41
        $region14: #{tpu_custom_call.1} parent=11 // pred_check_branch
          %178 = sbr.rel (%p176) target = $region16
        $region15: #{tpu_custom_call.1} parent=11 // pred_region
          _
        $region16: #{tpu_custom_call.1} parent=11 // pred_fallthru
          _
      $region12: #{tpu_custom_call.1} parent=5 // pred_fallthru
        _
      %p179 = scmp.lt.s32.totalorder %s20, 3
      // Predicated region
      $region17: #{tpu_custom_call.1} parent=5 // pred_check
        %p180 = pneg %p179
      $region18: #{tpu_custom_call.1} parent=5 // pred_check_branch
        %182 = sbr.rel (%p180) target = $region20
      $region19: #{tpu_custom_call.1} parent=5 // pred_region
        // Predicated region
        $region21: #{tpu_custom_call.1} parent=19 // pred_check
          %p183 = pneg %p69
        $region22: #{tpu_custom_call.1} parent=19 // pred_check_branch
          %185 = sbr.rel (%p183) target = $region24
        $region23: #{tpu_custom_call.1} parent=19 // pred_region
          %s186 = sand.u32 %s59, 1
          %s187 = scalar_lea.sflag [#allocation5], %s186
          %s188 = sand.u32 %s59, 1
          %s189 = smul.addr %s188, 48
          %s190 = scalar_lea.vmem [#allocation4], %s189
          %s191 = smul.u32 %s20, 4
          %s192 = ssub.s32 %s191, 1
          %p193 = scmp.gt.s32.totalorder %s192, 0
          %s194 = scalar_select %p193, %s192, 0
          %s196 = ssub.s32 768, 768
          %197 = vsyncadd %s187, %s196
          %s198 = smul.addr %s194, 2
          %s199 = smul.addr %s198, 128
          %s200 = scalar_lea.hbm %s1, %s199
          %s201 = sshll.u32 %s190, 4
          %s202 = int_to_ptr.vmem [resolvable:$true] %s201
          %207 = dma.hbm_to_vmem [thread:$0]  %s200, 768, %s202, %s187, 3072, 256, 16
        $region24: #{tpu_custom_call.1} parent=19 // pred_fallthru
          _
        // Predicated region
        $region25: #{tpu_custom_call.1} parent=19 // pred_check
          %p208 = pneg %p95
        $region26: #{tpu_custom_call.1} parent=19 // pred_check_branch
          %210 = sbr.rel (%p208) target = $region28
        $region27: #{tpu_custom_call.1} parent=19 // pred_region
          #allocation12 [shape = 'u32[6]{0}', space=smem, size = 0x18, scoped, tag = 'DMA stride descriptor']
          %s211 = sand.u32 %s20, 1
          %s212 = scalar_lea.sflag [#allocation8], %s211
          %s213 = sand.u32 %s85, 1
          %s214 = smul.addr %s213, 192
          %s215 = scalar_lea.vmem [#allocation7], %s214
          %s216 = smul.u32 4, %s20
          %s218 = ssub.s32 3072, 3072
          %219 = vsyncadd %s212, %s218
          %s220 = smul.addr %s216, 2
          %s221 = smul.addr %s220, 128
          %s222 = scalar_lea.hbm %s2, %s221
          %s224 = sshll.u32 1, 14
          %s225 = sxor.u32 4294967295, %s224
          %s227 = sld [smem:[#allocation0]]
          %s228 = sadd.s32 2, %s227
          %s230 = sshll.u32 7, 26
          %s231 = sxor.u32 4294967295, %s230
          %s232 = sand.u32 0, %s231
          %s233 = sshll.u32 %s228, 26
          %s234 = sor.u32 %s232, %s233
          %s235 = sshll.u32 %s215, 4
          %s236 = int_to_ptr.vmem [resolvable:$true] %s235
          %242 = sst [smem:[#allocation12]] 3072
          %s243 = scalar_lea.smem [#allocation12], 1
          %244 = sst [smem:[%s243]] 1024
          %s245 = scalar_lea.smem [#allocation12], 2
          %246 = sst [smem:[%s245]] 4
          %s247 = scalar_lea.smem [#allocation12], 3
          %248 = sst [smem:[%s247]] 256
          %s249 = scalar_lea.smem [#allocation12], 4
          %250 = sst [smem:[%s249]] 256
          %s251 = scalar_lea.smem [#allocation12], 5
          %252 = sst [smem:[%s251]] 16
          %254 = dma.general %s222, 3072, %s236, %s212, 131072, [#allocation12], %s234, 0
        $region28: #{tpu_custom_call.1} parent=19 // pred_fallthru
          _
        // Predicated region
        $region29: #{tpu_custom_call.1} parent=19 // pred_check
          %p255 = pneg %p129
        $region30: #{tpu_custom_call.1} parent=19 // pred_check_branch
          %257 = sbr.rel (%p255) target = $region32
        $region31: #{tpu_custom_call.1} parent=19 // pred_region
          %s258 = sand.u32 %s20, 1
          %s259 = scalar_lea.sflag [#allocation8], %s258
          %s260 = sand.u32 %s119, 1
          %s261 = smul.addr %s260, 48
          %s262 = scalar_lea.vmem [#allocation9], %s261
          %s263 = sadd.s32 %s20, 1
          %s264 = smul.u32 %s263, 4
          %p265 = scmp.lt.s32.totalorder %s264, 11
          %s266 = scalar_select %p265, %s264, 11
          %s268 = ssub.s32 768, 768
          %269 = vsyncadd %s259, %s268
          %s270 = smul.addr %s266, 2
          %s271 = smul.addr %s270, 128
          %s272 = scalar_lea.hbm %s3, %s271
          %s273 = sshll.u32 %s262, 4
          %s274 = int_to_ptr.vmem [resolvable:$true] %s273
          %279 = dma.hbm_to_vmem [thread:$0]  %s272, 768, %s274, %s259, 3072, 256, 16
        $region32: #{tpu_custom_call.1} parent=19 // pred_fallthru
          _
      $region20: #{tpu_custom_call.1} parent=5 // pred_fallthru
        _
      %p280 = scmp.le.s32.totalorder 1, %s20
      %p281 = scmp.lt.s32.totalorder %s20, 4
      %p282 = pnand %p280, %p281
      %p283 = pneg %p282
      // Predicated region
      $region33: #{tpu_custom_call.1} parent=5 // pred_check
        _
      $region34: #{tpu_custom_call.1} parent=5 // pred_check_branch
        %285 = sbr.rel (%p282) target = $region36
      $region35: #{tpu_custom_call.1} parent=5 // pred_region
        %s286 = ssub.s32 %s20, 1
        %s287 = sand.u32 %s62, 1
        %s288 = scalar_lea.sflag [#allocation5], %s287
        %s289 = sand.u32 %s62, 1
        %s290 = smul.addr %s289, 48
        %s291 = scalar_lea.vmem [#allocation4], %s290
        // Predicated region
        $region37: #{tpu_custom_call.1} parent=35 // pred_check
          %p292 = pneg %p75
        $region38: #{tpu_custom_call.1} parent=35 // pred_check_branch
          %294 = sbr.rel (%p292) target = $region40
        $region39: #{tpu_custom_call.1} parent=35 // pred_region
          %295 = dma.done %s288, 768
        $region40: #{tpu_custom_call.1} parent=35 // pred_fallthru
          _
        %s296 = sand.u32 %s25, 1
        %s297 = scalar_lea.sflag [#allocation8], %s296
        %s298 = sand.u32 %s88, 1
        %s299 = smul.addr %s298, 192
        %s300 = scalar_lea.vmem [#allocation7], %s299
        // Predicated region
        $region41: #{tpu_custom_call.1} parent=35 // pred_check
          %p301 = pneg %p101
        $region42: #{tpu_custom_call.1} parent=35 // pred_check_branch
          %303 = sbr.rel (%p301) target = $region44
        $region43: #{tpu_custom_call.1} parent=35 // pred_region
          %304 = dma.done %s297, 3072
        $region44: #{tpu_custom_call.1} parent=35 // pred_fallthru
          _
        %s305 = sand.u32 %s25, 1
        %s306 = scalar_lea.sflag [#allocation8], %s305
        %s307 = sand.u32 %s122, 1
        %s308 = smul.addr %s307, 48
        %s309 = scalar_lea.vmem [#allocation9], %s308
        // Predicated region
        $region45: #{tpu_custom_call.1} parent=35 // pred_check
          %p310 = pneg %p135
        $region46: #{tpu_custom_call.1} parent=35 // pred_check_branch
          %312 = sbr.rel (%p310) target = $region48
        $region47: #{tpu_custom_call.1} parent=35 // pred_region
          %313 = dma.done %s306, 768
        $region48: #{tpu_custom_call.1} parent=35 // pred_fallthru
          _
        %p314 = pneg %p41
        %p315 = pneg %p38
        %s316 = sand.u32 %s62, 1
        %s317 = scalar_lea.sflag [#allocation5], %s316
        %s318 = sand.u32 %s62, 1
        %s319 = smul.addr %s318, 48
        %s320 = scalar_lea.vmem [#allocation4], %s319
        %p321 = pneg %p75
        %p322 = pneg %p72
        %s323 = sand.u32 %s25, 1
        %s324 = scalar_lea.sflag [#allocation8], %s323
        %s325 = sand.u32 %s88, 1
        %s326 = smul.addr %s325, 192
        %s327 = scalar_lea.vmem [#allocation7], %s326
        %p328 = pneg %p101
        %p329 = pneg %p98
        %s330 = sand.u32 %s25, 1
        %s331 = scalar_lea.sflag [#allocation8], %s330
        %s332 = sand.u32 %s122, 1
        %s333 = smul.addr %s332, 48
        %s334 = scalar_lea.vmem [#allocation9], %s333
        %p335 = pneg %p135
        %p336 = pneg %p132
        %p337 = pneg %p161
        %p338 = pneg %p158
        %s339 = sand.u32 %s148, 1
        %s340 = scalar_lea.sflag [#allocation6], %s339
        %s341 = sand.u32 %s148, 1
        %s342 = smul.addr %s341, 64
        %s343 = scalar_lea.vmem [#allocation10], %s342
        %s344 = smul.u32 %s25, 4
        %s345 = ssub.s32 %s344, 1
        %p346 = scmp.gt.s32.totalorder %s345, 0
        %s347 = scalar_select %p346, %s345, 0
        %s348 = smul.u32 4, %s25
        %s349 = sadd.s32 %s25, 1
        %s350 = smul.u32 %s349, 4
        %p351 = scmp.lt.s32.totalorder %s350, 11
        %s352 = scalar_select %p351, %s350, 11
        %s353 = smul.u32 4, %s25
        %s354 = smul.u32 %s25, 32
        %s355 = sld [smem:[#allocation3]]
        %v356 = vld [vmem:[%s291] sm:$0xc0]
        %v357 = vld [vmem:[%s291 + $0x8] sm:$0xc0]
        %v358 = vld [vmem:[%s291 + $0x10] sm:$0xc0]
        %v359 = vld [vmem:[%s291 + $0x18] sm:$0xc0]
        %v360 = vld [vmem:[%s291 + $0x20] sm:$0xc0]
        %v361 = vld [vmem:[%s291 + $0x28] sm:$0xc0]
        %v368 = vrot.slane %v356, 6
        %v369 = vrot.slane %v357, 6
        %v370 = vrot.slane %v358, 6
        %v371 = vrot.slane %v359, 6
        %v372 = vrot.slane %v360, 6
        %v373 = vrot.slane %v361, 6
        %380 = vst [vmem:[#allocation2] sm:$0x3] %v368
        %381 = vst [vmem:[#allocation2 + $0x8] sm:$0x3] %v369
        %382 = vst [vmem:[#allocation2 + $0x50] sm:$0x3] %v370
        %383 = vst [vmem:[#allocation2 + $0x58] sm:$0x3] %v371
        %384 = vst [vmem:[#allocation2 + $0xa0] sm:$0x3] %v372
        %385 = vst [vmem:[#allocation2 + $0xa8] sm:$0x3] %v373
        %v386 = vld [vmem:[%s300] sm:$0xff]
        %v387 = vld [vmem:[%s300 + $0x8] sm:$0xff]
        %v388 = vld [vmem:[%s300 + $0x10] sm:$0xff]
        %v389 = vld [vmem:[%s300 + $0x18] sm:$0xff]
        %v390 = vld [vmem:[%s300 + $0x20] sm:$0xff]
        %v391 = vld [vmem:[%s300 + $0x28] sm:$0xff]
        %v392 = vld [vmem:[%s300 + $0x30] sm:$0xff]
        %v393 = vld [vmem:[%s300 + $0x38] sm:$0xff]
        %v394 = vld [vmem:[%s300 + $0x40] sm:$0xff]
        %v395 = vld [vmem:[%s300 + $0x48] sm:$0xff]
        %v396 = vld [vmem:[%s300 + $0x50] sm:$0xff]
        %v397 = vld [vmem:[%s300 + $0x58] sm:$0xff]
        %v398 = vld [vmem:[%s300 + $0x60] sm:$0xff]
        %v399 = vld [vmem:[%s300 + $0x68] sm:$0xff]
        %v400 = vld [vmem:[%s300 + $0x70] sm:$0xff]
        %v401 = vld [vmem:[%s300 + $0x78] sm:$0xff]
        %v402 = vld [vmem:[%s300 + $0x80] sm:$0xff]
        %v403 = vld [vmem:[%s300 + $0x88] sm:$0xff]
        %v404 = vld [vmem:[%s300 + $0x90] sm:$0xff]
        %v405 = vld [vmem:[%s300 + $0x98] sm:$0xff]
        %v406 = vld [vmem:[%s300 + $0xa0] sm:$0xff]
        %v407 = vld [vmem:[%s300 + $0xa8] sm:$0xff]
        %v408 = vld [vmem:[%s300 + $0xb0] sm:$0xff]
        %v409 = vld [vmem:[%s300 + $0xb8] sm:$0xff]
        %vm434 = vcmask 1041408
        %v435 = vrot.slane %v386, 6
        %v436 = vrot.slane %v387, 6
        %v437 = vrot.slane %v388, 6
        %v438 = vsel %vm434, %v435, %v437
        %v439 = vrot.slane %v389, 6
        %v440 = vsel %vm434, %v436, %v439
        %v441 = vrot.slane %v390, 6
        %v442 = vsel %vm434, %v437, %v441
        %v443 = vrot.slane %v391, 6
        %v444 = vsel %vm434, %v439, %v443
        %v445 = vrot.slane %v392, 6
        %v446 = vsel %vm434, %v441, %v445
        %v447 = vrot.slane %v393, 6
        %v448 = vsel %vm434, %v443, %v447
        %v449 = vrot.slane %v394, 6
        %v450 = vrot.slane %v395, 6
        %v451 = vrot.slane %v396, 6
        %v452 = vsel %vm434, %v449, %v451
        %v453 = vrot.slane %v397, 6
        %v454 = vsel %vm434, %v450, %v453
        %v455 = vrot.slane %v398, 6
        %v456 = vsel %vm434, %v451, %v455
        %v457 = vrot.slane %v399, 6
        %v458 = vsel %vm434, %v453, %v457
        %v459 = vrot.slane %v400, 6
        %v460 = vsel %vm434, %v455, %v459
        %v461 = vrot.slane %v401, 6
        %v462 = vsel %vm434, %v457, %v461
        %v463 = vrot.slane %v402, 6
        %v464 = vrot.slane %v403, 6
        %v465 = vrot.slane %v404, 6
        %v466 = vsel %vm434, %v463, %v465
        %v467 = vrot.slane %v405, 6
        %v468 = vsel %vm434, %v464, %v467
        %v469 = vrot.slane %v406, 6
        %v470 = vsel %vm434, %v465, %v469
        %v471 = vrot.slane %v407, 6
        %v472 = vsel %vm434, %v467, %v471
        %v473 = vrot.slane %v408, 6
        %v474 = vsel %vm434, %v469, %v473
        %v475 = vrot.slane %v409, 6
        %v476 = vsel %vm434, %v471, %v475
        %507 = vst [vmem:[#allocation2] sm:$0xfc] %v435
        %508 = vst [vmem:[#allocation2 + $0x8] sm:$0xfc] %v436
        %509 = vst [vmem:[#allocation2 + $0x10] sm:$0xff] %v438
        %510 = vst [vmem:[#allocation2 + $0x18] sm:$0xff] %v440
        %511 = vst [vmem:[#allocation2 + $0x20] sm:$0xff] %v442
        %512 = vst [vmem:[#allocation2 + $0x28] sm:$0xff] %v444
        %513 = vst [vmem:[#allocation2 + $0x30] sm:$0xff] %v446
        %514 = vst [vmem:[#allocation2 + $0x38] sm:$0xff] %v448
        %515 = vst [vmem:[#allocation2 + $0x40] sm:$0x3] %v445
        %516 = vst [vmem:[#allocation2 + $0x48] sm:$0x3] %v447
        %517 = vst [vmem:[#allocation2 + $0x50] sm:$0xfc] %v449
        %518 = vst [vmem:[#allocation2 + $0x58] sm:$0xfc] %v450
        %519 = vst [vmem:[#allocation2 + $0x60] sm:$0xff] %v452
        %520 = vst [vmem:[#allocation2 + $0x68] sm:$0xff] %v454
        %521 = vst [vmem:[#allocation2 + $0x70] sm:$0xff] %v456
        %522 = vst [vmem:[#allocation2 + $0x78] sm:$0xff] %v458
        %523 = vst [vmem:[#allocation2 + $0x80] sm:$0xff] %v460
        %524 = vst [vmem:[#allocation2 + $0x88] sm:$0xff] %v462
        %525 = vst [vmem:[#allocation2 + $0x90] sm:$0x3] %v459
        %526 = vst [vmem:[#allocation2 + $0x98] sm:$0x3] %v461
        %527 = vst [vmem:[#allocation2 + $0xa0] sm:$0xfc] %v463
        %528 = vst [vmem:[#allocation2 + $0xa8] sm:$0xfc] %v464
        %529 = vst [vmem:[#allocation2 + $0xb0] sm:$0xff] %v466
        %530 = vst [vmem:[#allocation2 + $0xb8] sm:$0xff] %v468
        %531 = vst [vmem:[#allocation2 + $0xc0] sm:$0xff] %v470
        %532 = vst [vmem:[#allocation2 + $0xc8] sm:$0xff] %v472
        %533 = vst [vmem:[#allocation2 + $0xd0] sm:$0xff] %v474
        %534 = vst [vmem:[#allocation2 + $0xd8] sm:$0xff] %v476
        %535 = vst [vmem:[#allocation2 + $0xe0] sm:$0x3] %v473
        %536 = vst [vmem:[#allocation2 + $0xe8] sm:$0x3] %v475
        %v537 = vld [vmem:[%s309] sm:$0x3]
        %v538 = vld [vmem:[%s309 + $0x8] sm:$0x3]
        %v539 = vld [vmem:[%s309 + $0x10] sm:$0x3]
        %v540 = vld [vmem:[%s309 + $0x18] sm:$0x3]
        %v541 = vld [vmem:[%s309 + $0x20] sm:$0x3]
        %v542 = vld [vmem:[%s309 + $0x28] sm:$0x3]
        %v549 = vrot.slane %v537, 6
        %v550 = vrot.slane %v538, 6
        %v551 = vrot.slane %v539, 6
        %v552 = vrot.slane %v540, 6
        %v553 = vrot.slane %v541, 6
        %v554 = vrot.slane %v542, 6
        %561 = vst [vmem:[#allocation2 + $0x40] sm:$0xc] %v549
        %562 = vst [vmem:[#allocation2 + $0x48] sm:$0xc] %v550
        %563 = vst [vmem:[#allocation2 + $0x90] sm:$0xc] %v551
        %564 = vst [vmem:[#allocation2 + $0x98] sm:$0xc] %v552
        %565 = vst [vmem:[#allocation2 + $0xe0] sm:$0xc] %v553
        %566 = vst [vmem:[#allocation2 + $0xe8] sm:$0xc] %v554
        %p567 = scmp.eq.s32.totalorder %s25, 0
        // Predicated region
        $region49: #{tpu_custom_call.1} parent=35 // pred_check
          %p568 = pneg %p567
        $region50: #{tpu_custom_call.1} parent=35 // pred_check_branch
          %570 = sbr.rel (%p568) target = $region52
        $region51: #{tpu_custom_call.1} parent=35 // pred_region
          %s571 = scalar_lea.vmem [#allocation2], 3
          %v572 = vld [vmem:[%s571] ss:$8 sm:$0x3]
          %s573 = scalar_lea.vmem [#allocation2], 83
          %v574 = vld [vmem:[%s573] ss:$8 sm:$0x3]
          %s575 = scalar_lea.vmem [#allocation2], 163
          %v576 = vld [vmem:[%s575] ss:$8 sm:$0x3]
          %v577 = vlaneseq
          %vm578 = vcmp.ge.s32.totalorder %v577, 0
          %vm579 = vcmp.lt.s32.totalorder %v577, 256
          %vm580 = vmand %vm578, %vm579
          %s581 = scalar_lea.vmem [#allocation2], 1
          %582 = vst.msk [vmem:[%s581] ss:$8 sm:$0x3] %vm580, %v572
          %583 = vst.msk [vmem:[%s581] ss:$8 sm:$0x0] %vm580, %v572
          %s584 = scalar_lea.vmem [#allocation2], 81
          %585 = vst.msk [vmem:[%s584] ss:$8 sm:$0x3] %vm580, %v574
          %586 = vst.msk [vmem:[%s584] ss:$8 sm:$0x0] %vm580, %v574
          %s587 = scalar_lea.vmem [#allocation2], 161
          %588 = vst.msk [vmem:[%s587] ss:$8 sm:$0x3] %vm580, %v576
          %589 = vst.msk [vmem:[%s587] ss:$8 sm:$0x0] %vm580, %v576
        $region52: #{tpu_custom_call.1} parent=35 // pred_fallthru
          _
        %p590 = scmp.eq.s32.totalorder %s25, 2
        // Predicated region
        $region53: #{tpu_custom_call.1} parent=35 // pred_check
          %p591 = pneg %p590
        $region54: #{tpu_custom_call.1} parent=35 // pred_check_branch
          %593 = sbr.rel (%p591) target = $region56
        $region55: #{tpu_custom_call.1} parent=35 // pred_region
          %s594 = scalar_lea.vmem [#allocation2], 64
          %v595 = vld [vmem:[%s594] ss:$8 sm:$0x3]
          %s596 = scalar_lea.vmem [#allocation2], 144
          %v597 = vld [vmem:[%s596] ss:$8 sm:$0x3]
          %s598 = scalar_lea.vmem [#allocation2], 224
          %v599 = vld [vmem:[%s598] ss:$8 sm:$0x3]
          %v600 = vlaneseq
          %vm601 = vcmp.ge.s32.totalorder %v600, 0
          %vm602 = vcmp.lt.s32.totalorder %v600, 256
          %vm603 = vmand %vm601, %vm602
          %s604 = scalar_lea.vmem [#allocation2], 66
          %605 = vst.msk [vmem:[%s604] ss:$8 sm:$0x3] %vm603, %v595
          %606 = vst.msk [vmem:[%s604] ss:$8 sm:$0x0] %vm603, %v595
          %s607 = scalar_lea.vmem [#allocation2], 146
          %608 = vst.msk [vmem:[%s607] ss:$8 sm:$0x3] %vm603, %v597
          %609 = vst.msk [vmem:[%s607] ss:$8 sm:$0x0] %vm603, %v597
          %s610 = scalar_lea.vmem [#allocation2], 226
          %611 = vst.msk [vmem:[%s610] ss:$8 sm:$0x3] %vm603, %v599
          %612 = vst.msk [vmem:[%s610] ss:$8 sm:$0x0] %vm603, %v599
        $region56: #{tpu_custom_call.1} parent=35 // pred_fallthru
          _
        %v613 = vlaneseq
        %v614 = vand.u32 %v613, 127
        %v615 = vadd.s32 %v614, 128
        %v616 = vld [vmem:[#allocation2] sm:$0xff]
        %v617 = vld [vmem:[#allocation2 + $0x8] sm:$0xff]
        %v618 = vld [vmem:[#allocation2 + $0x10] sm:$0xf]
        %v619 = vld [vmem:[#allocation2 + $0x18] sm:$0xf]
        %622 = vrot.lane.b32.xlu0 %v616, 127
        %v623 = vpop.permute.xlu0 %622
        %624 = vrot.lane.b32.xlu0 %v618, 127
        %v625 = vpop.permute.xlu0 %624
        %630 = vrot.lane.b32.xlu0 %v616, 1
        %v631 = vpop.permute.xlu0 %630
        %632 = vrot.lane.b32.xlu0 %v617, 1
        %v633 = vpop.permute.xlu0 %632
        %634 = vrot.lane.b32.xlu0 %v618, 1
        %v635 = vpop.permute.xlu0 %634
        %636 = vrot.lane.b32.xlu0 %v619, 1
        %v637 = vpop.permute.xlu0 %636
        %vm638 = vcmask 7168
        %v639 = vsel %vm638, %v631, %v633
        %v640 = vsel %vm638, %v635, %v637
        %v645 = vsel %vm638, %v623, %v631
        %v646 = vsel %vm638, %v625, %v635
        %647 = vrot.lane.b32.xlu0 %v617, 127
        %v648 = vpop.permute.xlu0 %647
        %649 = vrot.lane.b32.xlu0 %v619, 127
        %v650 = vpop.permute.xlu0 %649
        %vm651 = vcmask 1039360
        %v652 = vsel %vm651, %v623, %v648
        %v653 = vsel %vm651, %v625, %v650
        %v658 = vsel %vm651, %v648, %v617
        %v659 = vsel %vm651, %v650, %v619
        %vm660 = vcmp.eq.s32.totalorder %v614, 143
        %vm661 = vcmp.eq.s32.totalorder %v615, 143
        %v662 = vsel %vm660, 1, 0
        %v663 = vsel %vm661, 1, 0
        %vm664 = vcmp.eq.s32.totalorder %v662, 1
        %vm665 = vcmp.eq.s32.totalorder %v663, 1
        %666 = vset.pattern.permute.xlu0 14
        %667 = vperm.xlu0 %666, %v617
        %v668 = vpop.permute.xlu0 %667
        %670 = vset.pattern.permute.xlu0 14
        %671 = vperm.xlu0 %670, %v619
        %v672 = vpop.permute.xlu0 %671
        %v674 = vsel %vm664, %v668, %v652
        %v675 = vsel %vm665, %v668, %v658
        %v676 = vsel %vm664, %v672, %v653
        %v677 = vsel %vm665, %v672, %v659
        %v678 = vsub.f32 %v674, %v645
        %v679 = vsub.f32 %v675, %v639
        %v680 = vsub.f32 %v676, %v646
        %v681 = vsub.f32 %v677, %v640
        %v682 = vmul.f32 %v616, 2.0
        %v683 = vmul.f32 %v617, 2.0
        %v684 = vmul.f32 %v618, 2.0
        %v685 = vmul.f32 %v619, 2.0
        %v686 = vadd.f32 %v645, %v682
        %v687 = vadd.f32 %v639, %v683
        %v688 = vadd.f32 %v646, %v684
        %v689 = vadd.f32 %v640, %v685
        %v690 = vadd.f32 %v686, %v674
        %v691 = vadd.f32 %v687, %v675
        %v692 = vadd.f32 %v688, %v676
        %v693 = vadd.f32 %v689, %v677
        %v694 = vmul.f32 %v678, 2.0
        %v695 = vmul.f32 %v679, 2.0
        %v696 = vmul.f32 %v680, 2.0
        %v697 = vmul.f32 %v681, 2.0
        %vm702 = vcmask 1046528
        %v703 = vrot.slane %v694, 1
        %v704 = vrot.slane %v696, 1
        %v705 = vsel %vm702, %v703, %v704
        %v706 = vrot.slane %v695, 1
        %v707 = vrot.slane %v697, 1
        %v708 = vsel %vm702, %v706, %v707
        %v713 = vadd.f32 %v678, %v705
        %v714 = vadd.f32 %v679, %v708
        %v715 = vadd.f32 %v680, %v704
        %v716 = vadd.f32 %v681, %v707
        %vm721 = vcmask 1045504
        %v722 = vrot.slane %v678, 2
        %v723 = vrot.slane %v680, 2
        %v724 = vsel %vm721, %v722, %v723
        %v725 = vrot.slane %v679, 2
        %v726 = vrot.slane %v681, 2
        %v727 = vsel %vm721, %v725, %v726
        %v732 = vadd.f32 %v713, %v724
        %v733 = vadd.f32 %v714, %v727
        %v734 = vadd.f32 %v715, %v723
        %v735 = vadd.f32 %v716, %v726
        %v740 = vrot.slane %v690, 6
        %v741 = vrot.slane %v691, 6
        %v742 = vrot.slane %v692, 6
        %v743 = vsel %vm434, %v740, %v742
        %v744 = vrot.slane %v693, 6
        %v745 = vsel %vm434, %v741, %v744
        %v750 = vsub.f32 %v690, %v740
        %v751 = vsub.f32 %v691, %v741
        %v752 = vsub.f32 %v692, %v743
        %v753 = vsub.f32 %v693, %v745
        %v754 = vand.u32 2147483647, %v732
        %v755 = vand.u32 2147483647, %v733
        %v756 = vand.u32 2147483647, %v734
        %v757 = vand.u32 2147483647, %v735
        %v758 = vand.u32 2147483647, %v750
        %v759 = vand.u32 2147483647, %v751
        %v760 = vand.u32 2147483647, %v752
        %v761 = vand.u32 2147483647, %v753
        %v766 = vrot.slane %v758, 2
        %v767 = vrot.slane %v760, 2
        %v768 = vsel %vm721, %v766, %v767
        %v769 = vrot.slane %v759, 2
        %v770 = vrot.slane %v761, 2
        %v771 = vsel %vm721, %v769, %v770
        %v776 = vmax.f32 %v754, %v768
        %v777 = vmax.f32 %v755, %v771
        %v778 = vmax.f32 %v756, %v767
        %v779 = vmax.f32 %v757, %v770
        %s780 = scalar_lea.vmem [#allocation2], 80
        %v781 = vld [vmem:[%s780] sm:$0xff]
        %v782 = vld [vmem:[%s780 + $0x8] sm:$0xff]
        %v783 = vld [vmem:[%s780 + $0x10] sm:$0xf]
        %v784 = vld [vmem:[%s780 + $0x18] sm:$0xf]
        %787 = vrot.lane.b32.xlu0 %v781, 127
        %v788 = vpop.permute.xlu0 %787
        %789 = vrot.lane.b32.xlu0 %v783, 127
        %v790 = vpop.permute.xlu0 %789
        %795 = vrot.lane.b32.xlu0 %v781, 1
        %v796 = vpop.permute.xlu0 %795
        %797 = vrot.lane.b32.xlu0 %v782, 1
        %v798 = vpop.permute.xlu0 %797
        %799 = vrot.lane.b32.xlu0 %v783, 1
        %v800 = vpop.permute.xlu0 %799
        %801 = vrot.lane.b32.xlu0 %v784, 1
        %v802 = vpop.permute.xlu0 %801
        %v803 = vsel %vm638, %v796, %v798
        %v804 = vsel %vm638, %v800, %v802
        %v809 = vsel %vm638, %v788, %v796
        %v810 = vsel %vm638, %v790, %v800
        %811 = vrot.lane.b32.xlu0 %v782, 127
        %v812 = vpop.permute.xlu0 %811
        %813 = vrot.lane.b32.xlu0 %v784, 127
        %v814 = vpop.permute.xlu0 %813
        %v815 = vsel %vm651, %v788, %v812
        %v816 = vsel %vm651, %v790, %v814
        %v821 = vsel %vm651, %v812, %v782
        %v822 = vsel %vm651, %v814, %v784
        %823 = vset.pattern.permute.xlu0 14
        %824 = vperm.xlu0 %823, %v782
        %v825 = vpop.permute.xlu0 %824
        %827 = vset.pattern.permute.xlu0 14
        %828 = vperm.xlu0 %827, %v784
        %v829 = vpop.permute.xlu0 %828
        %v831 = vsel %vm664, %v825, %v815
        %v832 = vsel %vm665, %v825, %v821
        %v833 = vsel %vm664, %v829, %v816
        %v834 = vsel %vm665, %v829, %v822
        %v835 = vsub.f32 %v831, %v809
        %v836 = vsub.f32 %v832, %v803
        %v837 = vsub.f32 %v833, %v810
        %v838 = vsub.f32 %v834, %v804
        %v839 = vmul.f32 %v781, 2.0
        %v840 = vmul.f32 %v782, 2.0
        %v841 = vmul.f32 %v783, 2.0
        %v842 = vmul.f32 %v784, 2.0
        %v843 = vadd.f32 %v809, %v839
        %v844 = vadd.f32 %v803, %v840
        %v845 = vadd.f32 %v810, %v841
        %v846 = vadd.f32 %v804, %v842
        %v847 = vadd.f32 %v843, %v831
        %v848 = vadd.f32 %v844, %v832
        %v849 = vadd.f32 %v845, %v833
        %v850 = vadd.f32 %v846, %v834
        %v851 = vmul.f32 %v835, 2.0
        %v852 = vmul.f32 %v836, 2.0
        %v853 = vmul.f32 %v837, 2.0
        %v854 = vmul.f32 %v838, 2.0
        %v859 = vrot.slane %v851, 1
        %v860 = vrot.slane %v853, 1
        %v861 = vsel %vm702, %v859, %v860
        %v862 = vrot.slane %v852, 1
        %v863 = vrot.slane %v854, 1
        %v864 = vsel %vm702, %v862, %v863
        %v869 = vadd.f32 %v835, %v861
        %v870 = vadd.f32 %v836, %v864
        %v871 = vadd.f32 %v837, %v860
        %v872 = vadd.f32 %v838, %v863
        %v877 = vrot.slane %v835, 2
        %v878 = vrot.slane %v837, 2
        %v879 = vsel %vm721, %v877, %v878
        %v880 = vrot.slane %v836, 2
        %v881 = vrot.slane %v838, 2
        %v882 = vsel %vm721, %v880, %v881
        %v887 = vadd.f32 %v869, %v879
        %v888 = vadd.f32 %v870, %v882
        %v889 = vadd.f32 %v871, %v878
        %v890 = vadd.f32 %v872, %v881
        %v895 = vrot.slane %v847, 6
        %v896 = vrot.slane %v848, 6
        %v897 = vrot.slane %v849, 6
        %v898 = vsel %vm434, %v895, %v897
        %v899 = vrot.slane %v850, 6
        %v900 = vsel %vm434, %v896, %v899
        %v905 = vsub.f32 %v847, %v895
        %v906 = vsub.f32 %v848, %v896
        %v907 = vsub.f32 %v849, %v898
        %v908 = vsub.f32 %v850, %v900
        %v909 = vand.u32 2147483647, %v887
        %v910 = vand.u32 2147483647, %v888
        %v911 = vand.u32 2147483647, %v889
        %v912 = vand.u32 2147483647, %v890
        %v913 = vand.u32 2147483647, %v905
        %v914 = vand.u32 2147483647, %v906
        %v915 = vand.u32 2147483647, %v907
        %v916 = vand.u32 2147483647, %v908
        %v921 = vrot.slane %v913, 2
        %v922 = vrot.slane %v915, 2
        %v923 = vsel %vm721, %v921, %v922
        %v924 = vrot.slane %v914, 2
        %v925 = vrot.slane %v916, 2
        %v926 = vsel %vm721, %v924, %v925
        %v931 = vmax.f32 %v909, %v923
        %v932 = vmax.f32 %v910, %v926
        %v933 = vmax.f32 %v911, %v922
        %v934 = vmax.f32 %v912, %v925
        %v935 = vadd.f32 %v776, %v931
        %v936 = vadd.f32 %v777, %v932
        %v937 = vadd.f32 %v778, %v933
        %v938 = vadd.f32 %v779, %v934
        %s939 = scalar_lea.vmem [#allocation2], 160
        %v940 = vld [vmem:[%s939] sm:$0xff]
        %v941 = vld [vmem:[%s939 + $0x8] sm:$0xff]
        %v942 = vld [vmem:[%s939 + $0x10] sm:$0xf]
        %v943 = vld [vmem:[%s939 + $0x18] sm:$0xf]
        %946 = vrot.lane.b32.xlu0 %v940, 127
        %v947 = vpop.permute.xlu0 %946
        %948 = vrot.lane.b32.xlu0 %v942, 127
        %v949 = vpop.permute.xlu0 %948
        %954 = vrot.lane.b32.xlu0 %v940, 1
        %v955 = vpop.permute.xlu0 %954
        %956 = vrot.lane.b32.xlu0 %v941, 1
        %v957 = vpop.permute.xlu0 %956
        %958 = vrot.lane.b32.xlu0 %v942, 1
        %v959 = vpop.permute.xlu0 %958
        %960 = vrot.lane.b32.xlu0 %v943, 1
        %v961 = vpop.permute.xlu0 %960
        %v962 = vsel %vm638, %v955, %v957
        %v963 = vsel %vm638, %v959, %v961
        %v968 = vsel %vm638, %v947, %v955
        %v969 = vsel %vm638, %v949, %v959
        %970 = vrot.lane.b32.xlu0 %v941, 127
        %v971 = vpop.permute.xlu0 %970
        %972 = vrot.lane.b32.xlu0 %v943, 127
        %v973 = vpop.permute.xlu0 %972
        %v974 = vsel %vm651, %v947, %v971
        %v975 = vsel %vm651, %v949, %v973
        %v980 = vsel %vm651, %v971, %v941
        %v981 = vsel %vm651, %v973, %v943
        %982 = vset.pattern.permute.xlu0 14
        %983 = vperm.xlu0 %982, %v941
        %v984 = vpop.permute.xlu0 %983
        %986 = vset.pattern.permute.xlu0 14
        %987 = vperm.xlu0 %986, %v943
        %v988 = vpop.permute.xlu0 %987
        %v990 = vsel %vm664, %v984, %v974
        %v991 = vsel %vm665, %v984, %v980
        %v992 = vsel %vm664, %v988, %v975
        %v993 = vsel %vm665, %v988, %v981
        %v994 = vsub.f32 %v990, %v968
        %v995 = vsub.f32 %v991, %v962
        %v996 = vsub.f32 %v992, %v969
        %v997 = vsub.f32 %v993, %v963
        %v998 = vmul.f32 %v940, 2.0
        %v999 = vmul.f32 %v941, 2.0
        %v1000 = vmul.f32 %v942, 2.0
        %v1001 = vmul.f32 %v943, 2.0
        %v1002 = vadd.f32 %v968, %v998
        %v1003 = vadd.f32 %v962, %v999
        %v1004 = vadd.f32 %v969, %v1000
        %v1005 = vadd.f32 %v963, %v1001
        %v1006 = vadd.f32 %v1002, %v990
        %v1007 = vadd.f32 %v1003, %v991
        %v1008 = vadd.f32 %v1004, %v992
        %v1009 = vadd.f32 %v1005, %v993
        %v1010 = vmul.f32 %v994, 2.0
        %v1011 = vmul.f32 %v995, 2.0
        %v1012 = vmul.f32 %v996, 2.0
        %v1013 = vmul.f32 %v997, 2.0
        %v1018 = vrot.slane %v1010, 1
        %v1019 = vrot.slane %v1012, 1
        %v1020 = vsel %vm702, %v1018, %v1019
        %v1021 = vrot.slane %v1011, 1
        %v1022 = vrot.slane %v1013, 1
        %v1023 = vsel %vm702, %v1021, %v1022
        %v1028 = vadd.f32 %v994, %v1020
        %v1029 = vadd.f32 %v995, %v1023
        %v1030 = vadd.f32 %v996, %v1019
        %v1031 = vadd.f32 %v997, %v1022
        %v1036 = vrot.slane %v994, 2
        %v1037 = vrot.slane %v996, 2
        %v1038 = vsel %vm721, %v1036, %v1037
        %v1039 = vrot.slane %v995, 2
        %v1040 = vrot.slane %v997, 2
        %v1041 = vsel %vm721, %v1039, %v1040
        %v1046 = vadd.f32 %v1028, %v1038
        %v1047 = vadd.f32 %v1029, %v1041
        %v1048 = vadd.f32 %v1030, %v1037
        %v1049 = vadd.f32 %v1031, %v1040
        %v1054 = vrot.slane %v1006, 6
        %v1055 = vrot.slane %v1007, 6
        %v1056 = vrot.slane %v1008, 6
        %v1057 = vsel %vm434, %v1054, %v1056
        %v1058 = vrot.slane %v1009, 6
        %v1059 = vsel %vm434, %v1055, %v1058
        %v1064 = vsub.f32 %v1006, %v1054
        %v1065 = vsub.f32 %v1007, %v1055
        %v1066 = vsub.f32 %v1008, %v1057
        %v1067 = vsub.f32 %v1009, %v1059
        %v1068 = vand.u32 2147483647, %v1046
        %v1069 = vand.u32 2147483647, %v1047
        %v1070 = vand.u32 2147483647, %v1048
        %v1071 = vand.u32 2147483647, %v1049
        %v1072 = vand.u32 2147483647, %v1064
        %v1073 = vand.u32 2147483647, %v1065
        %v1074 = vand.u32 2147483647, %v1066
        %v1075 = vand.u32 2147483647, %v1067
        %v1080 = vrot.slane %v1072, 2
        %v1081 = vrot.slane %v1074, 2
        %v1082 = vsel %vm721, %v1080, %v1081
        %v1083 = vrot.slane %v1073, 2
        %v1084 = vrot.slane %v1075, 2
        %v1085 = vsel %vm721, %v1083, %v1084
        %v1090 = vmax.f32 %v1068, %v1082
        %v1091 = vmax.f32 %v1069, %v1085
        %v1092 = vmax.f32 %v1070, %v1081
        %v1093 = vmax.f32 %v1071, %v1084
        %v1094 = vadd.f32 %v935, %v1090
        %v1095 = vadd.f32 %v936, %v1091
        %v1096 = vadd.f32 %v937, %v1092
        %v1097 = vadd.f32 %v938, %v1093
        %v1098 = vmul.f32 %v1094, 0.33333334
        %v1099 = vmul.f32 %v1095, 0.33333334
        %v1100 = vmul.f32 %v1096, 0.33333334
        %v1101 = vmul.f32 %v1097, 0.33333334
        %v1102 = vlaneseq
        %v1103 = vshrl.u32 %v1102, 7
        %v1104 = vadd.s32 %v1103, 8
        %s1105 = sadd.s32 %s354, 4294967295
        %v1106 = vstv %s1105
        %v1107 = vadd.s32 %v1103, %v1106
        %v1108 = vadd.s32 %v1104, %v1106
        %vm1109 = vcmp.ge.s32.totalorder %v1107, 0
        %vm1110 = vcmp.ge.s32.totalorder %v1108, 0
        %vm1111 = vcmp.lt.s32.totalorder %v1107, 96
        %vm1112 = vcmp.lt.s32.totalorder %v1108, 96
        %vm1113 = vmand %vm1109, %vm1111
        %vm1114 = vmand %vm1110, %vm1112
        %vm1115 = vcmp.lt.s32.totalorder %v614, 144
        %vm1116 = vcmp.lt.s32.totalorder %v615, 144
        %v1117 = vsel %vm1113, 1, 0
        %v1118 = vsel %vm1114, 1, 0
        %vm1119 = vcmp.eq.s32.totalorder %v1117, 1
        %vm1120 = vcmp.eq.s32.totalorder %v1118, 1
        %v1121 = vsel %vm1115, 1, 0
        %v1122 = vsel %vm1116, 1, 0
        %vm1123 = vcmp.eq.s32.totalorder %v1121, 1
        %vm1124 = vcmp.eq.s32.totalorder %v1122, 1
        %vm1125 = vmand %vm1119, %vm1123
        %vm1126 = vmand %vm1119, %vm1124
        %vm1127 = vmand %vm1120, %vm1123
        %vm1128 = vmand %vm1120, %vm1124
        %v1129 = vstv %s355
        %vm1130 = vcmp.gt.f32.partialorder %v1098, %v1129
        %vm1131 = vcmp.gt.f32.partialorder %v1099, %v1129
        %vm1132 = vcmp.gt.f32.partialorder %v1100, %v1129
        %vm1133 = vcmp.gt.f32.partialorder %v1101, %v1129
        %vm1134 = vmand %vm1130, %vm1125
        %vm1135 = vmand %vm1131, %vm1126
        %vm1136 = vmand %vm1132, %vm1127
        %vm1137 = vmand %vm1133, %vm1128
        %v1138 = vsel %vm1134, 1.0, 0.0
        %v1139 = vsel %vm1135, 1.0, 0.0
        %v1140 = vsel %vm1136, 1.0, 0.0
        %v1141 = vsel %vm1137, 1.0, 0.0
        %v1146 = vrot.slane %v1138, 1
        %v1147 = vrot.slane %v1140, 1
        %v1148 = vsel %vm702, %v1146, %v1147
        %v1149 = vrot.slane %v1139, 1
        %v1150 = vrot.slane %v1141, 1
        %v1151 = vsel %vm702, %v1149, %v1150
        %v1154 = vmax.f32 %v1138, %v1148
        %v1155 = vmax.f32 %v1139, %v1151
        %v1156 = vrot.slane %v1138, 2
        %v1157 = vrot.slane %v1140, 2
        %v1158 = vsel %vm721, %v1156, %v1157
        %v1159 = vrot.slane %v1139, 2
        %v1160 = vrot.slane %v1141, 2
        %v1161 = vsel %vm721, %v1159, %v1160
        %v1164 = vmax.f32 %v1154, %v1158
        %v1165 = vmax.f32 %v1155, %v1161
        %1168 = vrot.lane.b32.xlu0 %v1164, 127
        %v1169 = vpop.permute.xlu0 %1168
        %1170 = vrot.lane.b32.xlu0 %v1165, 127
        %v1171 = vpop.permute.xlu0 %1170
        %v1172 = vsel %vm651, %v1169, %v1171
        %v1175 = vsel %vm651, %v1171, 0.0
        %1176 = vrot.lane.b32.xlu0 %v1164, 1
        %v1177 = vpop.permute.xlu0 %1176
        %1178 = vrot.lane.b32.xlu0 %v1165, 1
        %v1179 = vpop.permute.xlu0 %1178
        %v1180 = vsel %vm638, %v1177, %v1179
        %v1183 = vsel %vm638, 0.0, %v1177
        %v1184 = vmax.f32 %v1183, %v1172
        %v1185 = vmax.f32 %v1180, %v1175
        %v1186 = vmax.f32 %v1164, %v1184
        %v1187 = vmax.f32 %v1165, %v1185
        %1188 = vst [vmem:[%s343] sm:$0xff] %v1186
        %1189 = vst [vmem:[%s343 + $0x8] sm:$0xff] %v1187
        %v1190 = vld [vmem:[#allocation2 + $0x10] sm:$0xff]
        %v1191 = vld [vmem:[#allocation2 + $0x18] sm:$0xff]
        %v1192 = vld [vmem:[#allocation2 + $0x20] sm:$0xf]
        %v1193 = vld [vmem:[#allocation2 + $0x28] sm:$0xf]
        %1196 = vrot.lane.b32.xlu0 %v1190, 127
        %v1197 = vpop.permute.xlu0 %1196
        %1198 = vrot.lane.b32.xlu0 %v1192, 127
        %v1199 = vpop.permute.xlu0 %1198
        %1204 = vrot.lane.b32.xlu0 %v1190, 1
        %v1205 = vpop.permute.xlu0 %1204
        %1206 = vrot.lane.b32.xlu0 %v1191, 1
        %v1207 = vpop.permute.xlu0 %1206
        %1208 = vrot.lane.b32.xlu0 %v1192, 1
        %v1209 = vpop.permute.xlu0 %1208
        %1210 = vrot.lane.b32.xlu0 %v1193, 1
        %v1211 = vpop.permute.xlu0 %1210
        %v1212 = vsel %vm638, %v1205, %v1207
        %v1213 = vsel %vm638, %v1209, %v1211
        %v1218 = vsel %vm638, %v1197, %v1205
        %v1219 = vsel %vm638, %v1199, %v1209
        %1220 = vrot.lane.b32.xlu0 %v1191, 127
        %v1221 = vpop.permute.xlu0 %1220
        %1222 = vrot.lane.b32.xlu0 %v1193, 127
        %v1223 = vpop.permute.xlu0 %1222
        %v1224 = vsel %vm651, %v1197, %v1221
        %v1225 = vsel %vm651, %v1199, %v1223
        %v1230 = vsel %vm651, %v1221, %v1191
        %v1231 = vsel %vm651, %v1223, %v1193
        %1232 = vset.pattern.permute.xlu0 14
        %1233 = vperm.xlu0 %1232, %v1191
        %v1234 = vpop.permute.xlu0 %1233
        %1236 = vset.pattern.permute.xlu0 14
        %1237 = vperm.xlu0 %1236, %v1193
        %v1238 = vpop.permute.xlu0 %1237
        %v1240 = vsel %vm664, %v1234, %v1224
        %v1241 = vsel %vm665, %v1234, %v1230
        %v1242 = vsel %vm664, %v1238, %v1225
        %v1243 = vsel %vm665, %v1238, %v1231
        %v1244 = vsub.f32 %v1240, %v1218
        %v1245 = vsub.f32 %v1241, %v1212
        %v1246 = vsub.f32 %v1242, %v1219
        %v1247 = vsub.f32 %v1243, %v1213
        %v1248 = vmul.f32 %v1190, 2.0
        %v1249 = vmul.f32 %v1191, 2.0
        %v1250 = vmul.f32 %v1192, 2.0
        %v1251 = vmul.f32 %v1193, 2.0
        %v1252 = vadd.f32 %v1218, %v1248
        %v1253 = vadd.f32 %v1212, %v1249
        %v1254 = vadd.f32 %v1219, %v1250
        %v1255 = vadd.f32 %v1213, %v1251
        %v1256 = vadd.f32 %v1252, %v1240
        %v1257 = vadd.f32 %v1253, %v1241
        %v1258 = vadd.f32 %v1254, %v1242
        %v1259 = vadd.f32 %v1255, %v1243
        %v1260 = vmul.f32 %v1244, 2.0
        %v1261 = vmul.f32 %v1245, 2.0
        %v1262 = vmul.f32 %v1246, 2.0
        %v1263 = vmul.f32 %v1247, 2.0
        %v1268 = vrot.slane %v1260, 1
        %v1269 = vrot.slane %v1262, 1
        %v1270 = vsel %vm702, %v1268, %v1269
        %v1271 = vrot.slane %v1261, 1
        %v1272 = vrot.slane %v1263, 1
        %v1273 = vsel %vm702, %v1271, %v1272
        %v1278 = vadd.f32 %v1244, %v1270
        %v1279 = vadd.f32 %v1245, %v1273
        %v1280 = vadd.f32 %v1246, %v1269
        %v1281 = vadd.f32 %v1247, %v1272
        %v1286 = vrot.slane %v1244, 2
        %v1287 = vrot.slane %v1246, 2
        %v1288 = vsel %vm721, %v1286, %v1287
        %v1289 = vrot.slane %v1245, 2
        %v1290 = vrot.slane %v1247, 2
        %v1291 = vsel %vm721, %v1289, %v1290
        %v1296 = vadd.f32 %v1278, %v1288
        %v1297 = vadd.f32 %v1279, %v1291
        %v1298 = vadd.f32 %v1280, %v1287
        %v1299 = vadd.f32 %v1281, %v1290
        %v1304 = vrot.slane %v1256, 6
        %v1305 = vrot.slane %v1257, 6
        %v1306 = vrot.slane %v1258, 6
        %v1307 = vsel %vm434, %v1304, %v1306
        %v1308 = vrot.slane %v1259, 6
        %v1309 = vsel %vm434, %v1305, %v1308
        %v1314 = vsub.f32 %v1256, %v1304
        %v1315 = vsub.f32 %v1257, %v1305
        %v1316 = vsub.f32 %v1258, %v1307
        %v1317 = vsub.f32 %v1259, %v1309
        %v1318 = vand.u32 2147483647, %v1296
        %v1319 = vand.u32 2147483647, %v1297
        %v1320 = vand.u32 2147483647, %v1298
        %v1321 = vand.u32 2147483647, %v1299
        %v1322 = vand.u32 2147483647, %v1314
        %v1323 = vand.u32 2147483647, %v1315
        %v1324 = vand.u32 2147483647, %v1316
        %v1325 = vand.u32 2147483647, %v1317
        %v1330 = vrot.slane %v1322, 2
        %v1331 = vrot.slane %v1324, 2
        %v1332 = vsel %vm721, %v1330, %v1331
        %v1333 = vrot.slane %v1323, 2
        %v1334 = vrot.slane %v1325, 2
        %v1335 = vsel %vm721, %v1333, %v1334
        %v1340 = vmax.f32 %v1318, %v1332
        %v1341 = vmax.f32 %v1319, %v1335
        %v1342 = vmax.f32 %v1320, %v1331
        %v1343 = vmax.f32 %v1321, %v1334
        %v1344 = vld [vmem:[%s780 + $0x10] sm:$0xff]
        %v1345 = vld [vmem:[%s780 + $0x18] sm:$0xff]
        %v1346 = vld [vmem:[%s780 + $0x20] sm:$0xf]
        %v1347 = vld [vmem:[%s780 + $0x28] sm:$0xf]
        %1350 = vrot.lane.b32.xlu0 %v1344, 127
        %v1351 = vpop.permute.xlu0 %1350
        %1352 = vrot.lane.b32.xlu0 %v1346, 127
        %v1353 = vpop.permute.xlu0 %1352
        %1358 = vrot.lane.b32.xlu0 %v1344, 1
        %v1359 = vpop.permute.xlu0 %1358
        %1360 = vrot.lane.b32.xlu0 %v1345, 1
        %v1361 = vpop.permute.xlu0 %1360
        %1362 = vrot.lane.b32.xlu0 %v1346, 1
        %v1363 = vpop.permute.xlu0 %1362
        %1364 = vrot.lane.b32.xlu0 %v1347, 1
        %v1365 = vpop.permute.xlu0 %1364
        %v1366 = vsel %vm638, %v1359, %v1361
        %v1367 = vsel %vm638, %v1363, %v1365
        %v1372 = vsel %vm638, %v1351, %v1359
        %v1373 = vsel %vm638, %v1353, %v1363
        %1374 = vrot.lane.b32.xlu0 %v1345, 127
        %v1375 = vpop.permute.xlu0 %1374
        %1376 = vrot.lane.b32.xlu0 %v1347, 127
        %v1377 = vpop.permute.xlu0 %1376
        %v1378 = vsel %vm651, %v1351, %v1375
        %v1379 = vsel %vm651, %v1353, %v1377
        %v1384 = vsel %vm651, %v1375, %v1345
        %v1385 = vsel %vm651, %v1377, %v1347
        %1386 = vset.pattern.permute.xlu0 14
        %1387 = vperm.xlu0 %1386, %v1345
        %v1388 = vpop.permute.xlu0 %1387
        %1390 = vset.pattern.permute.xlu0 14
        %1391 = vperm.xlu0 %1390, %v1347
        %v1392 = vpop.permute.xlu0 %1391
        %v1394 = vsel %vm664, %v1388, %v1378
        %v1395 = vsel %vm665, %v1388, %v1384
        %v1396 = vsel %vm664, %v1392, %v1379
        %v1397 = vsel %vm665, %v1392, %v1385
        %v1398 = vsub.f32 %v1394, %v1372
        %v1399 = vsub.f32 %v1395, %v1366
        %v1400 = vsub.f32 %v1396, %v1373
        %v1401 = vsub.f32 %v1397, %v1367
        %v1402 = vmul.f32 %v1344, 2.0
        %v1403 = vmul.f32 %v1345, 2.0
        %v1404 = vmul.f32 %v1346, 2.0
        %v1405 = vmul.f32 %v1347, 2.0
        %v1406 = vadd.f32 %v1372, %v1402
        %v1407 = vadd.f32 %v1366, %v1403
        %v1408 = vadd.f32 %v1373, %v1404
        %v1409 = vadd.f32 %v1367, %v1405
        %v1410 = vadd.f32 %v1406, %v1394
        %v1411 = vadd.f32 %v1407, %v1395
        %v1412 = vadd.f32 %v1408, %v1396
        %v1413 = vadd.f32 %v1409, %v1397
        %v1414 = vmul.f32 %v1398, 2.0
        %v1415 = vmul.f32 %v1399, 2.0
        %v1416 = vmul.f32 %v1400, 2.0
        %v1417 = vmul.f32 %v1401, 2.0
        %v1422 = vrot.slane %v1414, 1
        %v1423 = vrot.slane %v1416, 1
        %v1424 = vsel %vm702, %v1422, %v1423
        %v1425 = vrot.slane %v1415, 1
        %v1426 = vrot.slane %v1417, 1
        %v1427 = vsel %vm702, %v1425, %v1426
        %v1432 = vadd.f32 %v1398, %v1424
        %v1433 = vadd.f32 %v1399, %v1427
        %v1434 = vadd.f32 %v1400, %v1423
        %v1435 = vadd.f32 %v1401, %v1426
        %v1440 = vrot.slane %v1398, 2
        %v1441 = vrot.slane %v1400, 2
        %v1442 = vsel %vm721, %v1440, %v1441
        %v1443 = vrot.slane %v1399, 2
        %v1444 = vrot.slane %v1401, 2
        %v1445 = vsel %vm721, %v1443, %v1444
        %v1450 = vadd.f32 %v1432, %v1442
        %v1451 = vadd.f32 %v1433, %v1445
        %v1452 = vadd.f32 %v1434, %v1441
        %v1453 = vadd.f32 %v1435, %v1444
        %v1458 = vrot.slane %v1410, 6
        %v1459 = vrot.slane %v1411, 6
        %v1460 = vrot.slane %v1412, 6
        %v1461 = vsel %vm434, %v1458, %v1460
        %v1462 = vrot.slane %v1413, 6
        %v1463 = vsel %vm434, %v1459, %v1462
        %v1468 = vsub.f32 %v1410, %v1458
        %v1469 = vsub.f32 %v1411, %v1459
        %v1470 = vsub.f32 %v1412, %v1461
        %v1471 = vsub.f32 %v1413, %v1463
        %v1472 = vand.u32 2147483647, %v1450
        %v1473 = vand.u32 2147483647, %v1451
        %v1474 = vand.u32 2147483647, %v1452
        %v1475 = vand.u32 2147483647, %v1453
        %v1476 = vand.u32 2147483647, %v1468
        %v1477 = vand.u32 2147483647, %v1469
        %v1478 = vand.u32 2147483647, %v1470
        %v1479 = vand.u32 2147483647, %v1471
        %v1484 = vrot.slane %v1476, 2
        %v1485 = vrot.slane %v1478, 2
        %v1486 = vsel %vm721, %v1484, %v1485
        %v1487 = vrot.slane %v1477, 2
        %v1488 = vrot.slane %v1479, 2
        %v1489 = vsel %vm721, %v1487, %v1488
        %v1494 = vmax.f32 %v1472, %v1486
        %v1495 = vmax.f32 %v1473, %v1489
        %v1496 = vmax.f32 %v1474, %v1485
        %v1497 = vmax.f32 %v1475, %v1488
        %v1498 = vadd.f32 %v1340, %v1494
        %v1499 = vadd.f32 %v1341, %v1495
        %v1500 = vadd.f32 %v1342, %v1496
        %v1501 = vadd.f32 %v1343, %v1497
        %v1502 = vld [vmem:[%s939 + $0x10] sm:$0xff]
        %v1503 = vld [vmem:[%s939 + $0x18] sm:$0xff]
        %v1504 = vld [vmem:[%s939 + $0x20] sm:$0xf]
        %v1505 = vld [vmem:[%s939 + $0x28] sm:$0xf]
        %1508 = vrot.lane.b32.xlu0 %v1502, 127
        %v1509 = vpop.permute.xlu0 %1508
        %1510 = vrot.lane.b32.xlu0 %v1504, 127
        %v1511 = vpop.permute.xlu0 %1510
        %1516 = vrot.lane.b32.xlu0 %v1502, 1
        %v1517 = vpop.permute.xlu0 %1516
        %1518 = vrot.lane.b32.xlu0 %v1503, 1
        %v1519 = vpop.permute.xlu0 %1518
        %1520 = vrot.lane.b32.xlu0 %v1504, 1
        %v1521 = vpop.permute.xlu0 %1520
        %1522 = vrot.lane.b32.xlu0 %v1505, 1
        %v1523 = vpop.permute.xlu0 %1522
        %v1524 = vsel %vm638, %v1517, %v1519
        %v1525 = vsel %vm638, %v1521, %v1523
        %v1530 = vsel %vm638, %v1509, %v1517
        %v1531 = vsel %vm638, %v1511, %v1521
        %1532 = vrot.lane.b32.xlu0 %v1503, 127
        %v1533 = vpop.permute.xlu0 %1532
        %1534 = vrot.lane.b32.xlu0 %v1505, 127
        %v1535 = vpop.permute.xlu0 %1534
        %v1536 = vsel %vm651, %v1509, %v1533
        %v1537 = vsel %vm651, %v1511, %v1535
        %v1542 = vsel %vm651, %v1533, %v1503
        %v1543 = vsel %vm651, %v1535, %v1505
        %1544 = vset.pattern.permute.xlu0 14
        %1545 = vperm.xlu0 %1544, %v1503
        %v1546 = vpop.permute.xlu0 %1545
        %1548 = vset.pattern.permute.xlu0 14
        %1549 = vperm.xlu0 %1548, %v1505
        %v1550 = vpop.permute.xlu0 %1549
        %v1552 = vsel %vm664, %v1546, %v1536
        %v1553 = vsel %vm665, %v1546, %v1542
        %v1554 = vsel %vm664, %v1550, %v1537
        %v1555 = vsel %vm665, %v1550, %v1543
        %v1556 = vsub.f32 %v1552, %v1530
        %v1557 = vsub.f32 %v1553, %v1524
        %v1558 = vsub.f32 %v1554, %v1531
        %v1559 = vsub.f32 %v1555, %v1525
        %v1560 = vmul.f32 %v1502, 2.0
        %v1561 = vmul.f32 %v1503, 2.0
        %v1562 = vmul.f32 %v1504, 2.0
        %v1563 = vmul.f32 %v1505, 2.0
        %v1564 = vadd.f32 %v1530, %v1560
        %v1565 = vadd.f32 %v1524, %v1561
        %v1566 = vadd.f32 %v1531, %v1562
        %v1567 = vadd.f32 %v1525, %v1563
        %v1568 = vadd.f32 %v1564, %v1552
        %v1569 = vadd.f32 %v1565, %v1553
        %v1570 = vadd.f32 %v1566, %v1554
        %v1571 = vadd.f32 %v1567, %v1555
        %v1572 = vmul.f32 %v1556, 2.0
        %v1573 = vmul.f32 %v1557, 2.0
        %v1574 = vmul.f32 %v1558, 2.0
        %v1575 = vmul.f32 %v1559, 2.0
        %v1580 = vrot.slane %v1572, 1
        %v1581 = vrot.slane %v1574, 1
        %v1582 = vsel %vm702, %v1580, %v1581
        %v1583 = vrot.slane %v1573, 1
        %v1584 = vrot.slane %v1575, 1
        %v1585 = vsel %vm702, %v1583, %v1584
        %v1590 = vadd.f32 %v1556, %v1582
        %v1591 = vadd.f32 %v1557, %v1585
        %v1592 = vadd.f32 %v1558, %v1581
        %v1593 = vadd.f32 %v1559, %v1584
        %v1598 = vrot.slane %v1556, 2
        %v1599 = vrot.slane %v1558, 2
        %v1600 = vsel %vm721, %v1598, %v1599
        %v1601 = vrot.slane %v1557, 2
        %v1602 = vrot.slane %v1559, 2
        %v1603 = vsel %vm721, %v1601, %v1602
        %v1608 = vadd.f32 %v1590, %v1600
        %v1609 = vadd.f32 %v1591, %v1603
        %v1610 = vadd.f32 %v1592, %v1599
        %v1611 = vadd.f32 %v1593, %v1602
        %v1616 = vrot.slane %v1568, 6
        %v1617 = vrot.slane %v1569, 6
        %v1618 = vrot.slane %v1570, 6
        %v1619 = vsel %vm434, %v1616, %v1618
        %v1620 = vrot.slane %v1571, 6
        %v1621 = vsel %vm434, %v1617, %v1620
        %v1626 = vsub.f32 %v1568, %v1616
        %v1627 = vsub.f32 %v1569, %v1617
        %v1628 = vsub.f32 %v1570, %v1619
        %v1629 = vsub.f32 %v1571, %v1621
        %v1630 = vand.u32 2147483647, %v1608
        %v1631 = vand.u32 2147483647, %v1609
        %v1632 = vand.u32 2147483647, %v1610
        %v1633 = vand.u32 2147483647, %v1611
        %v1634 = vand.u32 2147483647, %v1626
        %v1635 = vand.u32 2147483647, %v1627
        %v1636 = vand.u32 2147483647, %v1628
        %v1637 = vand.u32 2147483647, %v1629
        %v1642 = vrot.slane %v1634, 2
        %v1643 = vrot.slane %v1636, 2
        %v1644 = vsel %vm721, %v1642, %v1643
        %v1645 = vrot.slane %v1635, 2
        %v1646 = vrot.slane %v1637, 2
        %v1647 = vsel %vm721, %v1645, %v1646
        %v1652 = vmax.f32 %v1630, %v1644
        %v1653 = vmax.f32 %v1631, %v1647
        %v1654 = vmax.f32 %v1632, %v1643
        %v1655 = vmax.f32 %v1633, %v1646
        %v1656 = vadd.f32 %v1498, %v1652
        %v1657 = vadd.f32 %v1499, %v1653
        %v1658 = vadd.f32 %v1500, %v1654
        %v1659 = vadd.f32 %v1501, %v1655
        %v1660 = vmul.f32 %v1656, 0.33333334
        %v1661 = vmul.f32 %v1657, 0.33333334
        %v1662 = vmul.f32 %v1658, 0.33333334
        %v1663 = vmul.f32 %v1659, 0.33333334
        %s1664 = sadd.s32 %s354, 7
        %v1665 = vstv %s1664
        %v1666 = vadd.s32 %v1103, %v1665
        %v1667 = vadd.s32 %v1104, %v1665
        %vm1668 = vcmp.ge.s32.totalorder %v1666, 0
        %vm1669 = vcmp.ge.s32.totalorder %v1667, 0
        %vm1670 = vcmp.lt.s32.totalorder %v1666, 96
        %vm1671 = vcmp.lt.s32.totalorder %v1667, 96
        %vm1672 = vmand %vm1668, %vm1670
        %vm1673 = vmand %vm1669, %vm1671
        %v1674 = vsel %vm1672, 1, 0
        %v1675 = vsel %vm1673, 1, 0
        %vm1676 = vcmp.eq.s32.totalorder %v1674, 1
        %vm1677 = vcmp.eq.s32.totalorder %v1675, 1
        %vm1678 = vmand %vm1676, %vm1123
        %vm1679 = vmand %vm1676, %vm1124
        %vm1680 = vmand %vm1677, %vm1123
        %vm1681 = vmand %vm1677, %vm1124
        %vm1682 = vcmp.gt.f32.partialorder %v1660, %v1129
        %vm1683 = vcmp.gt.f32.partialorder %v1661, %v1129
        %vm1684 = vcmp.gt.f32.partialorder %v1662, %v1129
        %vm1685 = vcmp.gt.f32.partialorder %v1663, %v1129
        %vm1686 = vmand %vm1682, %vm1678
        %vm1687 = vmand %vm1683, %vm1679
        %vm1688 = vmand %vm1684, %vm1680
        %vm1689 = vmand %vm1685, %vm1681
        %v1690 = vsel %vm1686, 1.0, 0.0
        %v1691 = vsel %vm1687, 1.0, 0.0
        %v1692 = vsel %vm1688, 1.0, 0.0
        %v1693 = vsel %vm1689, 1.0, 0.0
        %v1698 = vrot.slane %v1690, 1
        %v1699 = vrot.slane %v1692, 1
        %v1700 = vsel %vm702, %v1698, %v1699
        %v1701 = vrot.slane %v1691, 1
        %v1702 = vrot.slane %v1693, 1
        %v1703 = vsel %vm702, %v1701, %v1702
        %v1706 = vmax.f32 %v1690, %v1700
        %v1707 = vmax.f32 %v1691, %v1703
        %v1708 = vrot.slane %v1690, 2
        %v1709 = vrot.slane %v1692, 2
        %v1710 = vsel %vm721, %v1708, %v1709
        %v1711 = vrot.slane %v1691, 2
        %v1712 = vrot.slane %v1693, 2
        %v1713 = vsel %vm721, %v1711, %v1712
        %v1716 = vmax.f32 %v1706, %v1710
        %v1717 = vmax.f32 %v1707, %v1713
        %1720 = vrot.lane.b32.xlu0 %v1716, 127
        %v1721 = vpop.permute.xlu0 %1720
        %1722 = vrot.lane.b32.xlu0 %v1717, 127
        %v1723 = vpop.permute.xlu0 %1722
        %v1724 = vsel %vm651, %v1721, %v1723
        %v1727 = vsel %vm651, %v1723, 0.0
        %1728 = vrot.lane.b32.xlu0 %v1716, 1
        %v1729 = vpop.permute.xlu0 %1728
        %1730 = vrot.lane.b32.xlu0 %v1717, 1
        %v1731 = vpop.permute.xlu0 %1730
        %v1732 = vsel %vm638, %v1729, %v1731
        %v1735 = vsel %vm638, 0.0, %v1729
        %v1736 = vmax.f32 %v1735, %v1724
        %v1737 = vmax.f32 %v1732, %v1727
        %v1738 = vmax.f32 %v1716, %v1736
        %v1739 = vmax.f32 %v1717, %v1737
        %1740 = vst [vmem:[%s343 + $0x10] sm:$0xff] %v1738
        %1741 = vst [vmem:[%s343 + $0x18] sm:$0xff] %v1739
        %v1742 = vld [vmem:[#allocation2 + $0x20] sm:$0xff]
        %v1743 = vld [vmem:[#allocation2 + $0x28] sm:$0xff]
        %v1744 = vld [vmem:[#allocation2 + $0x30] sm:$0xf]
        %v1745 = vld [vmem:[#allocation2 + $0x38] sm:$0xf]
        %1748 = vrot.lane.b32.xlu0 %v1742, 127
        %v1749 = vpop.permute.xlu0 %1748
        %1750 = vrot.lane.b32.xlu0 %v1744, 127
        %v1751 = vpop.permute.xlu0 %1750
        %1756 = vrot.lane.b32.xlu0 %v1742, 1
        %v1757 = vpop.permute.xlu0 %1756
        %1758 = vrot.lane.b32.xlu0 %v1743, 1
        %v1759 = vpop.permute.xlu0 %1758
        %1760 = vrot.lane.b32.xlu0 %v1744, 1
        %v1761 = vpop.permute.xlu0 %1760
        %1762 = vrot.lane.b32.xlu0 %v1745, 1
        %v1763 = vpop.permute.xlu0 %1762
        %v1764 = vsel %vm638, %v1757, %v1759
        %v1765 = vsel %vm638, %v1761, %v1763
        %v1770 = vsel %vm638, %v1749, %v1757
        %v1771 = vsel %vm638, %v1751, %v1761
        %1772 = vrot.lane.b32.xlu0 %v1743, 127
        %v1773 = vpop.permute.xlu0 %1772
        %1774 = vrot.lane.b32.xlu0 %v1745, 127
        %v1775 = vpop.permute.xlu0 %1774
        %v1776 = vsel %vm651, %v1749, %v1773
        %v1777 = vsel %vm651, %v1751, %v1775
        %v1782 = vsel %vm651, %v1773, %v1743
        %v1783 = vsel %vm651, %v1775, %v1745
        %1784 = vset.pattern.permute.xlu0 14
        %1785 = vperm.xlu0 %1784, %v1743
        %v1786 = vpop.permute.xlu0 %1785
        %1788 = vset.pattern.permute.xlu0 14
        %1789 = vperm.xlu0 %1788, %v1745
        %v1790 = vpop.permute.xlu0 %1789
        %v1792 = vsel %vm664, %v1786, %v1776
        %v1793 = vsel %vm665, %v1786, %v1782
        %v1794 = vsel %vm664, %v1790, %v1777
        %v1795 = vsel %vm665, %v1790, %v1783
        %v1796 = vsub.f32 %v1792, %v1770
        %v1797 = vsub.f32 %v1793, %v1764
        %v1798 = vsub.f32 %v1794, %v1771
        %v1799 = vsub.f32 %v1795, %v1765
        %v1800 = vmul.f32 %v1742, 2.0
        %v1801 = vmul.f32 %v1743, 2.0
        %v1802 = vmul.f32 %v1744, 2.0
        %v1803 = vmul.f32 %v1745, 2.0
        %v1804 = vadd.f32 %v1770, %v1800
        %v1805 = vadd.f32 %v1764, %v1801
        %v1806 = vadd.f32 %v1771, %v1802
        %v1807 = vadd.f32 %v1765, %v1803
        %v1808 = vadd.f32 %v1804, %v1792
        %v1809 = vadd.f32 %v1805, %v1793
        %v1810 = vadd.f32 %v1806, %v1794
        %v1811 = vadd.f32 %v1807, %v1795
        %v1812 = vmul.f32 %v1796, 2.0
        %v1813 = vmul.f32 %v1797, 2.0
        %v1814 = vmul.f32 %v1798, 2.0
        %v1815 = vmul.f32 %v1799, 2.0
        %v1820 = vrot.slane %v1812, 1
        %v1821 = vrot.slane %v1814, 1
        %v1822 = vsel %vm702, %v1820, %v1821
        %v1823 = vrot.slane %v1813, 1
        %v1824 = vrot.slane %v1815, 1
        %v1825 = vsel %vm702, %v1823, %v1824
        %v1830 = vadd.f32 %v1796, %v1822
        %v1831 = vadd.f32 %v1797, %v1825
        %v1832 = vadd.f32 %v1798, %v1821
        %v1833 = vadd.f32 %v1799, %v1824
        %v1838 = vrot.slane %v1796, 2
        %v1839 = vrot.slane %v1798, 2
        %v1840 = vsel %vm721, %v1838, %v1839
        %v1841 = vrot.slane %v1797, 2
        %v1842 = vrot.slane %v1799, 2
        %v1843 = vsel %vm721, %v1841, %v1842
        %v1848 = vadd.f32 %v1830, %v1840
        %v1849 = vadd.f32 %v1831, %v1843
        %v1850 = vadd.f32 %v1832, %v1839
        %v1851 = vadd.f32 %v1833, %v1842
        %v1856 = vrot.slane %v1808, 6
        %v1857 = vrot.slane %v1809, 6
        %v1858 = vrot.slane %v1810, 6
        %v1859 = vsel %vm434, %v1856, %v1858
        %v1860 = vrot.slane %v1811, 6
        %v1861 = vsel %vm434, %v1857, %v1860
        %v1866 = vsub.f32 %v1808, %v1856
        %v1867 = vsub.f32 %v1809, %v1857
        %v1868 = vsub.f32 %v1810, %v1859
        %v1869 = vsub.f32 %v1811, %v1861
        %v1870 = vand.u32 2147483647, %v1848
        %v1871 = vand.u32 2147483647, %v1849
        %v1872 = vand.u32 2147483647, %v1850
        %v1873 = vand.u32 2147483647, %v1851
        %v1874 = vand.u32 2147483647, %v1866
        %v1875 = vand.u32 2147483647, %v1867
        %v1876 = vand.u32 2147483647, %v1868
        %v1877 = vand.u32 2147483647, %v1869
        %v1882 = vrot.slane %v1874, 2
        %v1883 = vrot.slane %v1876, 2
        %v1884 = vsel %vm721, %v1882, %v1883
        %v1885 = vrot.slane %v1875, 2
        %v1886 = vrot.slane %v1877, 2
        %v1887 = vsel %vm721, %v1885, %v1886
        %v1892 = vmax.f32 %v1870, %v1884
        %v1893 = vmax.f32 %v1871, %v1887
        %v1894 = vmax.f32 %v1872, %v1883
        %v1895 = vmax.f32 %v1873, %v1886
        %v1896 = vld [vmem:[%s780 + $0x20] sm:$0xff]
        %v1897 = vld [vmem:[%s780 + $0x28] sm:$0xff]
        %v1898 = vld [vmem:[%s780 + $0x30] sm:$0xf]
        %v1899 = vld [vmem:[%s780 + $0x38] sm:$0xf]
        %1902 = vrot.lane.b32.xlu0 %v1896, 127
        %v1903 = vpop.permute.xlu0 %1902
        %1904 = vrot.lane.b32.xlu0 %v1898, 127
        %v1905 = vpop.permute.xlu0 %1904
        %1910 = vrot.lane.b32.xlu0 %v1896, 1
        %v1911 = vpop.permute.xlu0 %1910
        %1912 = vrot.lane.b32.xlu0 %v1897, 1
        %v1913 = vpop.permute.xlu0 %1912
        %1914 = vrot.lane.b32.xlu0 %v1898, 1
        %v1915 = vpop.permute.xlu0 %1914
        %1916 = vrot.lane.b32.xlu0 %v1899, 1
        %v1917 = vpop.permute.xlu0 %1916
        %v1918 = vsel %vm638, %v1911, %v1913
        %v1919 = vsel %vm638, %v1915, %v1917
        %v1924 = vsel %vm638, %v1903, %v1911
        %v1925 = vsel %vm638, %v1905, %v1915
        %1926 = vrot.lane.b32.xlu0 %v1897, 127
        %v1927 = vpop.permute.xlu0 %1926
        %1928 = vrot.lane.b32.xlu0 %v1899, 127
        %v1929 = vpop.permute.xlu0 %1928
        %v1930 = vsel %vm651, %v1903, %v1927
        %v1931 = vsel %vm651, %v1905, %v1929
        %v1936 = vsel %vm651, %v1927, %v1897
        %v1937 = vsel %vm651, %v1929, %v1899
        %1938 = vset.pattern.permute.xlu0 14
        %1939 = vperm.xlu0 %1938, %v1897
        %v1940 = vpop.permute.xlu0 %1939
        %1942 = vset.pattern.permute.xlu0 14
        %1943 = vperm.xlu0 %1942, %v1899
        %v1944 = vpop.permute.xlu0 %1943
        %v1946 = vsel %vm664, %v1940, %v1930
        %v1947 = vsel %vm665, %v1940, %v1936
        %v1948 = vsel %vm664, %v1944, %v1931
        %v1949 = vsel %vm665, %v1944, %v1937
        %v1950 = vsub.f32 %v1946, %v1924
        %v1951 = vsub.f32 %v1947, %v1918
        %v1952 = vsub.f32 %v1948, %v1925
        %v1953 = vsub.f32 %v1949, %v1919
        %v1954 = vmul.f32 %v1896, 2.0
        %v1955 = vmul.f32 %v1897, 2.0
        %v1956 = vmul.f32 %v1898, 2.0
        %v1957 = vmul.f32 %v1899, 2.0
        %v1958 = vadd.f32 %v1924, %v1954
        %v1959 = vadd.f32 %v1918, %v1955
        %v1960 = vadd.f32 %v1925, %v1956
        %v1961 = vadd.f32 %v1919, %v1957
        %v1962 = vadd.f32 %v1958, %v1946
        %v1963 = vadd.f32 %v1959, %v1947
        %v1964 = vadd.f32 %v1960, %v1948
        %v1965 = vadd.f32 %v1961, %v1949
        %v1966 = vmul.f32 %v1950, 2.0
        %v1967 = vmul.f32 %v1951, 2.0
        %v1968 = vmul.f32 %v1952, 2.0
        %v1969 = vmul.f32 %v1953, 2.0
        %v1974 = vrot.slane %v1966, 1
        %v1975 = vrot.slane %v1968, 1
        %v1976 = vsel %vm702, %v1974, %v1975
        %v1977 = vrot.slane %v1967, 1
        %v1978 = vrot.slane %v1969, 1
        %v1979 = vsel %vm702, %v1977, %v1978
        %v1984 = vadd.f32 %v1950, %v1976
        %v1985 = vadd.f32 %v1951, %v1979
        %v1986 = vadd.f32 %v1952, %v1975
        %v1987 = vadd.f32 %v1953, %v1978
        %v1992 = vrot.slane %v1950, 2
        %v1993 = vrot.slane %v1952, 2
        %v1994 = vsel %vm721, %v1992, %v1993
        %v1995 = vrot.slane %v1951, 2
        %v1996 = vrot.slane %v1953, 2
        %v1997 = vsel %vm721, %v1995, %v1996
        %v2002 = vadd.f32 %v1984, %v1994
        %v2003 = vadd.f32 %v1985, %v1997
        %v2004 = vadd.f32 %v1986, %v1993
        %v2005 = vadd.f32 %v1987, %v1996
        %v2010 = vrot.slane %v1962, 6
        %v2011 = vrot.slane %v1963, 6
        %v2012 = vrot.slane %v1964, 6
        %v2013 = vsel %vm434, %v2010, %v2012
        %v2014 = vrot.slane %v1965, 6
        %v2015 = vsel %vm434, %v2011, %v2014
        %v2020 = vsub.f32 %v1962, %v2010
        %v2021 = vsub.f32 %v1963, %v2011
        %v2022 = vsub.f32 %v1964, %v2013
        %v2023 = vsub.f32 %v1965, %v2015
        %v2024 = vand.u32 2147483647, %v2002
        %v2025 = vand.u32 2147483647, %v2003
        %v2026 = vand.u32 2147483647, %v2004
        %v2027 = vand.u32 2147483647, %v2005
        %v2028 = vand.u32 2147483647, %v2020
        %v2029 = vand.u32 2147483647, %v2021
        %v2030 = vand.u32 2147483647, %v2022
        %v2031 = vand.u32 2147483647, %v2023
        %v2036 = vrot.slane %v2028, 2
        %v2037 = vrot.slane %v2030, 2
        %v2038 = vsel %vm721, %v2036, %v2037
        %v2039 = vrot.slane %v2029, 2
        %v2040 = vrot.slane %v2031, 2
        %v2041 = vsel %vm721, %v2039, %v2040
        %v2046 = vmax.f32 %v2024, %v2038
        %v2047 = vmax.f32 %v2025, %v2041
        %v2048 = vmax.f32 %v2026, %v2037
        %v2049 = vmax.f32 %v2027, %v2040
        %v2050 = vadd.f32 %v1892, %v2046
        %v2051 = vadd.f32 %v1893, %v2047
        %v2052 = vadd.f32 %v1894, %v2048
        %v2053 = vadd.f32 %v1895, %v2049
        %v2054 = vld [vmem:[%s939 + $0x20] sm:$0xff]
        %v2055 = vld [vmem:[%s939 + $0x28] sm:$0xff]
        %v2056 = vld [vmem:[%s939 + $0x30] sm:$0xf]
        %v2057 = vld [vmem:[%s939 + $0x38] sm:$0xf]
        %2060 = vrot.lane.b32.xlu0 %v2054, 127
        %v2061 = vpop.permute.xlu0 %2060
        %2062 = vrot.lane.b32.xlu0 %v2056, 127
        %v2063 = vpop.permute.xlu0 %2062
        %2068 = vrot.lane.b32.xlu0 %v2054, 1
        %v2069 = vpop.permute.xlu0 %2068
        %2070 = vrot.lane.b32.xlu0 %v2055, 1
        %v2071 = vpop.permute.xlu0 %2070
        %2072 = vrot.lane.b32.xlu0 %v2056, 1
        %v2073 = vpop.permute.xlu0 %2072
        %2074 = vrot.lane.b32.xlu0 %v2057, 1
        %v2075 = vpop.permute.xlu0 %2074
        %v2076 = vsel %vm638, %v2069, %v2071
        %v2077 = vsel %vm638, %v2073, %v2075
        %v2082 = vsel %vm638, %v2061, %v2069
        %v2083 = vsel %vm638, %v2063, %v2073
        %2084 = vrot.lane.b32.xlu0 %v2055, 127
        %v2085 = vpop.permute.xlu0 %2084
        %2086 = vrot.lane.b32.xlu0 %v2057, 127
        %v2087 = vpop.permute.xlu0 %2086
        %v2088 = vsel %vm651, %v2061, %v2085
        %v2089 = vsel %vm651, %v2063, %v2087
        %v2094 = vsel %vm651, %v2085, %v2055
        %v2095 = vsel %vm651, %v2087, %v2057
        %2096 = vset.pattern.permute.xlu0 14
        %2097 = vperm.xlu0 %2096, %v2055
        %v2098 = vpop.permute.xlu0 %2097
        %2100 = vset.pattern.permute.xlu0 14
        %2101 = vperm.xlu0 %2100, %v2057
        %v2102 = vpop.permute.xlu0 %2101
        %v2104 = vsel %vm664, %v2098, %v2088
        %v2105 = vsel %vm665, %v2098, %v2094
        %v2106 = vsel %vm664, %v2102, %v2089
        %v2107 = vsel %vm665, %v2102, %v2095
        %v2108 = vsub.f32 %v2104, %v2082
        %v2109 = vsub.f32 %v2105, %v2076
        %v2110 = vsub.f32 %v2106, %v2083
        %v2111 = vsub.f32 %v2107, %v2077
        %v2112 = vmul.f32 %v2054, 2.0
        %v2113 = vmul.f32 %v2055, 2.0
        %v2114 = vmul.f32 %v2056, 2.0
        %v2115 = vmul.f32 %v2057, 2.0
        %v2116 = vadd.f32 %v2082, %v2112
        %v2117 = vadd.f32 %v2076, %v2113
        %v2118 = vadd.f32 %v2083, %v2114
        %v2119 = vadd.f32 %v2077, %v2115
        %v2120 = vadd.f32 %v2116, %v2104
        %v2121 = vadd.f32 %v2117, %v2105
        %v2122 = vadd.f32 %v2118, %v2106
        %v2123 = vadd.f32 %v2119, %v2107
        %v2124 = vmul.f32 %v2108, 2.0
        %v2125 = vmul.f32 %v2109, 2.0
        %v2126 = vmul.f32 %v2110, 2.0
        %v2127 = vmul.f32 %v2111, 2.0
        %v2132 = vrot.slane %v2124, 1
        %v2133 = vrot.slane %v2126, 1
        %v2134 = vsel %vm702, %v2132, %v2133
        %v2135 = vrot.slane %v2125, 1
        %v2136 = vrot.slane %v2127, 1
        %v2137 = vsel %vm702, %v2135, %v2136
        %v2142 = vadd.f32 %v2108, %v2134
        %v2143 = vadd.f32 %v2109, %v2137
        %v2144 = vadd.f32 %v2110, %v2133
        %v2145 = vadd.f32 %v2111, %v2136
        %v2150 = vrot.slane %v2108, 2
        %v2151 = vrot.slane %v2110, 2
        %v2152 = vsel %vm721, %v2150, %v2151
        %v2153 = vrot.slane %v2109, 2
        %v2154 = vrot.slane %v2111, 2
        %v2155 = vsel %vm721, %v2153, %v2154
        %v2160 = vadd.f32 %v2142, %v2152
        %v2161 = vadd.f32 %v2143, %v2155
        %v2162 = vadd.f32 %v2144, %v2151
        %v2163 = vadd.f32 %v2145, %v2154
        %v2168 = vrot.slane %v2120, 6
        %v2169 = vrot.slane %v2121, 6
        %v2170 = vrot.slane %v2122, 6
        %v2171 = vsel %vm434, %v2168, %v2170
        %v2172 = vrot.slane %v2123, 6
        %v2173 = vsel %vm434, %v2169, %v2172
        %v2178 = vsub.f32 %v2120, %v2168
        %v2179 = vsub.f32 %v2121, %v2169
        %v2180 = vsub.f32 %v2122, %v2171
        %v2181 = vsub.f32 %v2123, %v2173
        %v2182 = vand.u32 2147483647, %v2160
        %v2183 = vand.u32 2147483647, %v2161
        %v2184 = vand.u32 2147483647, %v2162
        %v2185 = vand.u32 2147483647, %v2163
        %v2186 = vand.u32 2147483647, %v2178
        %v2187 = vand.u32 2147483647, %v2179
        %v2188 = vand.u32 2147483647, %v2180
        %v2189 = vand.u32 2147483647, %v2181
        %v2194 = vrot.slane %v2186, 2
        %v2195 = vrot.slane %v2188, 2
        %v2196 = vsel %vm721, %v2194, %v2195
        %v2197 = vrot.slane %v2187, 2
        %v2198 = vrot.slane %v2189, 2
        %v2199 = vsel %vm721, %v2197, %v2198
        %v2204 = vmax.f32 %v2182, %v2196
        %v2205 = vmax.f32 %v2183, %v2199
        %v2206 = vmax.f32 %v2184, %v2195
        %v2207 = vmax.f32 %v2185, %v2198
        %v2208 = vadd.f32 %v2050, %v2204
        %v2209 = vadd.f32 %v2051, %v2205
        %v2210 = vadd.f32 %v2052, %v2206
        %v2211 = vadd.f32 %v2053, %v2207
        %v2212 = vmul.f32 %v2208, 0.33333334
        %v2213 = vmul.f32 %v2209, 0.33333334
        %v2214 = vmul.f32 %v2210, 0.33333334
        %v2215 = vmul.f32 %v2211, 0.33333334
        %s2216 = sadd.s32 %s354, 15
        %v2217 = vstv %s2216
        %v2218 = vadd.s32 %v1103, %v2217
        %v2219 = vadd.s32 %v1104, %v2217
        %vm2220 = vcmp.ge.s32.totalorder %v2218, 0
        %vm2221 = vcmp.ge.s32.totalorder %v2219, 0
        %vm2222 = vcmp.lt.s32.totalorder %v2218, 96
        %vm2223 = vcmp.lt.s32.totalorder %v2219, 96
        %vm2224 = vmand %vm2220, %vm2222
        %vm2225 = vmand %vm2221, %vm2223
        %v2226 = vsel %vm2224, 1, 0
        %v2227 = vsel %vm2225, 1, 0
        %vm2228 = vcmp.eq.s32.totalorder %v2226, 1
        %vm2229 = vcmp.eq.s32.totalorder %v2227, 1
        %vm2230 = vmand %vm2228, %vm1123
        %vm2231 = vmand %vm2228, %vm1124
        %vm2232 = vmand %vm2229, %vm1123
        %vm2233 = vmand %vm2229, %vm1124
        %vm2234 = vcmp.gt.f32.partialorder %v2212, %v1129
        %vm2235 = vcmp.gt.f32.partialorder %v2213, %v1129
        %vm2236 = vcmp.gt.f32.partialorder %v2214, %v1129
        %vm2237 = vcmp.gt.f32.partialorder %v2215, %v1129
        %vm2238 = vmand %vm2234, %vm2230
        %vm2239 = vmand %vm2235, %vm2231
        %vm2240 = vmand %vm2236, %vm2232
        %vm2241 = vmand %vm2237, %vm2233
        %v2242 = vsel %vm2238, 1.0, 0.0
        %v2243 = vsel %vm2239, 1.0, 0.0
        %v2244 = vsel %vm2240, 1.0, 0.0
        %v2245 = vsel %vm2241, 1.0, 0.0
        %v2250 = vrot.slane %v2242, 1
        %v2251 = vrot.slane %v2244, 1
        %v2252 = vsel %vm702, %v2250, %v2251
        %v2253 = vrot.slane %v2243, 1
        %v2254 = vrot.slane %v2245, 1
        %v2255 = vsel %vm702, %v2253, %v2254
        %v2258 = vmax.f32 %v2242, %v2252
        %v2259 = vmax.f32 %v2243, %v2255
        %v2260 = vrot.slane %v2242, 2
        %v2261 = vrot.slane %v2244, 2
        %v2262 = vsel %vm721, %v2260, %v2261
        %v2263 = vrot.slane %v2243, 2
        %v2264 = vrot.slane %v2245, 2
        %v2265 = vsel %vm721, %v2263, %v2264
        %v2268 = vmax.f32 %v2258, %v2262
        %v2269 = vmax.f32 %v2259, %v2265
        %2272 = vrot.lane.b32.xlu0 %v2268, 127
        %v2273 = vpop.permute.xlu0 %2272
        %2274 = vrot.lane.b32.xlu0 %v2269, 127
        %v2275 = vpop.permute.xlu0 %2274
        %v2276 = vsel %vm651, %v2273, %v2275
        %v2279 = vsel %vm651, %v2275, 0.0
        %2280 = vrot.lane.b32.xlu0 %v2268, 1
        %v2281 = vpop.permute.xlu0 %2280
        %2282 = vrot.lane.b32.xlu0 %v2269, 1
        %v2283 = vpop.permute.xlu0 %2282
        %v2284 = vsel %vm638, %v2281, %v2283
        %v2287 = vsel %vm638, 0.0, %v2281
        %v2288 = vmax.f32 %v2287, %v2276
        %v2289 = vmax.f32 %v2284, %v2279
        %v2290 = vmax.f32 %v2268, %v2288
        %v2291 = vmax.f32 %v2269, %v2289
        %2292 = vst [vmem:[%s343 + $0x20] sm:$0xff] %v2290
        %2293 = vst [vmem:[%s343 + $0x28] sm:$0xff] %v2291
        %v2294 = vld [vmem:[#allocation2 + $0x30] sm:$0xff]
        %v2295 = vld [vmem:[#allocation2 + $0x38] sm:$0xff]
        %v2296 = vld [vmem:[#allocation2 + $0x40] sm:$0xf]
        %v2297 = vld [vmem:[#allocation2 + $0x48] sm:$0xf]
        %2300 = vrot.lane.b32.xlu0 %v2294, 127
        %v2301 = vpop.permute.xlu0 %2300
        %2302 = vrot.lane.b32.xlu0 %v2296, 127
        %v2303 = vpop.permute.xlu0 %2302
        %2308 = vrot.lane.b32.xlu0 %v2294, 1
        %v2309 = vpop.permute.xlu0 %2308
        %2310 = vrot.lane.b32.xlu0 %v2295, 1
        %v2311 = vpop.permute.xlu0 %2310
        %2312 = vrot.lane.b32.xlu0 %v2296, 1
        %v2313 = vpop.permute.xlu0 %2312
        %2314 = vrot.lane.b32.xlu0 %v2297, 1
        %v2315 = vpop.permute.xlu0 %2314
        %v2316 = vsel %vm638, %v2309, %v2311
        %v2317 = vsel %vm638, %v2313, %v2315
        %v2322 = vsel %vm638, %v2301, %v2309
        %v2323 = vsel %vm638, %v2303, %v2313
        %2324 = vrot.lane.b32.xlu0 %v2295, 127
        %v2325 = vpop.permute.xlu0 %2324
        %2326 = vrot.lane.b32.xlu0 %v2297, 127
        %v2327 = vpop.permute.xlu0 %2326
        %v2328 = vsel %vm651, %v2301, %v2325
        %v2329 = vsel %vm651, %v2303, %v2327
        %v2334 = vsel %vm651, %v2325, %v2295
        %v2335 = vsel %vm651, %v2327, %v2297
        %2336 = vset.pattern.permute.xlu0 14
        %2337 = vperm.xlu0 %2336, %v2295
        %v2338 = vpop.permute.xlu0 %2337
        %2340 = vset.pattern.permute.xlu0 14
        %2341 = vperm.xlu0 %2340, %v2297
        %v2342 = vpop.permute.xlu0 %2341
        %v2344 = vsel %vm664, %v2338, %v2328
        %v2345 = vsel %vm665, %v2338, %v2334
        %v2346 = vsel %vm664, %v2342, %v2329
        %v2347 = vsel %vm665, %v2342, %v2335
        %v2348 = vsub.f32 %v2344, %v2322
        %v2349 = vsub.f32 %v2345, %v2316
        %v2350 = vsub.f32 %v2346, %v2323
        %v2351 = vsub.f32 %v2347, %v2317
        %v2352 = vmul.f32 %v2294, 2.0
        %v2353 = vmul.f32 %v2295, 2.0
        %v2354 = vmul.f32 %v2296, 2.0
        %v2355 = vmul.f32 %v2297, 2.0
        %v2356 = vadd.f32 %v2322, %v2352
        %v2357 = vadd.f32 %v2316, %v2353
        %v2358 = vadd.f32 %v2323, %v2354
        %v2359 = vadd.f32 %v2317, %v2355
        %v2360 = vadd.f32 %v2356, %v2344
        %v2361 = vadd.f32 %v2357, %v2345
        %v2362 = vadd.f32 %v2358, %v2346
        %v2363 = vadd.f32 %v2359, %v2347
        %v2364 = vmul.f32 %v2348, 2.0
        %v2365 = vmul.f32 %v2349, 2.0
        %v2366 = vmul.f32 %v2350, 2.0
        %v2367 = vmul.f32 %v2351, 2.0
        %v2372 = vrot.slane %v2364, 1
        %v2373 = vrot.slane %v2366, 1
        %v2374 = vsel %vm702, %v2372, %v2373
        %v2375 = vrot.slane %v2365, 1
        %v2376 = vrot.slane %v2367, 1
        %v2377 = vsel %vm702, %v2375, %v2376
        %v2382 = vadd.f32 %v2348, %v2374
        %v2383 = vadd.f32 %v2349, %v2377
        %v2384 = vadd.f32 %v2350, %v2373
        %v2385 = vadd.f32 %v2351, %v2376
        %v2390 = vrot.slane %v2348, 2
        %v2391 = vrot.slane %v2350, 2
        %v2392 = vsel %vm721, %v2390, %v2391
        %v2393 = vrot.slane %v2349, 2
        %v2394 = vrot.slane %v2351, 2
        %v2395 = vsel %vm721, %v2393, %v2394
        %v2400 = vadd.f32 %v2382, %v2392
        %v2401 = vadd.f32 %v2383, %v2395
        %v2402 = vadd.f32 %v2384, %v2391
        %v2403 = vadd.f32 %v2385, %v2394
        %v2408 = vrot.slane %v2360, 6
        %v2409 = vrot.slane %v2361, 6
        %v2410 = vrot.slane %v2362, 6
        %v2411 = vsel %vm434, %v2408, %v2410
        %v2412 = vrot.slane %v2363, 6
        %v2413 = vsel %vm434, %v2409, %v2412
        %v2418 = vsub.f32 %v2360, %v2408
        %v2419 = vsub.f32 %v2361, %v2409
        %v2420 = vsub.f32 %v2362, %v2411
        %v2421 = vsub.f32 %v2363, %v2413
        %v2422 = vand.u32 2147483647, %v2400
        %v2423 = vand.u32 2147483647, %v2401
        %v2424 = vand.u32 2147483647, %v2402
        %v2425 = vand.u32 2147483647, %v2403
        %v2426 = vand.u32 2147483647, %v2418
        %v2427 = vand.u32 2147483647, %v2419
        %v2428 = vand.u32 2147483647, %v2420
        %v2429 = vand.u32 2147483647, %v2421
        %v2434 = vrot.slane %v2426, 2
        %v2435 = vrot.slane %v2428, 2
        %v2436 = vsel %vm721, %v2434, %v2435
        %v2437 = vrot.slane %v2427, 2
        %v2438 = vrot.slane %v2429, 2
        %v2439 = vsel %vm721, %v2437, %v2438
        %v2444 = vmax.f32 %v2422, %v2436
        %v2445 = vmax.f32 %v2423, %v2439
        %v2446 = vmax.f32 %v2424, %v2435
        %v2447 = vmax.f32 %v2425, %v2438
        %v2448 = vld [vmem:[%s780 + $0x30] sm:$0xff]
        %v2449 = vld [vmem:[%s780 + $0x38] sm:$0xff]
        %v2450 = vld [vmem:[%s780 + $0x40] sm:$0xf]
        %v2451 = vld [vmem:[%s780 + $0x48] sm:$0xf]
        %2454 = vrot.lane.b32.xlu0 %v2448, 127
        %v2455 = vpop.permute.xlu0 %2454
        %2456 = vrot.lane.b32.xlu0 %v2450, 127
        %v2457 = vpop.permute.xlu0 %2456
        %2462 = vrot.lane.b32.xlu0 %v2448, 1
        %v2463 = vpop.permute.xlu0 %2462
        %2464 = vrot.lane.b32.xlu0 %v2449, 1
        %v2465 = vpop.permute.xlu0 %2464
        %2466 = vrot.lane.b32.xlu0 %v2450, 1
        %v2467 = vpop.permute.xlu0 %2466
        %2468 = vrot.lane.b32.xlu0 %v2451, 1
        %v2469 = vpop.permute.xlu0 %2468
        %v2470 = vsel %vm638, %v2463, %v2465
        %v2471 = vsel %vm638, %v2467, %v2469
        %v2476 = vsel %vm638, %v2455, %v2463
        %v2477 = vsel %vm638, %v2457, %v2467
        %2478 = vrot.lane.b32.xlu0 %v2449, 127
        %v2479 = vpop.permute.xlu0 %2478
        %2480 = vrot.lane.b32.xlu0 %v2451, 127
        %v2481 = vpop.permute.xlu0 %2480
        %v2482 = vsel %vm651, %v2455, %v2479
        %v2483 = vsel %vm651, %v2457, %v2481
        %v2488 = vsel %vm651, %v2479, %v2449
        %v2489 = vsel %vm651, %v2481, %v2451
        %2490 = vset.pattern.permute.xlu0 14
        %2491 = vperm.xlu0 %2490, %v2449
        %v2492 = vpop.permute.xlu0 %2491
        %2494 = vset.pattern.permute.xlu0 14
        %2495 = vperm.xlu0 %2494, %v2451
        %v2496 = vpop.permute.xlu0 %2495
        %v2498 = vsel %vm664, %v2492, %v2482
        %v2499 = vsel %vm665, %v2492, %v2488
        %v2500 = vsel %vm664, %v2496, %v2483
        %v2501 = vsel %vm665, %v2496, %v2489
        %v2502 = vsub.f32 %v2498, %v2476
        %v2503 = vsub.f32 %v2499, %v2470
        %v2504 = vsub.f32 %v2500, %v2477
        %v2505 = vsub.f32 %v2501, %v2471
        %v2506 = vmul.f32 %v2448, 2.0
        %v2507 = vmul.f32 %v2449, 2.0
        %v2508 = vmul.f32 %v2450, 2.0
        %v2509 = vmul.f32 %v2451, 2.0
        %v2510 = vadd.f32 %v2476, %v2506
        %v2511 = vadd.f32 %v2470, %v2507
        %v2512 = vadd.f32 %v2477, %v2508
        %v2513 = vadd.f32 %v2471, %v2509
        %v2514 = vadd.f32 %v2510, %v2498
        %v2515 = vadd.f32 %v2511, %v2499
        %v2516 = vadd.f32 %v2512, %v2500
        %v2517 = vadd.f32 %v2513, %v2501
        %v2518 = vmul.f32 %v2502, 2.0
        %v2519 = vmul.f32 %v2503, 2.0
        %v2520 = vmul.f32 %v2504, 2.0
        %v2521 = vmul.f32 %v2505, 2.0
        %v2526 = vrot.slane %v2518, 1
        %v2527 = vrot.slane %v2520, 1
        %v2528 = vsel %vm702, %v2526, %v2527
        %v2529 = vrot.slane %v2519, 1
        %v2530 = vrot.slane %v2521, 1
        %v2531 = vsel %vm702, %v2529, %v2530
        %v2536 = vadd.f32 %v2502, %v2528
        %v2537 = vadd.f32 %v2503, %v2531
        %v2538 = vadd.f32 %v2504, %v2527
        %v2539 = vadd.f32 %v2505, %v2530
        %v2544 = vrot.slane %v2502, 2
        %v2545 = vrot.slane %v2504, 2
        %v2546 = vsel %vm721, %v2544, %v2545
        %v2547 = vrot.slane %v2503, 2
        %v2548 = vrot.slane %v2505, 2
        %v2549 = vsel %vm721, %v2547, %v2548
        %v2554 = vadd.f32 %v2536, %v2546
        %v2555 = vadd.f32 %v2537, %v2549
        %v2556 = vadd.f32 %v2538, %v2545
        %v2557 = vadd.f32 %v2539, %v2548
        %v2562 = vrot.slane %v2514, 6
        %v2563 = vrot.slane %v2515, 6
        %v2564 = vrot.slane %v2516, 6
        %v2565 = vsel %vm434, %v2562, %v2564
        %v2566 = vrot.slane %v2517, 6
        %v2567 = vsel %vm434, %v2563, %v2566
        %v2572 = vsub.f32 %v2514, %v2562
        %v2573 = vsub.f32 %v2515, %v2563
        %v2574 = vsub.f32 %v2516, %v2565
        %v2575 = vsub.f32 %v2517, %v2567
        %v2576 = vand.u32 2147483647, %v2554
        %v2577 = vand.u32 2147483647, %v2555
        %v2578 = vand.u32 2147483647, %v2556
        %v2579 = vand.u32 2147483647, %v2557
        %v2580 = vand.u32 2147483647, %v2572
        %v2581 = vand.u32 2147483647, %v2573
        %v2582 = vand.u32 2147483647, %v2574
        %v2583 = vand.u32 2147483647, %v2575
        %v2588 = vrot.slane %v2580, 2
        %v2589 = vrot.slane %v2582, 2
        %v2590 = vsel %vm721, %v2588, %v2589
        %v2591 = vrot.slane %v2581, 2
        %v2592 = vrot.slane %v2583, 2
        %v2593 = vsel %vm721, %v2591, %v2592
        %v2598 = vmax.f32 %v2576, %v2590
        %v2599 = vmax.f32 %v2577, %v2593
        %v2600 = vmax.f32 %v2578, %v2589
        %v2601 = vmax.f32 %v2579, %v2592
        %v2602 = vadd.f32 %v2444, %v2598
        %v2603 = vadd.f32 %v2445, %v2599
        %v2604 = vadd.f32 %v2446, %v2600
        %v2605 = vadd.f32 %v2447, %v2601
        %v2606 = vld [vmem:[%s939 + $0x30] sm:$0xff]
        %v2607 = vld [vmem:[%s939 + $0x38] sm:$0xff]
        %v2608 = vld [vmem:[%s939 + $0x40] sm:$0xf]
        %v2609 = vld [vmem:[%s939 + $0x48] sm:$0xf]
        %2612 = vrot.lane.b32.xlu0 %v2606, 127
        %v2613 = vpop.permute.xlu0 %2612
        %2614 = vrot.lane.b32.xlu0 %v2608, 127
        %v2615 = vpop.permute.xlu0 %2614
        %2620 = vrot.lane.b32.xlu0 %v2606, 1
        %v2621 = vpop.permute.xlu0 %2620
        %2622 = vrot.lane.b32.xlu0 %v2607, 1
        %v2623 = vpop.permute.xlu0 %2622
        %2624 = vrot.lane.b32.xlu0 %v2608, 1
        %v2625 = vpop.permute.xlu0 %2624
        %2626 = vrot.lane.b32.xlu0 %v2609, 1
        %v2627 = vpop.permute.xlu0 %2626
        %v2628 = vsel %vm638, %v2621, %v2623
        %v2629 = vsel %vm638, %v2625, %v2627
        %v2634 = vsel %vm638, %v2613, %v2621
        %v2635 = vsel %vm638, %v2615, %v2625
        %2636 = vrot.lane.b32.xlu0 %v2607, 127
        %v2637 = vpop.permute.xlu0 %2636
        %2638 = vrot.lane.b32.xlu0 %v2609, 127
        %v2639 = vpop.permute.xlu0 %2638
        %v2640 = vsel %vm651, %v2613, %v2637
        %v2641 = vsel %vm651, %v2615, %v2639
        %v2646 = vsel %vm651, %v2637, %v2607
        %v2647 = vsel %vm651, %v2639, %v2609
        %2648 = vset.pattern.permute.xlu0 14
        %2649 = vperm.xlu0 %2648, %v2607
        %v2650 = vpop.permute.xlu0 %2649
        %2652 = vset.pattern.permute.xlu0 14
        %2653 = vperm.xlu0 %2652, %v2609
        %v2654 = vpop.permute.xlu0 %2653
        %v2656 = vsel %vm664, %v2650, %v2640
        %v2657 = vsel %vm665, %v2650, %v2646
        %v2658 = vsel %vm664, %v2654, %v2641
        %v2659 = vsel %vm665, %v2654, %v2647
        %v2660 = vsub.f32 %v2656, %v2634
        %v2661 = vsub.f32 %v2657, %v2628
        %v2662 = vsub.f32 %v2658, %v2635
        %v2663 = vsub.f32 %v2659, %v2629
        %v2664 = vmul.f32 %v2606, 2.0
        %v2665 = vmul.f32 %v2607, 2.0
        %v2666 = vmul.f32 %v2608, 2.0
        %v2667 = vmul.f32 %v2609, 2.0
        %v2668 = vadd.f32 %v2634, %v2664
        %v2669 = vadd.f32 %v2628, %v2665
        %v2670 = vadd.f32 %v2635, %v2666
        %v2671 = vadd.f32 %v2629, %v2667
        %v2672 = vadd.f32 %v2668, %v2656
        %v2673 = vadd.f32 %v2669, %v2657
        %v2674 = vadd.f32 %v2670, %v2658
        %v2675 = vadd.f32 %v2671, %v2659
        %v2676 = vmul.f32 %v2660, 2.0
        %v2677 = vmul.f32 %v2661, 2.0
        %v2678 = vmul.f32 %v2662, 2.0
        %v2679 = vmul.f32 %v2663, 2.0
        %v2684 = vrot.slane %v2676, 1
        %v2685 = vrot.slane %v2678, 1
        %v2686 = vsel %vm702, %v2684, %v2685
        %v2687 = vrot.slane %v2677, 1
        %v2688 = vrot.slane %v2679, 1
        %v2689 = vsel %vm702, %v2687, %v2688
        %v2694 = vadd.f32 %v2660, %v2686
        %v2695 = vadd.f32 %v2661, %v2689
        %v2696 = vadd.f32 %v2662, %v2685
        %v2697 = vadd.f32 %v2663, %v2688
        %v2702 = vrot.slane %v2660, 2
        %v2703 = vrot.slane %v2662, 2
        %v2704 = vsel %vm721, %v2702, %v2703
        %v2705 = vrot.slane %v2661, 2
        %v2706 = vrot.slane %v2663, 2
        %v2707 = vsel %vm721, %v2705, %v2706
        %v2712 = vadd.f32 %v2694, %v2704
        %v2713 = vadd.f32 %v2695, %v2707
        %v2714 = vadd.f32 %v2696, %v2703
        %v2715 = vadd.f32 %v2697, %v2706
        %v2720 = vrot.slane %v2672, 6
        %v2721 = vrot.slane %v2673, 6
        %v2722 = vrot.slane %v2674, 6
        %v2723 = vsel %vm434, %v2720, %v2722
        %v2724 = vrot.slane %v2675, 6
        %v2725 = vsel %vm434, %v2721, %v2724
        %v2730 = vsub.f32 %v2672, %v2720
        %v2731 = vsub.f32 %v2673, %v2721
        %v2732 = vsub.f32 %v2674, %v2723
        %v2733 = vsub.f32 %v2675, %v2725
        %v2734 = vand.u32 2147483647, %v2712
        %v2735 = vand.u32 2147483647, %v2713
        %v2736 = vand.u32 2147483647, %v2714
        %v2737 = vand.u32 2147483647, %v2715
        %v2738 = vand.u32 2147483647, %v2730
        %v2739 = vand.u32 2147483647, %v2731
        %v2740 = vand.u32 2147483647, %v2732
        %v2741 = vand.u32 2147483647, %v2733
        %v2746 = vrot.slane %v2738, 2
        %v2747 = vrot.slane %v2740, 2
        %v2748 = vsel %vm721, %v2746, %v2747
        %v2749 = vrot.slane %v2739, 2
        %v2750 = vrot.slane %v2741, 2
        %v2751 = vsel %vm721, %v2749, %v2750
        %v2756 = vmax.f32 %v2734, %v2748
        %v2757 = vmax.f32 %v2735, %v2751
        %v2758 = vmax.f32 %v2736, %v2747
        %v2759 = vmax.f32 %v2737, %v2750
        %v2760 = vadd.f32 %v2602, %v2756
        %v2761 = vadd.f32 %v2603, %v2757
        %v2762 = vadd.f32 %v2604, %v2758
        %v2763 = vadd.f32 %v2605, %v2759
        %v2764 = vmul.f32 %v2760, 0.33333334
        %v2765 = vmul.f32 %v2761, 0.33333334
        %v2766 = vmul.f32 %v2762, 0.33333334
        %v2767 = vmul.f32 %v2763, 0.33333334
        %s2768 = sadd.s32 %s354, 23
        %v2769 = vstv %s2768
        %v2770 = vadd.s32 %v1103, %v2769
        %v2771 = vadd.s32 %v1104, %v2769
        %vm2772 = vcmp.ge.s32.totalorder %v2770, 0
        %vm2773 = vcmp.ge.s32.totalorder %v2771, 0
        %vm2774 = vcmp.lt.s32.totalorder %v2770, 96
        %vm2775 = vcmp.lt.s32.totalorder %v2771, 96
        %vm2776 = vmand %vm2772, %vm2774
        %vm2777 = vmand %vm2773, %vm2775
        %v2778 = vsel %vm2776, 1, 0
        %v2779 = vsel %vm2777, 1, 0
        %vm2780 = vcmp.eq.s32.totalorder %v2778, 1
        %vm2781 = vcmp.eq.s32.totalorder %v2779, 1
        %vm2782 = vmand %vm2780, %vm1123
        %vm2783 = vmand %vm2780, %vm1124
        %vm2784 = vmand %vm2781, %vm1123
        %vm2785 = vmand %vm2781, %vm1124
        %vm2786 = vcmp.gt.f32.partialorder %v2764, %v1129
        %vm2787 = vcmp.gt.f32.partialorder %v2765, %v1129
        %vm2788 = vcmp.gt.f32.partialorder %v2766, %v1129
        %vm2789 = vcmp.gt.f32.partialorder %v2767, %v1129
        %vm2790 = vmand %vm2786, %vm2782
        %vm2791 = vmand %vm2787, %vm2783
        %vm2792 = vmand %vm2788, %vm2784
        %vm2793 = vmand %vm2789, %vm2785
        %v2794 = vsel %vm2790, 1.0, 0.0
        %v2795 = vsel %vm2791, 1.0, 0.0
        %v2796 = vsel %vm2792, 1.0, 0.0
        %v2797 = vsel %vm2793, 1.0, 0.0
        %v2802 = vrot.slane %v2794, 1
        %v2803 = vrot.slane %v2796, 1
        %v2804 = vsel %vm702, %v2802, %v2803
        %v2805 = vrot.slane %v2795, 1
        %v2806 = vrot.slane %v2797, 1
        %v2807 = vsel %vm702, %v2805, %v2806
        %v2810 = vmax.f32 %v2794, %v2804
        %v2811 = vmax.f32 %v2795, %v2807
        %v2812 = vrot.slane %v2794, 2
        %v2813 = vrot.slane %v2796, 2
        %v2814 = vsel %vm721, %v2812, %v2813
        %v2815 = vrot.slane %v2795, 2
        %v2816 = vrot.slane %v2797, 2
        %v2817 = vsel %vm721, %v2815, %v2816
        %v2820 = vmax.f32 %v2810, %v2814
        %v2821 = vmax.f32 %v2811, %v2817
        %2824 = vrot.lane.b32.xlu0 %v2820, 127
        %v2825 = vpop.permute.xlu0 %2824
        %2826 = vrot.lane.b32.xlu0 %v2821, 127
        %v2827 = vpop.permute.xlu0 %2826
        %v2828 = vsel %vm651, %v2825, %v2827
        %v2831 = vsel %vm651, %v2827, 0.0
        %2832 = vrot.lane.b32.xlu0 %v2820, 1
        %v2833 = vpop.permute.xlu0 %2832
        %2834 = vrot.lane.b32.xlu0 %v2821, 1
        %v2835 = vpop.permute.xlu0 %2834
        %v2836 = vsel %vm638, %v2833, %v2835
        %v2839 = vsel %vm638, 0.0, %v2833
        %v2840 = vmax.f32 %v2839, %v2828
        %v2841 = vmax.f32 %v2836, %v2831
        %v2842 = vmax.f32 %v2820, %v2840
        %v2843 = vmax.f32 %v2821, %v2841
        %2844 = vst [vmem:[%s343 + $0x30] sm:$0xff] %v2842
        %2845 = vst [vmem:[%s343 + $0x38] sm:$0xff] %v2843
        %s2846 = sand.u32 %s148, 1
        %s2847 = scalar_lea.sflag [#allocation6], %s2846
        %s2848 = sand.u32 %s148, 1
        %s2849 = smul.addr %s2848, 64
        %s2850 = scalar_lea.vmem [#allocation10], %s2849
        // Predicated region
        $region57: #{tpu_custom_call.1} parent=35 // pred_check
          %p2851 = pneg %p158
        $region58: #{tpu_custom_call.1} parent=35 // pred_check_branch
          %2853 = sbr.rel (%p2851) target = $region60
        $region59: #{tpu_custom_call.1} parent=35 // pred_region
          %s2854 = smul.u32 4, %s25
          %s2856 = ssub.s32 1024, 1024
          %2857 = vsyncadd %s2847, %s2856
          %s2858 = smul.addr %s2854, 2
          %s2859 = smul.addr %s2858, 128
          %s2860 = scalar_lea.hbm %s4, %s2859
          %s2861 = sshll.u32 %s2850, 4
          %s2862 = int_to_ptr.vmem [resolvable:$true] %s2861
          %2867 = dma.vmem_to_hbm [thread:$0]  %s2862, 1024, %s2860, %s2847, 256, 256, 16
        $region60: #{tpu_custom_call.1} parent=35 // pred_fallthru
          _
      $region36: #{tpu_custom_call.1} parent=5 // pred_fallthru
        _
      %p2868 = scmp.le.s32.totalorder 2, %s20
      // Predicated region
      $region61: #{tpu_custom_call.1} parent=5 // pred_check
        %p2869 = pneg %p2868
      $region62: #{tpu_custom_call.1} parent=5 // pred_check_branch
        %2871 = sbr.rel (%p2869) target = $region64
      $region63: #{tpu_custom_call.1} parent=5 // pred_region
        %s2872 = ssub.s32 %s20, 2
        // Predicated region
        $region65: #{tpu_custom_call.1} parent=63 // pred_check
          %p2873 = pneg %p164
        $region66: #{tpu_custom_call.1} parent=63 // pred_check_branch
          %2875 = sbr.rel (%p2873) target = $region68
        $region67: #{tpu_custom_call.1} parent=63 // pred_region
          %s2876 = sand.u32 %s149, 1
          %s2877 = scalar_lea.sflag [#allocation6], %s2876
          %s2878 = sand.u32 %s149, 1
          %s2879 = smul.addr %s2878, 64
          %s2880 = scalar_lea.vmem [#allocation10], %s2879
          %2881 = dma.done %s2877, 1024
        $region68: #{tpu_custom_call.1} parent=63 // pred_fallthru
          _
      $region64: #{tpu_custom_call.1} parent=5 // pred_fallthru
        _
    $region6: #{tpu_custom_call.1} parent=1 // loop_footer
      %s24 = sadd.s32 1, %s20
    $region7: #{tpu_custom_call.1} parent=1 // loop_footer_branch
      %19 = sbr.rel target = $region3
    $region8: #{tpu_custom_call.1} parent=1 // loop_exit
      _
    %2882 = vsyncpa [#allocation5], 1
    %s2883 = scalar_lea.sflag [#allocation5], 1
    %2884 = vsyncpa %s2883, 1
    %2885 = vsyncpa [#allocation8], 1
    %s2886 = scalar_lea.sflag [#allocation8], 1
    %2887 = vsyncpa %s2886, 1
    %2888 = vsyncpa [#allocation6], 1
    %s2889 = scalar_lea.sflag [#allocation6], 1
    %2890 = vsyncpa %s2889, 1

</llo_original>
